<compile_context>
chip_gen: v5e
topology: v5e:2x2
jax: 0.10.0
libtpu: 0.0.40
codegen_flags: <defaults>
</compile_context>

<pallas_src>
import jax
import jax.numpy as jnp
from jax.experimental import pallas as pl
from jax.experimental.pallas import tpu as pltpu

LANE = 128


def _make_kernel(H, W, Cp, TH, tiled):
    R1 = TH + 2  # conv1 output rows per step (1-row recompute halo each side)

    def conv3x3(src, w_ref, rows):
        # src: (1, rows+2, W+2, Cp) bf16 (Ref or value).  Nine per-tap MXU matmuls
        # accumulated in f32 -- no (rows*W, 9*Cp) im2col buffer is materialized.
        acc = jnp.zeros((rows * W, Cp), jnp.float32)
        for dh in range(3):
            for dw in range(3):
                t = dh * 3 + dw
                tap = src[:, dh:dh + rows, dw:dw + W, :].reshape(rows * W, Cp)
                acc = acc + jnp.dot(tap, w_ref[t * Cp:(t + 1) * Cp, :],
                                    preferred_element_type=jnp.float32)
        return acc

    def body(xwin, xid_ref, w1_ref, w2_ref, s1_ref, b1_ref, s2_ref, b2_ref,
             out_ref):
        t0 = pl.program_id(1) * TH  # first output row of this H tile

        # ---- conv1 + bn1 + relu over TH+2 rows (recompute halo for conv2) ----
        h1 = conv3x3(xwin, w1_ref, R1)                                  # f32
        h1 = jnp.maximum(h1 * s1_ref[...] + b1_ref[...], 0.0)
        h1 = h1.reshape(1, R1, W, Cp)
        # conv2's padding=1 must see zeros outside the true HxW conv1 output:
        # zero the recompute-halo rows that fall outside the image.
        keep_top = (t0 >= 1).astype(h1.dtype)        # conv1-out row t0-1 exists?
        keep_bot = (t0 + TH < H).astype(h1.dtype)    # conv1-out row t0+TH exists?
        h1 = jnp.concatenate(
            [h1[:, :1] * keep_top, h1[:, 1:R1 - 1], h1[:, R1 - 1:] * keep_bot],
            axis=1).astype(jnp.bfloat16)
        # Single W-halo pad as a bf16 value (no VMEM scratch round trip).
        zcol = jnp.zeros((1, R1, 1, Cp), jnp.bfloat16)
        mid = jnp.concatenate([zcol, h1, zcol], axis=2)       # (1, R1, W+2, Cp)

        # ---- conv2 + bn2 + residual + relu (f32 epilogue) ----
        h2 = conv3x3(mid, w2_ref, TH)                                   # f32
        h2 = h2 * s2_ref[...] + b2_ref[...]
        identity = xid_ref[...].reshape(TH * W, Cp).astype(jnp.float32)
        res = jnp.maximum(h2 + identity, 0.0)
        out_ref[...] = res.reshape(1, TH, W, Cp).astype(out_ref.dtype)

    if tiled:
        def kernel(xm_ref, xh_ref, *rest):
            # Stitch the TH-row main block and the 4-row halo block into the
            # (TH+4)-row window the fused conv pair needs.
            xwin = jnp.concatenate([xm_ref[...], xh_ref[...]], axis=1)
            body(xwin, *rest)
    else:
        def kernel(xm_ref, *rest):
            body(xm_ref, *rest)   # ref is sliced directly inside conv3x3
    return kernel


def _pick_tile_h(H, W, Cp):
    """Rows per grid step: bound per-step VMEM (v7x: 64 MiB/TC) while keeping
    enough work per step to amortize the ~0.35us grid-step overhead."""
    cands = [t for t in range(4, H, 4) if H % t == 0]  # >=2 tiles, halo-alignable
    if not cands:
        return H

    def est(t):  # rough per-step live bytes
        return (2 * 2 * (t + 4) * (W + 2) * Cp          # bf16 input window, 2 bufs
                + 2 * (4 + 4) * t * W * Cp              # identity + output blocks
                + 2 * (t + 2) * (W + 2) * Cp            # bf16 mid value
                + 4 * (t + 2) * W * Cp)                 # f32 accumulator

    ok = [t for t in cands if est(t) <= 12 * 1024 * 1024]
    return max(ok) if ok else min(cands)


def basic_block_forward(x_nchw, w1_oihw, w2_oihw, bn1, bn2, eps=1e-5):
    """BasicBlock forward (eval-mode BN). x: (B,Cin,H,W) NCHW; weights OIHW;
    bn = (gamma, beta, running_mean, running_var)."""
    B, Cin, H, W = x_nchw.shape
    Cout = w1_oihw.shape[0]
    assert Cin == Cout, "stride=1 / downsample=None BasicBlock requires Cin == Cout"
    # TODO(synk): stride>1 / downsample variant and training-mode BN (batch stats)
    # not implemented; GroupNorm / FRN norm_layer options not implemented.

    Cp = ((Cout + LANE - 1) // LANE) * LANE  # lane-dense channel padding
    # NOTE: at Cp=128 the MXU runs at <= half width on v6e/v7x; these layers are
    # copy-bound, so we do NOT over-pad channels beyond the next multiple of 128.

    x_nhwc = jnp.transpose(x_nchw, (0, 2, 3, 1))
    # bf16 activations for the MXU (f32 accumulation in-kernel).  Halo: 2 rows
    # (fused conv1->conv2 recompute) + 1 col; channel pad to Cp.  One fused pad.
    xpad = jnp.pad(x_nhwc.astype(jnp.bfloat16),
                   ((0, 0), (2, 2), (1, 1), (0, Cp - Cin)))
    # Aligned residual blocks (avoids an unaligned +1 W-offset slice in-kernel);
    # kept in the input dtype so the residual add is exact.
    xid = jnp.pad(x_nhwc, ((0, 0), (0, 0), (0, 0), (0, Cp - Cin)))
    # TODO(synk): keep NHWC end-to-end and fuse the final channel-slice/transpose
    # into the consumer to avoid the extra HBM passes around the kernel.

    def prep_weight(w_oihw):
        w = jnp.transpose(w_oihw, (2, 3, 1, 0)).astype(jnp.float32)  # HWIO
        w = jnp.pad(w, ((0, 0), (0, 0),
                        (0, Cp - w.shape[2]), (0, Cp - w.shape[3])))
        # (kh, kw, cin) stacked along rows -> one (Cp, Cp) slab per tap; bf16 MXU.
        # TODO(synk): fp8 weights on v7x if accuracy allows.
        return w.reshape(9 * Cp, Cp).astype(jnp.bfloat16)

    w1m, w2m = prep_weight(w1_oihw), prep_weight(w2_oihw)

    def fold_bn(p):
        gamma, beta, mean, var = (a.astype(jnp.float32) for a in p)
        scale = gamma / jnp.sqrt(var + eps)
        bias = beta - mean * scale
        return (jnp.pad(scale, (0, Cp - Cout)).reshape(1, Cp),
                jnp.pad(bias, (0, Cp - Cout)).reshape(1, Cp))

    s1, b1 = fold_bn(bn1)
    s2, b2 = fold_bn(bn2)

    TH = _pick_tile_h(H, W, Cp)
    tiled = TH < H
    nH = H // TH
    kernel = _make_kernel(H, W, Cp, TH, tiled)

    const = lambda b, i: (0, 0)
    if tiled:
        # (TH+4)-row overlapping window = TH-row main block + 4-row halo block on
        # the same padded array, all plain Blocked index maps (halo offset
        # (i+1)*TH expressed in 4-row blocks; TH % 4 == 0 by construction).
        x_specs = [
            pl.BlockSpec((1, TH, W + 2, Cp), lambda b, i: (b, i, 0, 0)),
            pl.BlockSpec((1, 4, W + 2, Cp),
                         lambda b, i: (b, (i + 1) * (TH // 4), 0, 0)),
        ]
        x_args = (xpad, xpad)
    else:
        x_specs = [pl.BlockSpec((1, H + 4, W + 2, Cp),
                                lambda b, i: (b, 0, 0, 0))]
        x_args = (xpad,)

    in_specs = x_specs + [
        pl.BlockSpec((1, TH, W, Cp), lambda b, i: (b, i, 0, 0)),  # identity
        # Weights / BN scale+bias: constant index maps -> fetched once and VMEM
        # resident across the whole grid.
        # TODO(synk): pipeline_mode=pl.Buffered(1) would drop their second buffer.
        pl.BlockSpec((9 * Cp, Cp), const),
        pl.BlockSpec((9 * Cp, Cp), const),
        pl.BlockSpec((1, Cp), const),
        pl.BlockSpec((1, Cp), const),
        pl.BlockSpec((1, Cp), const),
        pl.BlockSpec((1, Cp), const),
    ]

    def nbytes(a):
        return a.size * a.dtype.itemsize

    # Two convs; per image conv1 computes nH*(TH+2) rows (halo recompute), conv2 H.
    flops = 2 * B * W * 9 * Cp * Cp * (nH * (TH + 2) + H)
    bytes_accessed = (nbytes(xpad) * (TH + 4) // TH   # main + re-fetched halo rows
                      + nbytes(xid) + nbytes(w1m) + nbytes(w2m) + 4 * nbytes(s1)
                      + B * H * W * Cp * x_nhwc.dtype.itemsize)

    out_padded = pl.pallas_call(
        kernel,
        out_shape=jax.ShapeDtypeStruct((B, H, W, Cp), x_nhwc.dtype),
        grid_spec=pltpu.PrefetchScalarGridSpec(
            num_scalar_prefetch=0,
            grid=(B, nH),
            in_specs=in_specs,
            out_specs=pl.BlockSpec((1, TH, W, Cp), lambda b, i: (b, i, 0, 0)),
        ),
        compiler_params=pltpu.CompilerParams(
            dimension_semantics=("parallel", "parallel"),
            vmem_limit_bytes=64 * 1024 * 1024,
        ),
        cost_estimate=pl.CostEstimate(
            flops=flops, transcendentals=0, bytes_accessed=bytes_accessed),
    )(*x_args, xid, w1m, w2m, s1, b1, s2, b2)

    out = out_padded[..., :Cout]                # drop channel padding
    return jnp.transpose(out, (0, 3, 1, 2))     # NHWC -> NCHW


def reference_forward(x, w1, w2, bn1, bn2, eps=1e-5):
    """Pure-JAX reference (NCHW, matches PyTorch BasicBlock in eval mode)."""
    def conv(x, w):
        return jax.lax.conv_general_dilated(
            x, w, window_strides=(1, 1), padding=((1, 1), (1, 1)),
            dimension_numbers=('NCHW', 'OIHW', 'NCHW'))

    def bn(x, p):
        g, b, m, v = (a[None, :, None, None] for a in p)
        return (x - m) / jnp.sqrt(v + eps) * g + b

    out = jax.nn.relu(bn(conv(x, w1), bn1))
    out = bn(conv(out, w2), bn2)
    return jax.nn.relu(out + x)


if __name__ == "__main__":
    key = jax.random.PRNGKey(0)
    k = jax.random.split(key, 12)

    B, inplanes, planes, H, W = 2, 4, 4, 16, 16   # stride=1, downsample=None

    x = jax.random.normal(k[0], (B, inplanes, H, W), jnp.float32)
    w1 = jax.random.normal(k[1], (planes, inplanes, 3, 3), jnp.float32) * 0.2
    w2 = jax.random.normal(k[2], (planes, planes, 3, 3), jnp.float32) * 0.2

    bn1 = (1.0 + 0.1 * jax.random.normal(k[3], (planes,), jnp.float32),   # gamma
           0.1 * jax.random.normal(k[4], (planes,), jnp.float32),         # beta
           0.1 * jax.random.normal(k[5], (planes,), jnp.float32),         # running_mean
           jax.random.uniform(k[6], (planes,), jnp.float32, 0.5, 1.5))    # running_var
    bn2 = (1.0 + 0.1 * jax.random.normal(k[7], (planes,), jnp.float32),
           0.1 * jax.random.normal(k[8], (planes,), jnp.float32),
           0.1 * jax.random.normal(k[9], (planes,), jnp.float32),
           jax.random.uniform(k[10], (planes,), jnp.float32, 0.5, 1.5))

    out = basic_block_forward(x, w1, w2, bn1, bn2)
    out = jax.block_until_ready(out)

    ref = reference_forward(x, w1, w2, bn1, bn2)
    assert out.shape == (B, planes, H, W)
    # bf16 MXU operands (f32 accumulation) through two convs + BN gain -> loosened tol.
    err = float(jnp.max(jnp.abs(out - ref)))
    assert err < 1e-1, f"max abs err {err}"

    print("KERNEL_OK")
</pallas_src>

<mosaic_0001>
module attributes {stable_mosaic.version = 11 : i64} {
  func.func @kernel(%arg0: i32, %arg1: i32, %arg2: memref<1x8x18x128xbf16, #tpu.memory_space<vmem>>, %arg3: memref<1x4x18x128xbf16, #tpu.memory_space<vmem>>, %arg4: memref<1x8x16x128xf32, #tpu.memory_space<vmem>>, %arg5: memref<1152x128xbf16, #tpu.memory_space<vmem>>, %arg6: memref<1152x128xbf16, #tpu.memory_space<vmem>>, %arg7: memref<1x128xf32, #tpu.memory_space<vmem>>, %arg8: memref<1x128xf32, #tpu.memory_space<vmem>>, %arg9: memref<1x128xf32, #tpu.memory_space<vmem>>, %arg10: memref<1x128xf32, #tpu.memory_space<vmem>>, %arg11: memref<1x8x16x128xf32, #tpu.memory_space<vmem>>) attributes {dimension_semantics = [#tpu.dimension_semantics<parallel>, #tpu.dimension_semantics<parallel>], iteration_bounds = array<i64: 2, 2>, scalar_prefetch = 0 : i64, scratch_operands = 0 : i64, tpu.core_type = #tpu.core_type<tc>, window_params = [{transform_indices = @transform_0, window_bounds = array<i64: 1, 8, 18, 128>}, {transform_indices = @transform_1, window_bounds = array<i64: 1, 4, 18, 128>}, {transform_indices = @transform_2, window_bounds = array<i64: 1, 8, 16, 128>}, {pipeline_mode = #tpu.pipeline_mode<synchronous>, transform_indices = @transform_3, window_bounds = array<i64: 1152, 128>}, {pipeline_mode = #tpu.pipeline_mode<synchronous>, transform_indices = @transform_4, window_bounds = array<i64: 1152, 128>}, {pipeline_mode = #tpu.pipeline_mode<synchronous>, transform_indices = @transform_5, window_bounds = array<i64: 1, 128>}, {pipeline_mode = #tpu.pipeline_mode<synchronous>, transform_indices = @transform_6, window_bounds = array<i64: 1, 128>}, {pipeline_mode = #tpu.pipeline_mode<synchronous>, transform_indices = @transform_7, window_bounds = array<i64: 1, 128>}, {pipeline_mode = #tpu.pipeline_mode<synchronous>, transform_indices = @transform_8, window_bounds = array<i64: 1, 128>}, {transform_indices = @transform_9, window_bounds = array<i64: 1, 8, 16, 128>}]} {
    %c0 = arith.constant 0 : index
    %c0_0 = arith.constant 0 : index
    %c0_1 = arith.constant 0 : index
    %c0_2 = arith.constant 0 : index
    %0 = vector.load %arg2[%c0, %c0_0, %c0_1, %c0_2] : memref<1x8x18x128xbf16, #tpu.memory_space<vmem>>, vector<1x8x18x128xbf16>
    %c0_3 = arith.constant 0 : index
    %c0_4 = arith.constant 0 : index
    %c0_5 = arith.constant 0 : index
    %c0_6 = arith.constant 0 : index
    %1 = vector.load %arg3[%c0_3, %c0_4, %c0_5, %c0_6] : memref<1x4x18x128xbf16, #tpu.memory_space<vmem>>, vector<1x4x18x128xbf16>
    %2 = tpu.concatenate %0, %1 in 1 : vector<1x8x18x128xbf16>, vector<1x4x18x128xbf16> -> vector<1x12x18x128xbf16>
    %c8_i32 = arith.constant 8 : i32
    %3 = arith.muli %arg1, %c8_i32 : i32
    %cst = arith.constant 0.000000e+00 : f32
    %4 = vector.broadcast %cst : f32 to vector<160x128xf32>
    %5 = vector.extract_strided_slice %2 {offsets = [0, 0, 0, 0], sizes = [1, 10, 16, 128], strides = [1, 1, 1, 1]} : vector<1x12x18x128xbf16> to vector<1x10x16x128xbf16>
    %6 = vector.shape_cast %5 : vector<1x10x16x128xbf16> to vector<160x128xbf16>
    %c0_7 = arith.constant 0 : index
    %c0_8 = arith.constant 0 : index
    %7 = vector.load %arg5[%c0_7, %c0_8] : memref<1152x128xbf16, #tpu.memory_space<vmem>>, vector<128x128xbf16>
    %cst_9 = arith.constant dense<0.000000e+00> : vector<160x128xf32>
    %8 = tpu.matmul %6, %7, %cst_9 {dimension_numbers = #tpu.dot_dimension_numbers<[1], [0], [0], [1], [0, 0, 1, 1], [], []>} : vector<160x128xbf16>, vector<128x128xbf16>, vector<160x128xf32> -> vector<160x128xf32>
    %9 = arith.addf %4, %8 : vector<160x128xf32>
    %10 = vector.extract_strided_slice %2 {offsets = [0, 0, 1, 0], sizes = [1, 10, 16, 128], strides = [1, 1, 1, 1]} : vector<1x12x18x128xbf16> to vector<1x10x16x128xbf16>
    %11 = vector.shape_cast %10 : vector<1x10x16x128xbf16> to vector<160x128xbf16>
    %c128 = arith.constant 128 : index
    %c0_10 = arith.constant 0 : index
    %12 = vector.load %arg5[%c128, %c0_10] : memref<1152x128xbf16, #tpu.memory_space<vmem>>, vector<128x128xbf16>
    %cst_11 = arith.constant dense<0.000000e+00> : vector<160x128xf32>
    %13 = tpu.matmul %11, %12, %cst_11 {dimension_numbers = #tpu.dot_dimension_numbers<[1], [0], [0], [1], [0, 0, 1, 1], [], []>} : vector<160x128xbf16>, vector<128x128xbf16>, vector<160x128xf32> -> vector<160x128xf32>
    %14 = arith.addf %9, %13 : vector<160x128xf32>
    %15 = vector.extract_strided_slice %2 {offsets = [0, 0, 2, 0], sizes = [1, 10, 16, 128], strides = [1, 1, 1, 1]} : vector<1x12x18x128xbf16> to vector<1x10x16x128xbf16>
    %16 = vector.shape_cast %15 : vector<1x10x16x128xbf16> to vector<160x128xbf16>
    %c256 = arith.constant 256 : index
    %c0_12 = arith.constant 0 : index
    %17 = vector.load %arg5[%c256, %c0_12] : memref<1152x128xbf16, #tpu.memory_space<vmem>>, vector<128x128xbf16>
    %cst_13 = arith.constant dense<0.000000e+00> : vector<160x128xf32>
    %18 = tpu.matmul %16, %17, %cst_13 {dimension_numbers = #tpu.dot_dimension_numbers<[1], [0], [0], [1], [0, 0, 1, 1], [], []>} : vector<160x128xbf16>, vector<128x128xbf16>, vector<160x128xf32> -> vector<160x128xf32>
    %19 = arith.addf %14, %18 : vector<160x128xf32>
    %20 = vector.extract_strided_slice %2 {offsets = [0, 1, 0, 0], sizes = [1, 10, 16, 128], strides = [1, 1, 1, 1]} : vector<1x12x18x128xbf16> to vector<1x10x16x128xbf16>
    %21 = vector.shape_cast %20 : vector<1x10x16x128xbf16> to vector<160x128xbf16>
    %c384 = arith.constant 384 : index
    %c0_14 = arith.constant 0 : index
    %22 = vector.load %arg5[%c384, %c0_14] : memref<1152x128xbf16, #tpu.memory_space<vmem>>, vector<128x128xbf16>
    %cst_15 = arith.constant dense<0.000000e+00> : vector<160x128xf32>
    %23 = tpu.matmul %21, %22, %cst_15 {dimension_numbers = #tpu.dot_dimension_numbers<[1], [0], [0], [1], [0, 0, 1, 1], [], []>} : vector<160x128xbf16>, vector<128x128xbf16>, vector<160x128xf32> -> vector<160x128xf32>
    %24 = arith.addf %19, %23 : vector<160x128xf32>
    %25 = vector.extract_strided_slice %2 {offsets = [0, 1, 1, 0], sizes = [1, 10, 16, 128], strides = [1, 1, 1, 1]} : vector<1x12x18x128xbf16> to vector<1x10x16x128xbf16>
    %26 = vector.shape_cast %25 : vector<1x10x16x128xbf16> to vector<160x128xbf16>
    %c512 = arith.constant 512 : index
    %c0_16 = arith.constant 0 : index
    %27 = vector.load %arg5[%c512, %c0_16] : memref<1152x128xbf16, #tpu.memory_space<vmem>>, vector<128x128xbf16>
    %cst_17 = arith.constant dense<0.000000e+00> : vector<160x128xf32>
    %28 = tpu.matmul %26, %27, %cst_17 {dimension_numbers = #tpu.dot_dimension_numbers<[1], [0], [0], [1], [0, 0, 1, 1], [], []>} : vector<160x128xbf16>, vector<128x128xbf16>, vector<160x128xf32> -> vector<160x128xf32>
    %29 = arith.addf %24, %28 : vector<160x128xf32>
    %30 = vector.extract_strided_slice %2 {offsets = [0, 1, 2, 0], sizes = [1, 10, 16, 128], strides = [1, 1, 1, 1]} : vector<1x12x18x128xbf16> to vector<1x10x16x128xbf16>
    %31 = vector.shape_cast %30 : vector<1x10x16x128xbf16> to vector<160x128xbf16>
    %c640 = arith.constant 640 : index
    %c0_18 = arith.constant 0 : index
    %32 = vector.load %arg5[%c640, %c0_18] : memref<1152x128xbf16, #tpu.memory_space<vmem>>, vector<128x128xbf16>
    %cst_19 = arith.constant dense<0.000000e+00> : vector<160x128xf32>
    %33 = tpu.matmul %31, %32, %cst_19 {dimension_numbers = #tpu.dot_dimension_numbers<[1], [0], [0], [1], [0, 0, 1, 1], [], []>} : vector<160x128xbf16>, vector<128x128xbf16>, vector<160x128xf32> -> vector<160x128xf32>
    %34 = arith.addf %29, %33 : vector<160x128xf32>
    %35 = vector.extract_strided_slice %2 {offsets = [0, 2, 0, 0], sizes = [1, 10, 16, 128], strides = [1, 1, 1, 1]} : vector<1x12x18x128xbf16> to vector<1x10x16x128xbf16>
    %36 = vector.shape_cast %35 : vector<1x10x16x128xbf16> to vector<160x128xbf16>
    %c768 = arith.constant 768 : index
    %c0_20 = arith.constant 0 : index
    %37 = vector.load %arg5[%c768, %c0_20] : memref<1152x128xbf16, #tpu.memory_space<vmem>>, vector<128x128xbf16>
    %cst_21 = arith.constant dense<0.000000e+00> : vector<160x128xf32>
    %38 = tpu.matmul %36, %37, %cst_21 {dimension_numbers = #tpu.dot_dimension_numbers<[1], [0], [0], [1], [0, 0, 1, 1], [], []>} : vector<160x128xbf16>, vector<128x128xbf16>, vector<160x128xf32> -> vector<160x128xf32>
    %39 = arith.addf %34, %38 : vector<160x128xf32>
    %40 = vector.extract_strided_slice %2 {offsets = [0, 2, 1, 0], sizes = [1, 10, 16, 128], strides = [1, 1, 1, 1]} : vector<1x12x18x128xbf16> to vector<1x10x16x128xbf16>
    %41 = vector.shape_cast %40 : vector<1x10x16x128xbf16> to vector<160x128xbf16>
    %c896 = arith.constant 896 : index
    %c0_22 = arith.constant 0 : index
    %42 = vector.load %arg5[%c896, %c0_22] : memref<1152x128xbf16, #tpu.memory_space<vmem>>, vector<128x128xbf16>
    %cst_23 = arith.constant dense<0.000000e+00> : vector<160x128xf32>
    %43 = tpu.matmul %41, %42, %cst_23 {dimension_numbers = #tpu.dot_dimension_numbers<[1], [0], [0], [1], [0, 0, 1, 1], [], []>} : vector<160x128xbf16>, vector<128x128xbf16>, vector<160x128xf32> -> vector<160x128xf32>
    %44 = arith.addf %39, %43 : vector<160x128xf32>
    %45 = vector.extract_strided_slice %2 {offsets = [0, 2, 2, 0], sizes = [1, 10, 16, 128], strides = [1, 1, 1, 1]} : vector<1x12x18x128xbf16> to vector<1x10x16x128xbf16>
    %46 = vector.shape_cast %45 : vector<1x10x16x128xbf16> to vector<160x128xbf16>
    %c1024 = arith.constant 1024 : index
    %c0_24 = arith.constant 0 : index
    %47 = vector.load %arg5[%c1024, %c0_24] : memref<1152x128xbf16, #tpu.memory_space<vmem>>, vector<128x128xbf16>
    %cst_25 = arith.constant dense<0.000000e+00> : vector<160x128xf32>
    %48 = tpu.matmul %46, %47, %cst_25 {dimension_numbers = #tpu.dot_dimension_numbers<[1], [0], [0], [1], [0, 0, 1, 1], [], []>} : vector<160x128xbf16>, vector<128x128xbf16>, vector<160x128xf32> -> vector<160x128xf32>
    %49 = arith.addf %44, %48 : vector<160x128xf32>
    %c0_26 = arith.constant 0 : index
    %c0_27 = arith.constant 0 : index
    %50 = vector.load %arg7[%c0_26, %c0_27] : memref<1x128xf32, #tpu.memory_space<vmem>>, vector<1x128xf32>
    %51 = vector.broadcast %50 : vector<1x128xf32> to vector<160x128xf32>
    %52 = arith.mulf %49, %51 : vector<160x128xf32>
    %c0_28 = arith.constant 0 : index
    %c0_29 = arith.constant 0 : index
    %53 = vector.load %arg8[%c0_28, %c0_29] : memref<1x128xf32, #tpu.memory_space<vmem>>, vector<1x128xf32>
    %54 = vector.broadcast %53 : vector<1x128xf32> to vector<160x128xf32>
    %55 = arith.addf %52, %54 : vector<160x128xf32>
    %cst_30 = arith.constant 0.000000e+00 : f32
    %56 = vector.broadcast %cst_30 : f32 to vector<160x128xf32>
    %57 = arith.maximumf %55, %56 : vector<160x128xf32>
    %58 = vector.shape_cast %57 : vector<160x128xf32> to vector<1x10x16x128xf32>
    %c1_i32 = arith.constant 1 : i32
    %59 = arith.cmpi sge, %3, %c1_i32 : i32
    %60 = arith.extui %59 : i1 to i32
    %61 = arith.sitofp %60 : i32 to f32
    %c8_i32_31 = arith.constant 8 : i32
    %62 = arith.addi %3, %c8_i32_31 : i32
    %c16_i32 = arith.constant 16 : i32
    %63 = arith.cmpi slt, %62, %c16_i32 : i32
    %64 = arith.extui %63 : i1 to i32
    %65 = arith.sitofp %64 : i32 to f32
    %66 = vector.extract_strided_slice %58 {offsets = [0, 0, 0, 0], sizes = [1, 1, 16, 128], strides = [1, 1, 1, 1]} : vector<1x10x16x128xf32> to vector<1x1x16x128xf32>
    %67 = vector.broadcast %61 : f32 to vector<1x1x16x128xf32>
    %68 = arith.mulf %66, %67 : vector<1x1x16x128xf32>
    %69 = vector.extract_strided_slice %58 {offsets = [0, 1, 0, 0], sizes = [1, 8, 16, 128], strides = [1, 1, 1, 1]} : vector<1x10x16x128xf32> to vector<1x8x16x128xf32>
    %70 = vector.extract_strided_slice %58 {offsets = [0, 9, 0, 0], sizes = [1, 1, 16, 128], strides = [1, 1, 1, 1]} : vector<1x10x16x128xf32> to vector<1x1x16x128xf32>
    %71 = vector.broadcast %65 : f32 to vector<1x1x16x128xf32>
    %72 = arith.mulf %70, %71 : vector<1x1x16x128xf32>
    %73 = tpu.concatenate %68, %69, %72 in 1 : vector<1x1x16x128xf32>, vector<1x8x16x128xf32>, vector<1x1x16x128xf32> -> vector<1x10x16x128xf32>
    %74 = arith.truncf %73 : vector<1x10x16x128xf32> to vector<1x10x16x128xbf16>
    %cst_32 = arith.constant 0.000000e+00 : bf16
    %75 = vector.broadcast %cst_32 : bf16 to vector<1x10x1x128xbf16>
    %76 = tpu.concatenate %75, %74, %75 in 2 : vector<1x10x1x128xbf16>, vector<1x10x16x128xbf16>, vector<1x10x1x128xbf16> -> vector<1x10x18x128xbf16>
    %cst_33 = arith.constant 0.000000e+00 : f32
    %77 = vector.broadcast %cst_33 : f32 to vector<128x128xf32>
    %78 = vector.extract_strided_slice %76 {offsets = [0, 0, 0, 0], sizes = [1, 8, 16, 128], strides = [1, 1, 1, 1]} : vector<1x10x18x128xbf16> to vector<1x8x16x128xbf16>
    %79 = vector.shape_cast %78 : vector<1x8x16x128xbf16> to vector<128x128xbf16>
    %c0_34 = arith.constant 0 : index
    %c0_35 = arith.constant 0 : index
    %80 = vector.load %arg6[%c0_34, %c0_35] : memref<1152x128xbf16, #tpu.memory_space<vmem>>, vector<128x128xbf16>
    %cst_36 = arith.constant dense<0.000000e+00> : vector<128x128xf32>
    %81 = tpu.matmul %79, %80, %cst_36 {dimension_numbers = #tpu.dot_dimension_numbers<[1], [0], [0], [1], [0, 0, 1, 1], [], []>} : vector<128x128xbf16>, vector<128x128xbf16>, vector<128x128xf32> -> vector<128x128xf32>
    %82 = arith.addf %77, %81 : vector<128x128xf32>
    %83 = vector.extract_strided_slice %76 {offsets = [0, 0, 1, 0], sizes = [1, 8, 16, 128], strides = [1, 1, 1, 1]} : vector<1x10x18x128xbf16> to vector<1x8x16x128xbf16>
    %84 = vector.shape_cast %83 : vector<1x8x16x128xbf16> to vector<128x128xbf16>
    %c128_37 = arith.constant 128 : index
    %c0_38 = arith.constant 0 : index
    %85 = vector.load %arg6[%c128_37, %c0_38] : memref<1152x128xbf16, #tpu.memory_space<vmem>>, vector<128x128xbf16>
    %cst_39 = arith.constant dense<0.000000e+00> : vector<128x128xf32>
    %86 = tpu.matmul %84, %85, %cst_39 {dimension_numbers = #tpu.dot_dimension_numbers<[1], [0], [0], [1], [0, 0, 1, 1], [], []>} : vector<128x128xbf16>, vector<128x128xbf16>, vector<128x128xf32> -> vector<128x128xf32>
    %87 = arith.addf %82, %86 : vector<128x128xf32>
    %88 = vector.extract_strided_slice %76 {offsets = [0, 0, 2, 0], sizes = [1, 8, 16, 128], strides = [1, 1, 1, 1]} : vector<1x10x18x128xbf16> to vector<1x8x16x128xbf16>
    %89 = vector.shape_cast %88 : vector<1x8x16x128xbf16> to vector<128x128xbf16>
    %c256_40 = arith.constant 256 : index
    %c0_41 = arith.constant 0 : index
    %90 = vector.load %arg6[%c256_40, %c0_41] : memref<1152x128xbf16, #tpu.memory_space<vmem>>, vector<128x128xbf16>
    %cst_42 = arith.constant dense<0.000000e+00> : vector<128x128xf32>
    %91 = tpu.matmul %89, %90, %cst_42 {dimension_numbers = #tpu.dot_dimension_numbers<[1], [0], [0], [1], [0, 0, 1, 1], [], []>} : vector<128x128xbf16>, vector<128x128xbf16>, vector<128x128xf32> -> vector<128x128xf32>
    %92 = arith.addf %87, %91 : vector<128x128xf32>
    %93 = vector.extract_strided_slice %76 {offsets = [0, 1, 0, 0], sizes = [1, 8, 16, 128], strides = [1, 1, 1, 1]} : vector<1x10x18x128xbf16> to vector<1x8x16x128xbf16>
    %94 = vector.shape_cast %93 : vector<1x8x16x128xbf16> to vector<128x128xbf16>
    %c384_43 = arith.constant 384 : index
    %c0_44 = arith.constant 0 : index
    %95 = vector.load %arg6[%c384_43, %c0_44] : memref<1152x128xbf16, #tpu.memory_space<vmem>>, vector<128x128xbf16>
    %cst_45 = arith.constant dense<0.000000e+00> : vector<128x128xf32>
    %96 = tpu.matmul %94, %95, %cst_45 {dimension_numbers = #tpu.dot_dimension_numbers<[1], [0], [0], [1], [0, 0, 1, 1], [], []>} : vector<128x128xbf16>, vector<128x128xbf16>, vector<128x128xf32> -> vector<128x128xf32>
    %97 = arith.addf %92, %96 : vector<128x128xf32>
    %98 = vector.extract_strided_slice %76 {offsets = [0, 1, 1, 0], sizes = [1, 8, 16, 128], strides = [1, 1, 1, 1]} : vector<1x10x18x128xbf16> to vector<1x8x16x128xbf16>
    %99 = vector.shape_cast %98 : vector<1x8x16x128xbf16> to vector<128x128xbf16>
    %c512_46 = arith.constant 512 : index
    %c0_47 = arith.constant 0 : index
    %100 = vector.load %arg6[%c512_46, %c0_47] : memref<1152x128xbf16, #tpu.memory_space<vmem>>, vector<128x128xbf16>
    %cst_48 = arith.constant dense<0.000000e+00> : vector<128x128xf32>
    %101 = tpu.matmul %99, %100, %cst_48 {dimension_numbers = #tpu.dot_dimension_numbers<[1], [0], [0], [1], [0, 0, 1, 1], [], []>} : vector<128x128xbf16>, vector<128x128xbf16>, vector<128x128xf32> -> vector<128x128xf32>
    %102 = arith.addf %97, %101 : vector<128x128xf32>
    %103 = vector.extract_strided_slice %76 {offsets = [0, 1, 2, 0], sizes = [1, 8, 16, 128], strides = [1, 1, 1, 1]} : vector<1x10x18x128xbf16> to vector<1x8x16x128xbf16>
    %104 = vector.shape_cast %103 : vector<1x8x16x128xbf16> to vector<128x128xbf16>
    %c640_49 = arith.constant 640 : index
    %c0_50 = arith.constant 0 : index
    %105 = vector.load %arg6[%c640_49, %c0_50] : memref<1152x128xbf16, #tpu.memory_space<vmem>>, vector<128x128xbf16>
    %cst_51 = arith.constant dense<0.000000e+00> : vector<128x128xf32>
    %106 = tpu.matmul %104, %105, %cst_51 {dimension_numbers = #tpu.dot_dimension_numbers<[1], [0], [0], [1], [0, 0, 1, 1], [], []>} : vector<128x128xbf16>, vector<128x128xbf16>, vector<128x128xf32> -> vector<128x128xf32>
    %107 = arith.addf %102, %106 : vector<128x128xf32>
    %108 = vector.extract_strided_slice %76 {offsets = [0, 2, 0, 0], sizes = [1, 8, 16, 128], strides = [1, 1, 1, 1]} : vector<1x10x18x128xbf16> to vector<1x8x16x128xbf16>
    %109 = vector.shape_cast %108 : vector<1x8x16x128xbf16> to vector<128x128xbf16>
    %c768_52 = arith.constant 768 : index
    %c0_53 = arith.constant 0 : index
    %110 = vector.load %arg6[%c768_52, %c0_53] : memref<1152x128xbf16, #tpu.memory_space<vmem>>, vector<128x128xbf16>
    %cst_54 = arith.constant dense<0.000000e+00> : vector<128x128xf32>
    %111 = tpu.matmul %109, %110, %cst_54 {dimension_numbers = #tpu.dot_dimension_numbers<[1], [0], [0], [1], [0, 0, 1, 1], [], []>} : vector<128x128xbf16>, vector<128x128xbf16>, vector<128x128xf32> -> vector<128x128xf32>
    %112 = arith.addf %107, %111 : vector<128x128xf32>
    %113 = vector.extract_strided_slice %76 {offsets = [0, 2, 1, 0], sizes = [1, 8, 16, 128], strides = [1, 1, 1, 1]} : vector<1x10x18x128xbf16> to vector<1x8x16x128xbf16>
    %114 = vector.shape_cast %113 : vector<1x8x16x128xbf16> to vector<128x128xbf16>
    %c896_55 = arith.constant 896 : index
    %c0_56 = arith.constant 0 : index
    %115 = vector.load %arg6[%c896_55, %c0_56] : memref<1152x128xbf16, #tpu.memory_space<vmem>>, vector<128x128xbf16>
    %cst_57 = arith.constant dense<0.000000e+00> : vector<128x128xf32>
    %116 = tpu.matmul %114, %115, %cst_57 {dimension_numbers = #tpu.dot_dimension_numbers<[1], [0], [0], [1], [0, 0, 1, 1], [], []>} : vector<128x128xbf16>, vector<128x128xbf16>, vector<128x128xf32> -> vector<128x128xf32>
    %117 = arith.addf %112, %116 : vector<128x128xf32>
    %118 = vector.extract_strided_slice %76 {offsets = [0, 2, 2, 0], sizes = [1, 8, 16, 128], strides = [1, 1, 1, 1]} : vector<1x10x18x128xbf16> to vector<1x8x16x128xbf16>
    %119 = vector.shape_cast %118 : vector<1x8x16x128xbf16> to vector<128x128xbf16>
    %c1024_58 = arith.constant 1024 : index
    %c0_59 = arith.constant 0 : index
    %120 = vector.load %arg6[%c1024_58, %c0_59] : memref<1152x128xbf16, #tpu.memory_space<vmem>>, vector<128x128xbf16>
    %cst_60 = arith.constant dense<0.000000e+00> : vector<128x128xf32>
    %121 = tpu.matmul %119, %120, %cst_60 {dimension_numbers = #tpu.dot_dimension_numbers<[1], [0], [0], [1], [0, 0, 1, 1], [], []>} : vector<128x128xbf16>, vector<128x128xbf16>, vector<128x128xf32> -> vector<128x128xf32>
    %122 = arith.addf %117, %121 : vector<128x128xf32>
    %c0_61 = arith.constant 0 : index
    %c0_62 = arith.constant 0 : index
    %123 = vector.load %arg9[%c0_61, %c0_62] : memref<1x128xf32, #tpu.memory_space<vmem>>, vector<1x128xf32>
    %124 = vector.broadcast %123 : vector<1x128xf32> to vector<128x128xf32>
    %125 = arith.mulf %122, %124 : vector<128x128xf32>
    %c0_63 = arith.constant 0 : index
    %c0_64 = arith.constant 0 : index
    %126 = vector.load %arg10[%c0_63, %c0_64] : memref<1x128xf32, #tpu.memory_space<vmem>>, vector<1x128xf32>
    %127 = vector.broadcast %126 : vector<1x128xf32> to vector<128x128xf32>
    %128 = arith.addf %125, %127 : vector<128x128xf32>
    %c0_65 = arith.constant 0 : index
    %c0_66 = arith.constant 0 : index
    %c0_67 = arith.constant 0 : index
    %c0_68 = arith.constant 0 : index
    %129 = vector.load %arg4[%c0_65, %c0_66, %c0_67, %c0_68] : memref<1x8x16x128xf32, #tpu.memory_space<vmem>>, vector<1x8x16x128xf32>
    %130 = vector.shape_cast %129 : vector<1x8x16x128xf32> to vector<128x128xf32>
    %131 = arith.addf %128, %130 : vector<128x128xf32>
    %cst_69 = arith.constant 0.000000e+00 : f32
    %132 = vector.broadcast %cst_69 : f32 to vector<128x128xf32>
    %133 = arith.maximumf %131, %132 : vector<128x128xf32>
    %134 = vector.shape_cast %133 : vector<128x128xf32> to vector<1x8x16x128xf32>
    %c0_70 = arith.constant 0 : index
    %c0_71 = arith.constant 0 : index
    %c0_72 = arith.constant 0 : index
    %c0_73 = arith.constant 0 : index
    %135 = vector.load %arg11[%c0_70, %c0_71, %c0_72, %c0_73] : memref<1x8x16x128xf32, #tpu.memory_space<vmem>>, vector<1x8x16x128xf32>
    tpu.vector_store %arg11[%c0_70, %c0_71, %c0_72, %c0_73], %134 {strides = array<i32>} : memref<1x8x16x128xf32, #tpu.memory_space<vmem>>, vector<1x8x16x128xf32>,
    return
  }
  func.func @transform_0(%arg0: i32, %arg1: i32) -> (i32, i32, i32, i32) {
    %c0_i32 = arith.constant 0 : i32
    %c0_i32_0 = arith.constant 0 : i32
    %c0_i32_1 = arith.constant 0 : i32
    return %arg0, %arg1, %c0_i32, %c0_i32_0 : i32, i32, i32, i32
  }
  func.func @transform_1(%arg0: i32, %arg1: i32) -> (i32, i32, i32, i32) {
    %c1_i32 = arith.constant 1 : i32
    %0 = arith.addi %arg1, %c1_i32 : i32
    %c2_i32 = arith.constant 2 : i32
    %1 = arith.muli %0, %c2_i32 : i32
    %c0_i32 = arith.constant 0 : i32
    %c0_i32_0 = arith.constant 0 : i32
    %c0_i32_1 = arith.constant 0 : i32
    return %arg0, %1, %c0_i32, %c0_i32_0 : i32, i32, i32, i32
  }
  func.func @transform_2(%arg0: i32, %arg1: i32) -> (i32, i32, i32, i32) {
    %c0_i32 = arith.constant 0 : i32
    %c0_i32_0 = arith.constant 0 : i32
    %c0_i32_1 = arith.constant 0 : i32
    return %arg0, %arg1, %c0_i32, %c0_i32_0 : i32, i32, i32, i32
  }
  func.func @transform_3(%arg0: i32, %arg1: i32) -> (i32, i32) {
    %c0_i32 = arith.constant 0 : i32
    %c0_i32_0 = arith.constant 0 : i32
    %c0_i32_1 = arith.constant 0 : i32
    return %c0_i32, %c0_i32_0 : i32, i32
  }
  func.func @transform_4(%arg0: i32, %arg1: i32) -> (i32, i32) {
    %c0_i32 = arith.constant 0 : i32
    %c0_i32_0 = arith.constant 0 : i32
    %c0_i32_1 = arith.constant 0 : i32
    return %c0_i32, %c0_i32_0 : i32, i32
  }
  func.func @transform_5(%arg0: i32, %arg1: i32) -> (i32, i32) {
    %c0_i32 = arith.constant 0 : i32
    %c0_i32_0 = arith.constant 0 : i32
    %c0_i32_1 = arith.constant 0 : i32
    return %c0_i32, %c0_i32_0 : i32, i32
  }
  func.func @transform_6(%arg0: i32, %arg1: i32) -> (i32, i32) {
    %c0_i32 = arith.constant 0 : i32
    %c0_i32_0 = arith.constant 0 : i32
    %c0_i32_1 = arith.constant 0 : i32
    return %c0_i32, %c0_i32_0 : i32, i32
  }
  func.func @transform_7(%arg0: i32, %arg1: i32) -> (i32, i32) {
    %c0_i32 = arith.constant 0 : i32
    %c0_i32_0 = arith.constant 0 : i32
    %c0_i32_1 = arith.constant 0 : i32
    return %c0_i32, %c0_i32_0 : i32, i32
  }
  func.func @transform_8(%arg0: i32, %arg1: i32) -> (i32, i32) {
    %c0_i32 = arith.constant 0 : i32
    %c0_i32_0 = arith.constant 0 : i32
    %c0_i32_1 = arith.constant 0 : i32
    return %c0_i32, %c0_i32_0 : i32, i32
  }
  func.func @transform_9(%arg0: i32, %arg1: i32) -> (i32, i32, i32, i32) {
    %c0_i32 = arith.constant 0 : i32
    %c0_i32_0 = arith.constant 0 : i32
    %c0_i32_1 = arith.constant 0 : i32
    return %arg0, %arg1, %c0_i32, %c0_i32_0 : i32, i32, i32, i32
  }
}

</mosaic_0001>

<llo_original>
// kernel: tpu_custom_call.1
$region0: #{tpu_custom_call.1}
  #allocation0 [shape = 'u32[]', space=smem, size = 0x4, offset = 0x4, fixed_abs, tag = 'smem constant byte address 0x4 - core index']
  #allocation1 [shape = 'u32[72,128]{1,0:T(1,128)}', space=vmem, size = 0x9000, scoped, tag = 'internal scratch']
  %s0 = inlined_call_operand.vmem [shape: bf16[2,20,18,128], index: 0, kind: input, shape index: {}]
  %s1 = inlined_call_operand.vmem [shape: bf16[2,20,18,128], index: 1, kind: input, shape index: {}]
  %s2 = inlined_call_operand.vmem [shape: f32[2,16,16,128], index: 2, kind: input, shape index: {}]
  %s3 = inlined_call_operand.vmem [shape: bf16[1152,128], index: 3, kind: input, shape index: {}]
  %s4 = inlined_call_operand.vmem [shape: bf16[1152,128], index: 4, kind: input, shape index: {}]
  %s5 = inlined_call_operand.vmem [shape: f32[1,128], index: 5, kind: input, shape index: {}]
  %s6 = inlined_call_operand.vmem [shape: f32[1,128], index: 6, kind: input, shape index: {}]
  %s7 = inlined_call_operand.vmem [shape: f32[1,128], index: 7, kind: input, shape index: {}]
  %s8 = inlined_call_operand.vmem [shape: f32[1,128], index: 8, kind: input, shape index: {}]
  %s9 = inlined_call_operand.hbm [shape: f32[2,16,16,128], index: 9, kind: output, shape index: {}]
  %s10 = sld [smem:[#allocation0]]
  $region69: #{tpu_custom_call.1} parent=0
    _
  %s12 = ssub.s32 1, %s10
  %s13 = scalar_select 0, %s12, %s10
  $region1: #{tpu_custom_call.1} parent=0
    #allocation2 [shape = 'u8[131072]{0}', space=vmem, size = 0x20000, scoped, tag = 'output window, operand 0']
    #allocation3 [shape = 's32[2]{0}', space=sflag, size = 0x8, scoped, tag = 'scoped memory for tpu_custom_call.1']
    %14 = vsyncpa [#allocation3], 0
    %s15 = scalar_lea.sflag [#allocation3], 1
    %16 = vsyncpa %s15, 0
    loop: start=0, step=1, limit=6
    $region2: #{tpu_custom_call.1} parent=1 // loop_pre_header
      _
    $region3: #{tpu_custom_call.1} parent=1 // loop_header
      %s18 = sphi 0, %s22
      %p19 = scmp.ge.s32.totalorder %s18, 6
      %s25 = sphi 0, %s37
      %s26 = sphi 0, %s33
      %s27 = sphi 0, %s25
      %s28 = sphi 0, %s26
      %s29 = sphi 0, %s27
      %s30 = sphi 0, %s28
      %s42 = sphi 0, %s44
      %s45 = sphi 0, %s42
      %s46 = sphi 0, %s45
      %s62 = sphi 0, %s46
      %s74 = sphi 0, %s76
      %s77 = sphi 0, %s74
      %s78 = sphi 0, %s77
      %s94 = sphi 0, %s78
      %s102 = sphi 0, %s104
      %s105 = sphi 0, %s102
      %s106 = sphi 0, %s105
      %s122 = sphi 0, %s106
      %s126 = sphi 0, %s126
      %s128 = sphi 0, %s126
      %s129 = sphi 0, %s128
      %s143 = sphi 0, %s129
      %s147 = sphi 0, %s147
      %s149 = sphi 0, %s147
      %s150 = sphi 0, %s149
      %s164 = sphi 0, %s150
      %s168 = sphi 0, %s168
      %s170 = sphi 0, %s168
      %s171 = sphi 0, %s170
      %s185 = sphi 0, %s171
      %s189 = sphi 0, %s189
      %s191 = sphi 0, %s189
      %s192 = sphi 0, %s191
      %s206 = sphi 0, %s192
      %s210 = sphi 0, %s210
      %s212 = sphi 0, %s210
      %s213 = sphi 0, %s212
      %s227 = sphi 0, %s213
      %s231 = sphi 0, %s231
      %s233 = sphi 0, %s231
      %s234 = sphi 0, %s233
      %s248 = sphi 0, %s234
      %s256 = sphi 0, %s258
      %s259 = sphi 0, %s256
      %s260 = sphi 0, %s259
      %s276 = sphi 0, %s260
    $region4: #{tpu_custom_call.1} parent=1 // loop_header_branch
      %21 = sbr.rel (%p19) target = $region8
    $region5: #{tpu_custom_call.1} parent=1 // loop_body
      %s23 = ssub.s32 %s18, 1
      %s24 = ssub.s32 %s18, 2
      %s31 = sadd.s32 1, %s26
      %p32 = scmp.ge.s32.totalorder %s31, 2
      %s33 = scalar_select %p32, 0, %s31
      %s34 = sadd.s32 1, %s25
      %s35 = scalar_select %p32, %s34, %s25
      %p36 = scmp.ge.s32.totalorder %s35, 2
      %s37 = scalar_select %p36, 0, %s35
      %s38 = ssub.s32 %s25, %s37
      %s39 = ssub.s32 %s26, %s33
      %s40 = sor.u32 %s38, %s39
      %p41 = scmp.eq.s32.totalorder %s40, 0
      %s43 = sadd.s32 %s42, 1
      %s44 = scalar_select %p41, %s42, %s43
      %p47 = pneg %p41
      %p48 = scmp.eq.s32.totalorder %s18, 3
      %p49 = por %p47, %p48
      %p50 = scmp.ne.s32.totalorder %s42, %s45
      %p51 = scmp.eq.s32.totalorder %s18, 0
      %p52 = por %p50, %p51
      %p53 = scmp.ne.s32.totalorder %s42, %s45
      %p54 = scmp.eq.s32.totalorder %s23, 3
      %p55 = por %p53, %p54
      %p56 = scmp.ne.s32.totalorder %s45, %s46
      %p57 = scmp.eq.s32.totalorder %s23, 0
      %p58 = por %p56, %p57
      %p59 = scmp.ne.s32.totalorder %s45, %s46
      %p60 = scmp.eq.s32.totalorder %s24, 3
      %p61 = por %p59, %p60
      %p63 = scmp.ne.s32.totalorder %s46, %s62
      %p64 = scmp.eq.s32.totalorder %s24, 0
      %p65 = por %p63, %p64
      %s66 = sadd.s32 %s26, 1
      %s67 = smul.u32 %s66, 2
      %s68 = sadd.s32 %s33, 1
      %s69 = smul.u32 %s68, 2
      %s70 = ssub.s32 %s25, %s37
      %s71 = ssub.s32 %s67, %s69
      %s72 = sor.u32 %s70, %s71
      %p73 = scmp.eq.s32.totalorder %s72, 0
      %s75 = sadd.s32 %s74, 1
      %s76 = scalar_select %p73, %s74, %s75
      %p79 = pneg %p73
      %p80 = scmp.eq.s32.totalorder %s18, 3
      %p81 = por %p79, %p80
      %p82 = scmp.ne.s32.totalorder %s74, %s77
      %p83 = scmp.eq.s32.totalorder %s18, 0
      %p84 = por %p82, %p83
      %p85 = scmp.ne.s32.totalorder %s74, %s77
      %p86 = scmp.eq.s32.totalorder %s23, 3
      %p87 = por %p85, %p86
      %p88 = scmp.ne.s32.totalorder %s77, %s78
      %p89 = scmp.eq.s32.totalorder %s23, 0
      %p90 = por %p88, %p89
      %p91 = scmp.ne.s32.totalorder %s77, %s78
      %p92 = scmp.eq.s32.totalorder %s24, 3
      %p93 = por %p91, %p92
      %p95 = scmp.ne.s32.totalorder %s78, %s94
      %p96 = scmp.eq.s32.totalorder %s24, 0
      %p97 = por %p95, %p96
      %s98 = ssub.s32 %s25, %s37
      %s99 = ssub.s32 %s26, %s33
      %s100 = sor.u32 %s98, %s99
      %p101 = scmp.eq.s32.totalorder %s100, 0
      %s103 = sadd.s32 %s102, 1
      %s104 = scalar_select %p101, %s102, %s103
      %p107 = pneg %p101
      %p108 = scmp.eq.s32.totalorder %s18, 3
      %p109 = por %p107, %p108
      %p110 = scmp.ne.s32.totalorder %s102, %s105
      %p111 = scmp.eq.s32.totalorder %s18, 0
      %p112 = por %p110, %p111
      %p113 = scmp.ne.s32.totalorder %s102, %s105
      %p114 = scmp.eq.s32.totalorder %s23, 3
      %p115 = por %p113, %p114
      %p116 = scmp.ne.s32.totalorder %s105, %s106
      %p117 = scmp.eq.s32.totalorder %s23, 0
      %p118 = por %p116, %p117
      %p119 = scmp.ne.s32.totalorder %s105, %s106
      %p120 = scmp.eq.s32.totalorder %s24, 3
      %p121 = por %p119, %p120
      %p123 = scmp.ne.s32.totalorder %s106, %s122
      %p124 = scmp.eq.s32.totalorder %s24, 0
      %p125 = por %p123, %p124
      %s127 = sadd.s32 %s126, 1
      %p130 = scmp.eq.s32.totalorder %s18, 3
      %p131 = scmp.ne.s32.totalorder %s126, %s128
      %p132 = scmp.eq.s32.totalorder %s18, 0
      %p133 = por %p131, %p132
      %p134 = scmp.ne.s32.totalorder %s126, %s128
      %p135 = scmp.eq.s32.totalorder %s23, 3
      %p136 = por %p134, %p135
      %p137 = scmp.ne.s32.totalorder %s128, %s129
      %p138 = scmp.eq.s32.totalorder %s23, 0
      %p139 = por %p137, %p138
      %p140 = scmp.ne.s32.totalorder %s128, %s129
      %p141 = scmp.eq.s32.totalorder %s24, 3
      %p142 = por %p140, %p141
      %p144 = scmp.ne.s32.totalorder %s129, %s143
      %p145 = scmp.eq.s32.totalorder %s24, 0
      %p146 = por %p144, %p145
      %s148 = sadd.s32 %s147, 1
      %p151 = scmp.eq.s32.totalorder %s18, 3
      %p152 = scmp.ne.s32.totalorder %s147, %s149
      %p153 = scmp.eq.s32.totalorder %s18, 0
      %p154 = por %p152, %p153
      %p155 = scmp.ne.s32.totalorder %s147, %s149
      %p156 = scmp.eq.s32.totalorder %s23, 3
      %p157 = por %p155, %p156
      %p158 = scmp.ne.s32.totalorder %s149, %s150
      %p159 = scmp.eq.s32.totalorder %s23, 0
      %p160 = por %p158, %p159
      %p161 = scmp.ne.s32.totalorder %s149, %s150
      %p162 = scmp.eq.s32.totalorder %s24, 3
      %p163 = por %p161, %p162
      %p165 = scmp.ne.s32.totalorder %s150, %s164
      %p166 = scmp.eq.s32.totalorder %s24, 0
      %p167 = por %p165, %p166
      %s169 = sadd.s32 %s168, 1
      %p172 = scmp.eq.s32.totalorder %s18, 3
      %p173 = scmp.ne.s32.totalorder %s168, %s170
      %p174 = scmp.eq.s32.totalorder %s18, 0
      %p175 = por %p173, %p174
      %p176 = scmp.ne.s32.totalorder %s168, %s170
      %p177 = scmp.eq.s32.totalorder %s23, 3
      %p178 = por %p176, %p177
      %p179 = scmp.ne.s32.totalorder %s170, %s171
      %p180 = scmp.eq.s32.totalorder %s23, 0
      %p181 = por %p179, %p180
      %p182 = scmp.ne.s32.totalorder %s170, %s171
      %p183 = scmp.eq.s32.totalorder %s24, 3
      %p184 = por %p182, %p183
      %p186 = scmp.ne.s32.totalorder %s171, %s185
      %p187 = scmp.eq.s32.totalorder %s24, 0
      %p188 = por %p186, %p187
      %s190 = sadd.s32 %s189, 1
      %p193 = scmp.eq.s32.totalorder %s18, 3
      %p194 = scmp.ne.s32.totalorder %s189, %s191
      %p195 = scmp.eq.s32.totalorder %s18, 0
      %p196 = por %p194, %p195
      %p197 = scmp.ne.s32.totalorder %s189, %s191
      %p198 = scmp.eq.s32.totalorder %s23, 3
      %p199 = por %p197, %p198
      %p200 = scmp.ne.s32.totalorder %s191, %s192
      %p201 = scmp.eq.s32.totalorder %s23, 0
      %p202 = por %p200, %p201
      %p203 = scmp.ne.s32.totalorder %s191, %s192
      %p204 = scmp.eq.s32.totalorder %s24, 3
      %p205 = por %p203, %p204
      %p207 = scmp.ne.s32.totalorder %s192, %s206
      %p208 = scmp.eq.s32.totalorder %s24, 0
      %p209 = por %p207, %p208
      %s211 = sadd.s32 %s210, 1
      %p214 = scmp.eq.s32.totalorder %s18, 3
      %p215 = scmp.ne.s32.totalorder %s210, %s212
      %p216 = scmp.eq.s32.totalorder %s18, 0
      %p217 = por %p215, %p216
      %p218 = scmp.ne.s32.totalorder %s210, %s212
      %p219 = scmp.eq.s32.totalorder %s23, 3
      %p220 = por %p218, %p219
      %p221 = scmp.ne.s32.totalorder %s212, %s213
      %p222 = scmp.eq.s32.totalorder %s23, 0
      %p223 = por %p221, %p222
      %p224 = scmp.ne.s32.totalorder %s212, %s213
      %p225 = scmp.eq.s32.totalorder %s24, 3
      %p226 = por %p224, %p225
      %p228 = scmp.ne.s32.totalorder %s213, %s227
      %p229 = scmp.eq.s32.totalorder %s24, 0
      %p230 = por %p228, %p229
      %s232 = sadd.s32 %s231, 1
      %p235 = scmp.eq.s32.totalorder %s18, 3
      %p236 = scmp.ne.s32.totalorder %s231, %s233
      %p237 = scmp.eq.s32.totalorder %s18, 0
      %p238 = por %p236, %p237
      %p239 = scmp.ne.s32.totalorder %s231, %s233
      %p240 = scmp.eq.s32.totalorder %s23, 3
      %p241 = por %p239, %p240
      %p242 = scmp.ne.s32.totalorder %s233, %s234
      %p243 = scmp.eq.s32.totalorder %s23, 0
      %p244 = por %p242, %p243
      %p245 = scmp.ne.s32.totalorder %s233, %s234
      %p246 = scmp.eq.s32.totalorder %s24, 3
      %p247 = por %p245, %p246
      %p249 = scmp.ne.s32.totalorder %s234, %s248
      %p250 = scmp.eq.s32.totalorder %s24, 0
      %p251 = por %p249, %p250
      %s252 = ssub.s32 %s25, %s37
      %s253 = ssub.s32 %s26, %s33
      %s254 = sor.u32 %s252, %s253
      %p255 = scmp.eq.s32.totalorder %s254, 0
      %s257 = sadd.s32 %s256, 1
      %s258 = scalar_select %p255, %s256, %s257
      %p261 = pneg %p255
      %p262 = scmp.eq.s32.totalorder %s18, 3
      %p263 = por %p261, %p262
      %p264 = scmp.ne.s32.totalorder %s256, %s259
      %p265 = scmp.eq.s32.totalorder %s18, 0
      %p266 = por %p264, %p265
      %p267 = scmp.ne.s32.totalorder %s256, %s259
      %p268 = scmp.eq.s32.totalorder %s23, 3
      %p269 = por %p267, %p268
      %p270 = scmp.ne.s32.totalorder %s259, %s260
      %p271 = scmp.eq.s32.totalorder %s23, 0
      %p272 = por %p270, %p271
      %p273 = scmp.ne.s32.totalorder %s259, %s260
      %p274 = scmp.eq.s32.totalorder %s24, 3
      %p275 = por %p273, %p274
      %p277 = scmp.ne.s32.totalorder %s260, %s276
      %p278 = scmp.eq.s32.totalorder %s24, 0
      %p279 = por %p277, %p278
      %p280 = scmp.le.s32.totalorder 1, %s18
      %p281 = scmp.lt.s32.totalorder %s18, 5
      %p282 = pnand %p280, %p281
      %p283 = pneg %p282
      // Predicated region
      $region9: #{tpu_custom_call.1} parent=5 // pred_check
        _
      $region10: #{tpu_custom_call.1} parent=5 // pred_check_branch
        %285 = sbr.rel (%p282) target = $region12
      $region11: #{tpu_custom_call.1} parent=5 // pred_region
        %s286 = ssub.s32 %s18, 1
        // Predicated region
        $region13: #{tpu_custom_call.1} parent=11 // pred_check
          %p287 = pneg %p139
        $region14: #{tpu_custom_call.1} parent=11 // pred_check_branch
          %289 = sbr.rel (%p287) target = $region16
        $region15: #{tpu_custom_call.1} parent=11 // pred_region
          _
        $region16: #{tpu_custom_call.1} parent=11 // pred_fallthru
          _
        // Predicated region
        $region17: #{tpu_custom_call.1} parent=11 // pred_check
          %p290 = pneg %p160
        $region18: #{tpu_custom_call.1} parent=11 // pred_check_branch
          %292 = sbr.rel (%p290) target = $region20
        $region19: #{tpu_custom_call.1} parent=11 // pred_region
          _
        $region20: #{tpu_custom_call.1} parent=11 // pred_fallthru
          _
        // Predicated region
        $region21: #{tpu_custom_call.1} parent=11 // pred_check
          %p293 = pneg %p181
        $region22: #{tpu_custom_call.1} parent=11 // pred_check_branch
          %295 = sbr.rel (%p293) target = $region24
        $region23: #{tpu_custom_call.1} parent=11 // pred_region
          _
        $region24: #{tpu_custom_call.1} parent=11 // pred_fallthru
          _
        // Predicated region
        $region25: #{tpu_custom_call.1} parent=11 // pred_check
          %p296 = pneg %p202
        $region26: #{tpu_custom_call.1} parent=11 // pred_check_branch
          %298 = sbr.rel (%p296) target = $region28
        $region27: #{tpu_custom_call.1} parent=11 // pred_region
          _
        $region28: #{tpu_custom_call.1} parent=11 // pred_fallthru
          _
        // Predicated region
        $region29: #{tpu_custom_call.1} parent=11 // pred_check
          %p299 = pneg %p223
        $region30: #{tpu_custom_call.1} parent=11 // pred_check_branch
          %301 = sbr.rel (%p299) target = $region32
        $region31: #{tpu_custom_call.1} parent=11 // pred_region
          _
        $region32: #{tpu_custom_call.1} parent=11 // pred_fallthru
          _
        // Predicated region
        $region33: #{tpu_custom_call.1} parent=11 // pred_check
          %p302 = pneg %p244
        $region34: #{tpu_custom_call.1} parent=11 // pred_check_branch
          %304 = sbr.rel (%p302) target = $region36
        $region35: #{tpu_custom_call.1} parent=11 // pred_region
          _
        $region36: #{tpu_custom_call.1} parent=11 // pred_fallthru
          _
      $region12: #{tpu_custom_call.1} parent=5 // pred_fallthru
        _
      %p305 = scmp.lt.s32.totalorder %s18, 4
      // Predicated region
      $region37: #{tpu_custom_call.1} parent=5 // pred_check
        %p306 = pneg %p305
      $region38: #{tpu_custom_call.1} parent=5 // pred_check_branch
        %308 = sbr.rel (%p306) target = $region40
      $region39: #{tpu_custom_call.1} parent=5 // pred_region
        // Predicated region
        $region41: #{tpu_custom_call.1} parent=39 // pred_check
          %p309 = pneg %p52
        $region42: #{tpu_custom_call.1} parent=39 // pred_check_branch
          %311 = sbr.rel (%p309) target = $region44
        $region43: #{tpu_custom_call.1} parent=39 // pred_region
          %s312 = smul.u32 8, %s26
          %s313 = ssub.s32 20, %s312
          %p314 = scmp.lt.s32.totalorder %s313, 8
          %s315 = scalar_select %p314, %s313, 8
          %s316 = smul.u32 4, %s315
          %s317 = smul.u32 %s316, 3
          %p318 = scmp.lt.s32.totalorder %s25, 1
          %s319 = scalar_select %p318, %s25, 1
          %p320 = scmp.lt.s32.totalorder %s312, 19
          %s321 = scalar_select %p320, %s312, 19
          %s322 = smul.addr %s321, 3
          %s323 = smul.addr %s319, 60
          %s324 = sadd.s32 %s322, %s323
          %s325 = smul.addr %s324, 4
          %s326 = scalar_lea.vmem %s0, %s325
          %s327 = smul.u32 8, %s26
          %s328 = ssub.s32 20, %s327
          %p329 = scmp.lt.s32.totalorder %s328, 8
          %s330 = scalar_select %p329, %s328, 8
          %s331 = smul.u32 4, %s330
          %s332 = smul.u32 %s331, 3
        $region44: #{tpu_custom_call.1} parent=39 // pred_fallthru
          _
        // Predicated region
        $region45: #{tpu_custom_call.1} parent=39 // pred_check
          %p333 = pneg %p84
        $region46: #{tpu_custom_call.1} parent=39 // pred_check_branch
          %335 = sbr.rel (%p333) target = $region48
        $region47: #{tpu_custom_call.1} parent=39 // pred_region
          %s336 = sadd.s32 %s26, 1
          %s337 = smul.u32 %s336, 2
          %s338 = smul.u32 4, %s337
          %p339 = scmp.lt.s32.totalorder %s25, 1
          %s340 = scalar_select %p339, %s25, 1
          %p341 = scmp.lt.s32.totalorder %s338, 19
          %s342 = scalar_select %p341, %s338, 19
          %s343 = smul.addr %s342, 3
          %s344 = smul.addr %s340, 60
          %s345 = sadd.s32 %s343, %s344
          %s346 = smul.addr %s345, 4
          %s347 = scalar_lea.vmem %s1, %s346
          %s348 = sadd.s32 %s26, 1
          %s349 = smul.u32 %s348, 2
          %s350 = smul.u32 4, %s349
        $region48: #{tpu_custom_call.1} parent=39 // pred_fallthru
          _
        // Predicated region
        $region49: #{tpu_custom_call.1} parent=39 // pred_check
          %p351 = pneg %p112
        $region50: #{tpu_custom_call.1} parent=39 // pred_check_branch
          %353 = sbr.rel (%p351) target = $region52
        $region51: #{tpu_custom_call.1} parent=39 // pred_region
          %s354 = smul.u32 8, %s26
          %p355 = scmp.lt.s32.totalorder %s25, 1
          %s356 = scalar_select %p355, %s25, 1
          %p357 = scmp.lt.s32.totalorder %s354, 15
          %s358 = scalar_select %p357, %s354, 15
          %s359 = smul.addr %s358, 2
          %s360 = smul.addr %s356, 32
          %s361 = sadd.s32 %s359, %s360
          %s362 = smul.addr %s361, 8
          %s363 = scalar_lea.vmem %s2, %s362
          %s364 = smul.u32 8, %s26
        $region52: #{tpu_custom_call.1} parent=39 // pred_fallthru
          _
      $region40: #{tpu_custom_call.1} parent=5 // pred_fallthru
        _
      %p365 = scmp.le.s32.totalorder 1, %s18
      %p366 = scmp.lt.s32.totalorder %s18, 5
      %p367 = pnand %p365, %p366
      %p368 = pneg %p367
      // Predicated region
      $region53: #{tpu_custom_call.1} parent=5 // pred_check
        _
      $region54: #{tpu_custom_call.1} parent=5 // pred_check_branch
        %370 = sbr.rel (%p367) target = $region56
      $region55: #{tpu_custom_call.1} parent=5 // pred_region
        %s371 = ssub.s32 %s18, 1
        %s372 = smul.u32 8, %s28
        %s373 = ssub.s32 20, %s372
        %p374 = scmp.lt.s32.totalorder %s373, 8
        %s375 = scalar_select %p374, %s373, 8
        %s376 = smul.u32 4, %s375
        %s377 = smul.u32 %s376, 3
        %p378 = scmp.lt.s32.totalorder %s27, 1
        %s379 = scalar_select %p378, %s27, 1
        %p380 = scmp.lt.s32.totalorder %s372, 19
        %s381 = scalar_select %p380, %s372, 19
        %s382 = smul.addr %s381, 3
        %s383 = smul.addr %s379, 60
        %s384 = sadd.s32 %s382, %s383
        %s385 = smul.addr %s384, 4
        %s386 = scalar_lea.vmem %s0, %s385
        %p387 = pneg %p58
        %p388 = pneg %p55
        %s389 = sadd.s32 %s28, 1
        %s390 = smul.u32 %s389, 2
        %s391 = smul.u32 4, %s390
        %p392 = scmp.lt.s32.totalorder %s27, 1
        %s393 = scalar_select %p392, %s27, 1
        %p394 = scmp.lt.s32.totalorder %s391, 19
        %s395 = scalar_select %p394, %s391, 19
        %s396 = smul.addr %s395, 3
        %s397 = smul.addr %s393, 60
        %s398 = sadd.s32 %s396, %s397
        %s399 = smul.addr %s398, 4
        %s400 = scalar_lea.vmem %s1, %s399
        %p401 = pneg %p90
        %p402 = pneg %p87
        %s403 = smul.u32 8, %s28
        %p404 = scmp.lt.s32.totalorder %s27, 1
        %s405 = scalar_select %p404, %s27, 1
        %p406 = scmp.lt.s32.totalorder %s403, 15
        %s407 = scalar_select %p406, %s403, 15
        %s408 = smul.addr %s407, 2
        %s409 = smul.addr %s405, 32
        %s410 = sadd.s32 %s408, %s409
        %s411 = smul.addr %s410, 8
        %s412 = scalar_lea.vmem %s2, %s411
        %p413 = pneg %p118
        %p414 = pneg %p115
        %p415 = pneg %p139
        %p416 = pneg %p136
        %p417 = pneg %p160
        %p418 = pneg %p157
        %p419 = pneg %p181
        %p420 = pneg %p178
        %p421 = pneg %p202
        %p422 = pneg %p199
        %p423 = pneg %p223
        %p424 = pneg %p220
        %p425 = pneg %p244
        %p426 = pneg %p241
        %p427 = pneg %p272
        %p428 = pneg %p269
        %s429 = sand.u32 %s259, 1
        %s430 = scalar_lea.sflag [#allocation3], %s429
        %s431 = sand.u32 %s259, 1
        %s432 = smul.addr %s431, 128
        %s433 = scalar_lea.vmem [#allocation2], %s432
        %s434 = smul.u32 8, %s28
        %s435 = ssub.s32 20, %s434
        %p436 = scmp.lt.s32.totalorder %s435, 8
        %s437 = scalar_select %p436, %s435, 8
        %s438 = smul.u32 4, %s437
        %s439 = smul.u32 %s438, 3
        %p440 = scmp.lt.s32.totalorder %s27, 1
        %s441 = scalar_select %p440, %s27, 1
        %p442 = scmp.lt.s32.totalorder %s434, 19
        %s443 = scalar_select %p442, %s434, 19
        %s444 = smul.addr %s443, 3
        %s445 = smul.addr %s441, 60
        %s446 = sadd.s32 %s444, %s445
        %s447 = smul.addr %s446, 4
        %s448 = scalar_lea.vmem %s0, %s447
        %s449 = smul.u32 8, %s28
        %s450 = ssub.s32 20, %s449
        %p451 = scmp.lt.s32.totalorder %s450, 8
        %s452 = scalar_select %p451, %s450, 8
        %s453 = smul.u32 4, %s452
        %s454 = smul.u32 %s453, 3
        %s455 = sadd.s32 %s28, 1
        %s456 = smul.u32 %s455, 2
        %s457 = smul.u32 4, %s456
        %p458 = scmp.lt.s32.totalorder %s27, 1
        %s459 = scalar_select %p458, %s27, 1
        %p460 = scmp.lt.s32.totalorder %s457, 19
        %s461 = scalar_select %p460, %s457, 19
        %s462 = smul.addr %s461, 3
        %s463 = smul.addr %s459, 60
        %s464 = sadd.s32 %s462, %s463
        %s465 = smul.addr %s464, 4
        %s466 = scalar_lea.vmem %s1, %s465
        %s467 = sadd.s32 %s28, 1
        %s468 = smul.u32 %s467, 2
        %s469 = smul.u32 4, %s468
        %s470 = smul.u32 8, %s28
        %p471 = scmp.lt.s32.totalorder %s27, 1
        %s472 = scalar_select %p471, %s27, 1
        %p473 = scmp.lt.s32.totalorder %s470, 15
        %s474 = scalar_select %p473, %s470, 15
        %s475 = smul.addr %s474, 2
        %s476 = smul.addr %s472, 32
        %s477 = sadd.s32 %s475, %s476
        %s478 = smul.addr %s477, 8
        %s479 = scalar_lea.vmem %s2, %s478
        %s480 = smul.u32 8, %s28
        %s481 = smul.u32 8, %s28
        %v483 = vld [vmem:[%s448] sm:$0xf]
        %v484 = vld [vmem:[%s448 + $0x4] sm:$0xf]
        %v485 = vld [vmem:[%s448 + $0x8] sm:$0x1]
        %v486 = vld [vmem:[%s448 + $0xc] sm:$0xf]
        %v487 = vld [vmem:[%s448 + $0x10] sm:$0xf]
        %v488 = vld [vmem:[%s448 + $0x14] sm:$0x1]
        %v489 = vld [vmem:[%s448 + $0x18] sm:$0xf]
        %v490 = vld [vmem:[%s448 + $0x1c] sm:$0xf]
        %v491 = vld [vmem:[%s448 + $0x20] sm:$0x1]
        %v492 = vld [vmem:[%s448 + $0x24] sm:$0xf]
        %v493 = vld [vmem:[%s448 + $0x28] sm:$0xf]
        %v494 = vld [vmem:[%s448 + $0x2c] sm:$0x1]
        %v495 = vld [vmem:[%s448 + $0x30] sm:$0xf]
        %v496 = vld [vmem:[%s448 + $0x34] sm:$0xf]
        %v497 = vld [vmem:[%s448 + $0x38] sm:$0x1]
        %v498 = vld [vmem:[%s448 + $0x3c] sm:$0xf]
        %v499 = vld [vmem:[%s448 + $0x40] sm:$0xf]
        %v500 = vld [vmem:[%s448 + $0x44] sm:$0x1]
        %v501 = vld [vmem:[%s448 + $0x48] sm:$0xf]
        %v502 = vld [vmem:[%s448 + $0x4c] sm:$0xf]
        %v503 = vld [vmem:[%s448 + $0x50] sm:$0x1]
        %v504 = vld [vmem:[%s448 + $0x54] sm:$0xf]
        %v505 = vld [vmem:[%s448 + $0x58] sm:$0xf]
        %v506 = vld [vmem:[%s448 + $0x5c] sm:$0x1]
        %v507 = vld [vmem:[%s466] sm:$0xf]
        %v508 = vld [vmem:[%s466 + $0x4] sm:$0xf]
        %v509 = vld [vmem:[%s466 + $0x8] sm:$0x1]
        %v510 = vld [vmem:[%s466 + $0xc] sm:$0xf]
        %v511 = vld [vmem:[%s466 + $0x10] sm:$0xf]
        %v512 = vld [vmem:[%s466 + $0x14] sm:$0x1]
        %v513 = vld [vmem:[%s466 + $0x18] sm:$0xf]
        %v514 = vld [vmem:[%s466 + $0x1c] sm:$0xf]
        %v515 = vld [vmem:[%s466 + $0x20] sm:$0x1]
        %v516 = vld [vmem:[%s466 + $0x24] sm:$0xf]
        %v517 = vld [vmem:[%s466 + $0x28] sm:$0xf]
        %v518 = vld [vmem:[%s466 + $0x2c] sm:$0x1]
        %s519 = smul.u32 %s28, 8
        %v520 = vld [vmem:[%s3] sm:$0xf]
        %v521 = vld [vmem:[%s3 + $0x4] sm:$0xf]
        %v522 = vld [vmem:[%s3 + $0x8] sm:$0xf]
        %v523 = vld [vmem:[%s3 + $0xc] sm:$0xf]
        %v524 = vld [vmem:[%s3 + $0x10] sm:$0xf]
        %v525 = vld [vmem:[%s3 + $0x14] sm:$0xf]
        %v526 = vld [vmem:[%s3 + $0x18] sm:$0xf]
        %v527 = vld [vmem:[%s3 + $0x1c] sm:$0xf]
        %v528 = vld [vmem:[%s3 + $0x20] sm:$0xf]
        %v529 = vld [vmem:[%s3 + $0x24] sm:$0xf]
        %v530 = vld [vmem:[%s3 + $0x28] sm:$0xf]
        %v531 = vld [vmem:[%s3 + $0x2c] sm:$0xf]
        %v532 = vld [vmem:[%s3 + $0x30] sm:$0xf]
        %v533 = vld [vmem:[%s3 + $0x34] sm:$0xf]
        %v534 = vld [vmem:[%s3 + $0x38] sm:$0xf]
        %v535 = vld [vmem:[%s3 + $0x3c] sm:$0xf]
        %vm536 = vsmask.f32 3328
        %vm537 = vsmask.f32 7440
        %vm538 = vmor %vm536, %vm537
        %v540 = vshrl.u32 %v483, 16
        %v542 = vrot.slane %v540, 4
        %v543 = vshll.u32 %v483, 16
        %v545 = vrot.slane %v543, 5
        %v546 = vor.u32 %v542, %v545
        %v547 = vrot.slane %v546, 4
        %v549 = vshll.u32 %v484, 16
        %v551 = vrot.slane %v549, 5
        %v552 = vsel %vm538, %v547, %v551
        %v553 = vshrl.u32 %v484, 16
        %v555 = vrot.slane %v553, 4
        %v556 = vor.u32 %v555, %v551
        %v557 = vrot.slane %v556, 4
        %v559 = vshll.u32 %v485, 16
        %v561 = vrot.slane %v559, 5
        %v562 = vsel %vm538, %v557, %v561
        %v564 = vshrl.u32 %v486, 16
        %v566 = vrot.slane %v564, 4
        %v567 = vshll.u32 %v486, 16
        %v569 = vrot.slane %v567, 5
        %v570 = vor.u32 %v566, %v569
        %v571 = vrot.slane %v570, 4
        %v573 = vshll.u32 %v487, 16
        %v575 = vrot.slane %v573, 5
        %v576 = vsel %vm538, %v571, %v575
        %v577 = vshrl.u32 %v487, 16
        %v579 = vrot.slane %v577, 4
        %v580 = vor.u32 %v579, %v575
        %v581 = vrot.slane %v580, 4
        %v583 = vshll.u32 %v488, 16
        %v585 = vrot.slane %v583, 5
        %v586 = vsel %vm538, %v581, %v585
        %v588 = vshrl.u32 %v489, 16
        %v590 = vrot.slane %v588, 4
        %v591 = vshll.u32 %v489, 16
        %v593 = vrot.slane %v591, 5
        %v594 = vor.u32 %v590, %v593
        %v595 = vrot.slane %v594, 4
        %v597 = vshll.u32 %v490, 16
        %v599 = vrot.slane %v597, 5
        %v600 = vsel %vm538, %v595, %v599
        %v601 = vshrl.u32 %v490, 16
        %v603 = vrot.slane %v601, 4
        %v604 = vor.u32 %v603, %v599
        %v605 = vrot.slane %v604, 4
        %v607 = vshll.u32 %v491, 16
        %v609 = vrot.slane %v607, 5
        %v610 = vsel %vm538, %v605, %v609
        %v612 = vshrl.u32 %v492, 16
        %v614 = vrot.slane %v612, 4
        %v615 = vshll.u32 %v492, 16
        %v617 = vrot.slane %v615, 5
        %v618 = vor.u32 %v614, %v617
        %v619 = vrot.slane %v618, 4
        %v621 = vshll.u32 %v493, 16
        %v623 = vrot.slane %v621, 5
        %v624 = vsel %vm538, %v619, %v623
        %v625 = vshrl.u32 %v493, 16
        %v627 = vrot.slane %v625, 4
        %v628 = vor.u32 %v627, %v623
        %v629 = vrot.slane %v628, 4
        %v631 = vshll.u32 %v494, 16
        %v633 = vrot.slane %v631, 5
        %v634 = vsel %vm538, %v629, %v633
        %v636 = vshrl.u32 %v495, 16
        %v638 = vrot.slane %v636, 4
        %v639 = vshll.u32 %v495, 16
        %v641 = vrot.slane %v639, 5
        %v642 = vor.u32 %v638, %v641
        %v643 = vrot.slane %v642, 4
        %v645 = vshll.u32 %v496, 16
        %v647 = vrot.slane %v645, 5
        %v648 = vsel %vm538, %v643, %v647
        %v649 = vshrl.u32 %v496, 16
        %v651 = vrot.slane %v649, 4
        %v652 = vor.u32 %v651, %v647
        %v653 = vrot.slane %v652, 4
        %v655 = vshll.u32 %v497, 16
        %v657 = vrot.slane %v655, 5
        %v658 = vsel %vm538, %v653, %v657
        %v660 = vshrl.u32 %v498, 16
        %v662 = vrot.slane %v660, 4
        %v663 = vshll.u32 %v498, 16
        %v665 = vrot.slane %v663, 5
        %v666 = vor.u32 %v662, %v665
        %v667 = vrot.slane %v666, 4
        %v669 = vshll.u32 %v499, 16
        %v671 = vrot.slane %v669, 5
        %v672 = vsel %vm538, %v667, %v671
        %v673 = vshrl.u32 %v499, 16
        %v675 = vrot.slane %v673, 4
        %v676 = vor.u32 %v675, %v671
        %v677 = vrot.slane %v676, 4
        %v679 = vshll.u32 %v500, 16
        %v681 = vrot.slane %v679, 5
        %v682 = vsel %vm538, %v677, %v681
        %v684 = vshrl.u32 %v501, 16
        %v686 = vrot.slane %v684, 4
        %v687 = vshll.u32 %v501, 16
        %v689 = vrot.slane %v687, 5
        %v690 = vor.u32 %v686, %v689
        %v691 = vrot.slane %v690, 4
        %v693 = vshll.u32 %v502, 16
        %v695 = vrot.slane %v693, 5
        %v696 = vsel %vm538, %v691, %v695
        %v697 = vshrl.u32 %v502, 16
        %v699 = vrot.slane %v697, 4
        %v700 = vor.u32 %v699, %v695
        %v701 = vrot.slane %v700, 4
        %v703 = vshll.u32 %v503, 16
        %v705 = vrot.slane %v703, 5
        %v706 = vsel %vm538, %v701, %v705
        %v708 = vshrl.u32 %v504, 16
        %v710 = vrot.slane %v708, 4
        %v711 = vshll.u32 %v504, 16
        %v713 = vrot.slane %v711, 5
        %v714 = vor.u32 %v710, %v713
        %v715 = vrot.slane %v714, 4
        %v717 = vshll.u32 %v505, 16
        %v719 = vrot.slane %v717, 5
        %v720 = vsel %vm538, %v715, %v719
        %v721 = vshrl.u32 %v505, 16
        %v723 = vrot.slane %v721, 4
        %v724 = vor.u32 %v723, %v719
        %v725 = vrot.slane %v724, 4
        %v727 = vshll.u32 %v506, 16
        %v729 = vrot.slane %v727, 5
        %v730 = vsel %vm538, %v725, %v729
        %v732 = vshrl.u32 %v507, 16
        %v734 = vrot.slane %v732, 4
        %v735 = vshll.u32 %v507, 16
        %v737 = vrot.slane %v735, 5
        %v738 = vor.u32 %v734, %v737
        %v739 = vrot.slane %v738, 4
        %v741 = vshll.u32 %v508, 16
        %v743 = vrot.slane %v741, 5
        %v744 = vsel %vm538, %v739, %v743
        %v745 = vshrl.u32 %v508, 16
        %v747 = vrot.slane %v745, 4
        %v748 = vor.u32 %v747, %v743
        %v749 = vrot.slane %v748, 4
        %v751 = vshll.u32 %v509, 16
        %v753 = vrot.slane %v751, 5
        %v754 = vsel %vm538, %v749, %v753
        %v756 = vshrl.u32 %v510, 16
        %v758 = vrot.slane %v756, 4
        %v759 = vshll.u32 %v510, 16
        %v761 = vrot.slane %v759, 5
        %v762 = vor.u32 %v758, %v761
        %v763 = vrot.slane %v762, 4
        %v765 = vshll.u32 %v511, 16
        %v767 = vrot.slane %v765, 5
        %v768 = vsel %vm538, %v763, %v767
        %v769 = vshrl.u32 %v511, 16
        %v771 = vrot.slane %v769, 4
        %v772 = vor.u32 %v771, %v767
        %v773 = vrot.slane %v772, 4
        %v775 = vshll.u32 %v512, 16
        %v777 = vrot.slane %v775, 5
        %v778 = vsel %vm538, %v773, %v777
        %v779 = vld [vmem:[%s3 + $0x40] sm:$0xf]
        %v780 = vld [vmem:[%s3 + $0x44] sm:$0xf]
        %v781 = vld [vmem:[%s3 + $0x48] sm:$0xf]
        %v782 = vld [vmem:[%s3 + $0x4c] sm:$0xf]
        %v783 = vld [vmem:[%s3 + $0x50] sm:$0xf]
        %v784 = vld [vmem:[%s3 + $0x54] sm:$0xf]
        %v785 = vld [vmem:[%s3 + $0x58] sm:$0xf]
        %v786 = vld [vmem:[%s3 + $0x5c] sm:$0xf]
        %v787 = vld [vmem:[%s3 + $0x60] sm:$0xf]
        %v788 = vld [vmem:[%s3 + $0x64] sm:$0xf]
        %v789 = vld [vmem:[%s3 + $0x68] sm:$0xf]
        %v790 = vld [vmem:[%s3 + $0x6c] sm:$0xf]
        %v791 = vld [vmem:[%s3 + $0x70] sm:$0xf]
        %v792 = vld [vmem:[%s3 + $0x74] sm:$0xf]
        %v793 = vld [vmem:[%s3 + $0x78] sm:$0xf]
        %v794 = vld [vmem:[%s3 + $0x7c] sm:$0xf]
        %v795 = vunpack.c.l.b16 %v552
        %v796 = vunpack.c.l.b16 %v562
        %v797 = vunpack.c.l.b16 %v576
        %v798 = vunpack.c.l.b16 %v586
        %v799 = vunpack.c.l.b16 %v600
        %v800 = vunpack.c.l.b16 %v610
        %v801 = vunpack.c.l.b16 %v624
        %v802 = vunpack.c.l.b16 %v634
        %v803 = vunpack.c.l.b16 %v648
        %v804 = vunpack.c.l.b16 %v658
        %v805 = vunpack.c.l.b16 %v672
        %v806 = vunpack.c.l.b16 %v682
        %v807 = vunpack.c.l.b16 %v696
        %v808 = vunpack.c.l.b16 %v706
        %v809 = vunpack.c.l.b16 %v720
        %v810 = vunpack.c.l.b16 %v730
        %v811 = vunpack.c.l.b16 %v744
        %v812 = vunpack.c.l.b16 %v754
        %v813 = vunpack.c.l.b16 %v768
        %v814 = vunpack.c.l.b16 %v778
        %v815 = vpack.c.b16 %v796, %v795
        %v816 = vpack.c.b16 %v798, %v797
        %v817 = vpack.c.b16 %v800, %v799
        %v818 = vpack.c.b16 %v802, %v801
        %v819 = vpack.c.b16 %v804, %v803
        %v820 = vpack.c.b16 %v806, %v805
        %v821 = vpack.c.b16 %v808, %v807
        %v822 = vpack.c.b16 %v810, %v809
        %v823 = vpack.c.b16 %v812, %v811
        %v824 = vpack.c.b16 %v814, %v813
        %v851 = vunpack.c.l.b16 %v779
        %v852 = vunpack.c.l.b16 %v780
        %v853 = vunpack.c.l.b16 %v781
        %v854 = vunpack.c.l.b16 %v782
        %v855 = vunpack.c.l.b16 %v783
        %v856 = vunpack.c.l.b16 %v784
        %v857 = vunpack.c.l.b16 %v785
        %v858 = vunpack.c.l.b16 %v786
        %v859 = vunpack.c.l.b16 %v787
        %v860 = vunpack.c.l.b16 %v788
        %v861 = vunpack.c.l.b16 %v789
        %v862 = vunpack.c.l.b16 %v790
        %v863 = vunpack.c.l.b16 %v791
        %v864 = vunpack.c.l.b16 %v792
        %v865 = vunpack.c.l.b16 %v793
        %v866 = vunpack.c.l.b16 %v794
        %v867 = vpack.c.b16 %v852, %v851
        %v868 = vpack.c.b16 %v854, %v853
        %v869 = vpack.c.b16 %v856, %v855
        %v870 = vpack.c.b16 %v858, %v857
        %v871 = vpack.c.b16 %v860, %v859
        %v872 = vpack.c.b16 %v862, %v861
        %v873 = vpack.c.b16 %v864, %v863
        %v874 = vpack.c.b16 %v866, %v865
        %883 = vmatpush.bf16.msra.mxu0 %v874
        %884 = vmatpush.bf16.msra.mxu0 %v873
        %885 = vmatpush.bf16.msra.mxu0 %v872
        %886 = vmatpush.bf16.msra.mxu0 %v871
        %887 = vmatpush.bf16.msra.mxu0 %v870
        %888 = vmatpush.bf16.msra.mxu0 %v869
        %889 = vmatpush.bf16.msra.mxu0 %v868
        %890 = vmatpush.bf16.msra.mxu0 %v867
        %891 = vmatmul.bf16.gmra.mxu0 %v815
        %v892 = vpop.f32.mrf.mxu0
        %v893 = vadd.f32 0.0, %v892
        %v894 = vpop.f32.mrf.mxu0
        %v895 = vadd.f32 0.0, %v894
        %896 = vmatmul.bf16.gmra.mxu0 %v816
        %v897 = vpop.f32.mrf.mxu0
        %v898 = vadd.f32 0.0, %v897
        %v899 = vpop.f32.mrf.mxu0
        %v900 = vadd.f32 0.0, %v899
        %901 = vmatmul.bf16.gmra.mxu0 %v817
        %v902 = vpop.f32.mrf.mxu0
        %v903 = vadd.f32 0.0, %v902
        %v904 = vpop.f32.mrf.mxu0
        %v905 = vadd.f32 0.0, %v904
        %906 = vmatmul.bf16.gmra.mxu0 %v818
        %v907 = vpop.f32.mrf.mxu0
        %v908 = vadd.f32 0.0, %v907
        %v909 = vpop.f32.mrf.mxu0
        %v910 = vadd.f32 0.0, %v909
        %911 = vmatmul.bf16.gmra.mxu0 %v819
        %v912 = vpop.f32.mrf.mxu0
        %v913 = vadd.f32 0.0, %v912
        %v914 = vpop.f32.mrf.mxu0
        %v915 = vadd.f32 0.0, %v914
        %916 = vmatmul.bf16.gmra.mxu0 %v820
        %v917 = vpop.f32.mrf.mxu0
        %v918 = vadd.f32 0.0, %v917
        %v919 = vpop.f32.mrf.mxu0
        %v920 = vadd.f32 0.0, %v919
        %921 = vmatmul.bf16.gmra.mxu0 %v821
        %v922 = vpop.f32.mrf.mxu0
        %v923 = vadd.f32 0.0, %v922
        %v924 = vpop.f32.mrf.mxu0
        %v925 = vadd.f32 0.0, %v924
        %926 = vmatmul.bf16.gmra.mxu0 %v822
        %v927 = vpop.f32.mrf.mxu0
        %v928 = vadd.f32 0.0, %v927
        %v929 = vpop.f32.mrf.mxu0
        %v930 = vadd.f32 0.0, %v929
        %931 = vmatmul.bf16.gmra.mxu0 %v823
        %v932 = vpop.f32.mrf.mxu0
        %v933 = vadd.f32 0.0, %v932
        %v934 = vpop.f32.mrf.mxu0
        %v935 = vadd.f32 0.0, %v934
        %936 = vmatmul.bf16.gmra.mxu0 %v824
        %v937 = vpop.f32.mrf.mxu0
        %v938 = vadd.f32 0.0, %v937
        %v939 = vpop.f32.mrf.mxu0
        %v940 = vadd.f32 0.0, %v939
        %941 = vdwg.mxu0
        %v962 = vunpack.c.l.b16 %v483
        %v963 = vunpack.c.l.b16 %v484
        %v964 = vunpack.c.l.b16 %v486
        %v965 = vunpack.c.l.b16 %v487
        %v966 = vunpack.c.l.b16 %v489
        %v967 = vunpack.c.l.b16 %v490
        %v968 = vunpack.c.l.b16 %v492
        %v969 = vunpack.c.l.b16 %v493
        %v970 = vunpack.c.l.b16 %v495
        %v971 = vunpack.c.l.b16 %v496
        %v972 = vunpack.c.l.b16 %v498
        %v973 = vunpack.c.l.b16 %v499
        %v974 = vunpack.c.l.b16 %v501
        %v975 = vunpack.c.l.b16 %v502
        %v976 = vunpack.c.l.b16 %v504
        %v977 = vunpack.c.l.b16 %v505
        %v978 = vunpack.c.l.b16 %v507
        %v979 = vunpack.c.l.b16 %v508
        %v980 = vunpack.c.l.b16 %v510
        %v981 = vunpack.c.l.b16 %v511
        %v982 = vpack.c.b16 %v963, %v962
        %v983 = vpack.c.b16 %v965, %v964
        %v984 = vpack.c.b16 %v967, %v966
        %v985 = vpack.c.b16 %v969, %v968
        %v986 = vpack.c.b16 %v971, %v970
        %v987 = vpack.c.b16 %v973, %v972
        %v988 = vpack.c.b16 %v975, %v974
        %v989 = vpack.c.b16 %v977, %v976
        %v990 = vpack.c.b16 %v979, %v978
        %v991 = vpack.c.b16 %v981, %v980
        %v1018 = vunpack.c.l.b16 %v520
        %v1019 = vunpack.c.l.b16 %v521
        %v1020 = vunpack.c.l.b16 %v522
        %v1021 = vunpack.c.l.b16 %v523
        %v1022 = vunpack.c.l.b16 %v524
        %v1023 = vunpack.c.l.b16 %v525
        %v1024 = vunpack.c.l.b16 %v526
        %v1025 = vunpack.c.l.b16 %v527
        %v1026 = vunpack.c.l.b16 %v528
        %v1027 = vunpack.c.l.b16 %v529
        %v1028 = vunpack.c.l.b16 %v530
        %v1029 = vunpack.c.l.b16 %v531
        %v1030 = vunpack.c.l.b16 %v532
        %v1031 = vunpack.c.l.b16 %v533
        %v1032 = vunpack.c.l.b16 %v534
        %v1033 = vunpack.c.l.b16 %v535
        %v1034 = vpack.c.b16 %v1019, %v1018
        %v1035 = vpack.c.b16 %v1021, %v1020
        %v1036 = vpack.c.b16 %v1023, %v1022
        %v1037 = vpack.c.b16 %v1025, %v1024
        %v1038 = vpack.c.b16 %v1027, %v1026
        %v1039 = vpack.c.b16 %v1029, %v1028
        %v1040 = vpack.c.b16 %v1031, %v1030
        %v1041 = vpack.c.b16 %v1033, %v1032
        %1050 = vmatpush.bf16.msra.mxu0 %v1041
        %1051 = vmatpush.bf16.msra.mxu0 %v1040
        %1052 = vmatpush.bf16.msra.mxu0 %v1039
        %1053 = vmatpush.bf16.msra.mxu0 %v1038
        %1054 = vmatpush.bf16.msra.mxu0 %v1037
        %1055 = vmatpush.bf16.msra.mxu0 %v1036
        %1056 = vmatpush.bf16.msra.mxu0 %v1035
        %1057 = vmatpush.bf16.msra.mxu0 %v1034
        %1058 = vmatmul.bf16.gmra.mxu0 %v982
        %v1059 = vpop.f32.mrf.mxu0
        %v1060 = vadd.f32 %v893, %v1059
        %v1061 = vpop.f32.mrf.mxu0
        %v1062 = vadd.f32 %v895, %v1061
        %1063 = vmatmul.bf16.gmra.mxu0 %v983
        %v1064 = vpop.f32.mrf.mxu0
        %v1065 = vadd.f32 %v898, %v1064
        %v1066 = vpop.f32.mrf.mxu0
        %v1067 = vadd.f32 %v900, %v1066
        %1068 = vmatmul.bf16.gmra.mxu0 %v984
        %v1069 = vpop.f32.mrf.mxu0
        %v1070 = vadd.f32 %v903, %v1069
        %v1071 = vpop.f32.mrf.mxu0
        %v1072 = vadd.f32 %v905, %v1071
        %1073 = vmatmul.bf16.gmra.mxu0 %v985
        %v1074 = vpop.f32.mrf.mxu0
        %v1075 = vadd.f32 %v908, %v1074
        %v1076 = vpop.f32.mrf.mxu0
        %v1077 = vadd.f32 %v910, %v1076
        %1078 = vmatmul.bf16.gmra.mxu0 %v986
        %v1079 = vpop.f32.mrf.mxu0
        %v1080 = vadd.f32 %v913, %v1079
        %v1081 = vpop.f32.mrf.mxu0
        %v1082 = vadd.f32 %v915, %v1081
        %1083 = vmatmul.bf16.gmra.mxu0 %v987
        %v1084 = vpop.f32.mrf.mxu0
        %v1085 = vadd.f32 %v918, %v1084
        %v1086 = vpop.f32.mrf.mxu0
        %v1087 = vadd.f32 %v920, %v1086
        %1088 = vmatmul.bf16.gmra.mxu0 %v988
        %v1089 = vpop.f32.mrf.mxu0
        %v1090 = vadd.f32 %v923, %v1089
        %v1091 = vpop.f32.mrf.mxu0
        %v1092 = vadd.f32 %v925, %v1091
        %1093 = vmatmul.bf16.gmra.mxu0 %v989
        %v1094 = vpop.f32.mrf.mxu0
        %v1095 = vadd.f32 %v928, %v1094
        %v1096 = vpop.f32.mrf.mxu0
        %v1097 = vadd.f32 %v930, %v1096
        %1098 = vmatmul.bf16.gmra.mxu0 %v990
        %v1099 = vpop.f32.mrf.mxu0
        %v1100 = vadd.f32 %v933, %v1099
        %v1101 = vpop.f32.mrf.mxu0
        %v1102 = vadd.f32 %v935, %v1101
        %1103 = vmatmul.bf16.gmra.mxu0 %v991
        %v1104 = vpop.f32.mrf.mxu0
        %v1105 = vadd.f32 %v938, %v1104
        %v1106 = vpop.f32.mrf.mxu0
        %v1107 = vadd.f32 %v940, %v1106
        %1108 = vdwg.mxu0
        %vm1119 = vcmask 1042432
        %vm1120 = vcmask 1046532
        %vm1121 = vmor %vm1119, %vm1120
        %v1122 = vrot.slane %v483, 5
        %v1123 = vrot.slane %v1122, 4
        %v1124 = vrot.slane %v484, 5
        %v1125 = vsel %vm1121, %v1123, %v1124
        %v1126 = vrot.slane %v1124, 4
        %v1127 = vrot.slane %v485, 5
        %v1128 = vsel %vm1121, %v1126, %v1127
        %v1129 = vrot.slane %v486, 5
        %v1130 = vrot.slane %v1129, 4
        %v1131 = vrot.slane %v487, 5
        %v1132 = vsel %vm1121, %v1130, %v1131
        %v1133 = vrot.slane %v1131, 4
        %v1134 = vrot.slane %v488, 5
        %v1135 = vsel %vm1121, %v1133, %v1134
        %v1136 = vrot.slane %v489, 5
        %v1137 = vrot.slane %v1136, 4
        %v1138 = vrot.slane %v490, 5
        %v1139 = vsel %vm1121, %v1137, %v1138
        %v1140 = vrot.slane %v1138, 4
        %v1141 = vrot.slane %v491, 5
        %v1142 = vsel %vm1121, %v1140, %v1141
        %v1143 = vrot.slane %v492, 5
        %v1144 = vrot.slane %v1143, 4
        %v1145 = vrot.slane %v493, 5
        %v1146 = vsel %vm1121, %v1144, %v1145
        %v1147 = vrot.slane %v1145, 4
        %v1148 = vrot.slane %v494, 5
        %v1149 = vsel %vm1121, %v1147, %v1148
        %v1150 = vrot.slane %v495, 5
        %v1151 = vrot.slane %v1150, 4
        %v1152 = vrot.slane %v496, 5
        %v1153 = vsel %vm1121, %v1151, %v1152
        %v1154 = vrot.slane %v1152, 4
        %v1155 = vrot.slane %v497, 5
        %v1156 = vsel %vm1121, %v1154, %v1155
        %v1157 = vrot.slane %v498, 5
        %v1158 = vrot.slane %v1157, 4
        %v1159 = vrot.slane %v499, 5
        %v1160 = vsel %vm1121, %v1158, %v1159
        %v1161 = vrot.slane %v1159, 4
        %v1162 = vrot.slane %v500, 5
        %v1163 = vsel %vm1121, %v1161, %v1162
        %v1164 = vrot.slane %v501, 5
        %v1165 = vrot.slane %v1164, 4
        %v1166 = vrot.slane %v502, 5
        %v1167 = vsel %vm1121, %v1165, %v1166
        %v1168 = vrot.slane %v1166, 4
        %v1169 = vrot.slane %v503, 5
        %v1170 = vsel %vm1121, %v1168, %v1169
        %v1171 = vrot.slane %v504, 5
        %v1172 = vrot.slane %v1171, 4
        %v1173 = vrot.slane %v505, 5
        %v1174 = vsel %vm1121, %v1172, %v1173
        %v1175 = vrot.slane %v1173, 4
        %v1176 = vrot.slane %v506, 5
        %v1177 = vsel %vm1121, %v1175, %v1176
        %v1178 = vrot.slane %v507, 5
        %v1179 = vrot.slane %v1178, 4
        %v1180 = vrot.slane %v508, 5
        %v1181 = vsel %vm1121, %v1179, %v1180
        %v1182 = vrot.slane %v1180, 4
        %v1183 = vrot.slane %v509, 5
        %v1184 = vsel %vm1121, %v1182, %v1183
        %v1185 = vrot.slane %v510, 5
        %v1186 = vrot.slane %v1185, 4
        %v1187 = vrot.slane %v511, 5
        %v1188 = vsel %vm1121, %v1186, %v1187
        %v1189 = vrot.slane %v1187, 4
        %v1190 = vrot.slane %v512, 5
        %v1191 = vsel %vm1121, %v1189, %v1190
        %v1192 = vld [vmem:[%s3 + $0x80] sm:$0xf]
        %v1193 = vld [vmem:[%s3 + $0x84] sm:$0xf]
        %v1194 = vld [vmem:[%s3 + $0x88] sm:$0xf]
        %v1195 = vld [vmem:[%s3 + $0x8c] sm:$0xf]
        %v1196 = vld [vmem:[%s3 + $0x90] sm:$0xf]
        %v1197 = vld [vmem:[%s3 + $0x94] sm:$0xf]
        %v1198 = vld [vmem:[%s3 + $0x98] sm:$0xf]
        %v1199 = vld [vmem:[%s3 + $0x9c] sm:$0xf]
        %v1200 = vld [vmem:[%s3 + $0xa0] sm:$0xf]
        %v1201 = vld [vmem:[%s3 + $0xa4] sm:$0xf]
        %v1202 = vld [vmem:[%s3 + $0xa8] sm:$0xf]
        %v1203 = vld [vmem:[%s3 + $0xac] sm:$0xf]
        %v1204 = vld [vmem:[%s3 + $0xb0] sm:$0xf]
        %v1205 = vld [vmem:[%s3 + $0xb4] sm:$0xf]
        %v1206 = vld [vmem:[%s3 + $0xb8] sm:$0xf]
        %v1207 = vld [vmem:[%s3 + $0xbc] sm:$0xf]
        %v1208 = vunpack.c.l.b16 %v1125
        %v1209 = vunpack.c.l.b16 %v1128
        %v1210 = vunpack.c.l.b16 %v1132
        %v1211 = vunpack.c.l.b16 %v1135
        %v1212 = vunpack.c.l.b16 %v1139
        %v1213 = vunpack.c.l.b16 %v1142
        %v1214 = vunpack.c.l.b16 %v1146
        %v1215 = vunpack.c.l.b16 %v1149
        %v1216 = vunpack.c.l.b16 %v1153
        %v1217 = vunpack.c.l.b16 %v1156
        %v1218 = vunpack.c.l.b16 %v1160
        %v1219 = vunpack.c.l.b16 %v1163
        %v1220 = vunpack.c.l.b16 %v1167
        %v1221 = vunpack.c.l.b16 %v1170
        %v1222 = vunpack.c.l.b16 %v1174
        %v1223 = vunpack.c.l.b16 %v1177
        %v1224 = vunpack.c.l.b16 %v1181
        %v1225 = vunpack.c.l.b16 %v1184
        %v1226 = vunpack.c.l.b16 %v1188
        %v1227 = vunpack.c.l.b16 %v1191
        %v1228 = vpack.c.b16 %v1209, %v1208
        %v1229 = vpack.c.b16 %v1211, %v1210
        %v1230 = vpack.c.b16 %v1213, %v1212
        %v1231 = vpack.c.b16 %v1215, %v1214
        %v1232 = vpack.c.b16 %v1217, %v1216
        %v1233 = vpack.c.b16 %v1219, %v1218
        %v1234 = vpack.c.b16 %v1221, %v1220
        %v1235 = vpack.c.b16 %v1223, %v1222
        %v1236 = vpack.c.b16 %v1225, %v1224
        %v1237 = vpack.c.b16 %v1227, %v1226
        %v1264 = vunpack.c.l.b16 %v1192
        %v1265 = vunpack.c.l.b16 %v1193
        %v1266 = vunpack.c.l.b16 %v1194
        %v1267 = vunpack.c.l.b16 %v1195
        %v1268 = vunpack.c.l.b16 %v1196
        %v1269 = vunpack.c.l.b16 %v1197
        %v1270 = vunpack.c.l.b16 %v1198
        %v1271 = vunpack.c.l.b16 %v1199
        %v1272 = vunpack.c.l.b16 %v1200
        %v1273 = vunpack.c.l.b16 %v1201
        %v1274 = vunpack.c.l.b16 %v1202
        %v1275 = vunpack.c.l.b16 %v1203
        %v1276 = vunpack.c.l.b16 %v1204
        %v1277 = vunpack.c.l.b16 %v1205
        %v1278 = vunpack.c.l.b16 %v1206
        %v1279 = vunpack.c.l.b16 %v1207
        %v1280 = vpack.c.b16 %v1265, %v1264
        %v1281 = vpack.c.b16 %v1267, %v1266
        %v1282 = vpack.c.b16 %v1269, %v1268
        %v1283 = vpack.c.b16 %v1271, %v1270
        %v1284 = vpack.c.b16 %v1273, %v1272
        %v1285 = vpack.c.b16 %v1275, %v1274
        %v1286 = vpack.c.b16 %v1277, %v1276
        %v1287 = vpack.c.b16 %v1279, %v1278
        %1296 = vmatpush.bf16.msra.mxu0 %v1287
        %1297 = vmatpush.bf16.msra.mxu0 %v1286
        %1298 = vmatpush.bf16.msra.mxu0 %v1285
        %1299 = vmatpush.bf16.msra.mxu0 %v1284
        %1300 = vmatpush.bf16.msra.mxu0 %v1283
        %1301 = vmatpush.bf16.msra.mxu0 %v1282
        %1302 = vmatpush.bf16.msra.mxu0 %v1281
        %1303 = vmatpush.bf16.msra.mxu0 %v1280
        %1304 = vmatmul.bf16.gmra.mxu0 %v1228
        %v1305 = vpop.f32.mrf.mxu0
        %v1306 = vadd.f32 0.0, %v1305
        %v1307 = vpop.f32.mrf.mxu0
        %v1308 = vadd.f32 0.0, %v1307
        %1309 = vmatmul.bf16.gmra.mxu0 %v1229
        %v1310 = vpop.f32.mrf.mxu0
        %v1311 = vadd.f32 0.0, %v1310
        %v1312 = vpop.f32.mrf.mxu0
        %v1313 = vadd.f32 0.0, %v1312
        %1314 = vmatmul.bf16.gmra.mxu0 %v1230
        %v1315 = vpop.f32.mrf.mxu0
        %v1316 = vadd.f32 0.0, %v1315
        %v1317 = vpop.f32.mrf.mxu0
        %v1318 = vadd.f32 0.0, %v1317
        %1319 = vmatmul.bf16.gmra.mxu0 %v1231
        %v1320 = vpop.f32.mrf.mxu0
        %v1321 = vadd.f32 0.0, %v1320
        %v1322 = vpop.f32.mrf.mxu0
        %v1323 = vadd.f32 0.0, %v1322
        %1324 = vmatmul.bf16.gmra.mxu0 %v1232
        %v1325 = vpop.f32.mrf.mxu0
        %v1326 = vadd.f32 0.0, %v1325
        %v1327 = vpop.f32.mrf.mxu0
        %v1328 = vadd.f32 0.0, %v1327
        %1329 = vmatmul.bf16.gmra.mxu0 %v1233
        %v1330 = vpop.f32.mrf.mxu0
        %v1331 = vadd.f32 0.0, %v1330
        %v1332 = vpop.f32.mrf.mxu0
        %v1333 = vadd.f32 0.0, %v1332
        %1334 = vmatmul.bf16.gmra.mxu0 %v1234
        %v1335 = vpop.f32.mrf.mxu0
        %v1336 = vadd.f32 0.0, %v1335
        %v1337 = vpop.f32.mrf.mxu0
        %v1338 = vadd.f32 0.0, %v1337
        %1339 = vmatmul.bf16.gmra.mxu0 %v1235
        %v1340 = vpop.f32.mrf.mxu0
        %v1341 = vadd.f32 0.0, %v1340
        %v1342 = vpop.f32.mrf.mxu0
        %v1343 = vadd.f32 0.0, %v1342
        %1344 = vmatmul.bf16.gmra.mxu0 %v1236
        %v1345 = vpop.f32.mrf.mxu0
        %v1346 = vadd.f32 0.0, %v1345
        %v1347 = vpop.f32.mrf.mxu0
        %v1348 = vadd.f32 0.0, %v1347
        %1349 = vmatmul.bf16.gmra.mxu0 %v1237
        %v1350 = vpop.f32.mrf.mxu0
        %v1351 = vadd.f32 0.0, %v1350
        %v1352 = vpop.f32.mrf.mxu0
        %v1353 = vadd.f32 0.0, %v1352
        %1354 = vdwg.mxu0
        %v1355 = vadd.f32 %v1060, %v1306
        %v1356 = vadd.f32 %v1062, %v1308
        %v1357 = vadd.f32 %v1065, %v1311
        %v1358 = vadd.f32 %v1067, %v1313
        %v1359 = vadd.f32 %v1070, %v1316
        %v1360 = vadd.f32 %v1072, %v1318
        %v1361 = vadd.f32 %v1075, %v1321
        %v1362 = vadd.f32 %v1077, %v1323
        %v1363 = vadd.f32 %v1080, %v1326
        %v1364 = vadd.f32 %v1082, %v1328
        %v1365 = vadd.f32 %v1085, %v1331
        %v1366 = vadd.f32 %v1087, %v1333
        %v1367 = vadd.f32 %v1090, %v1336
        %v1368 = vadd.f32 %v1092, %v1338
        %v1369 = vadd.f32 %v1095, %v1341
        %v1370 = vadd.f32 %v1097, %v1343
        %v1371 = vadd.f32 %v1100, %v1346
        %v1372 = vadd.f32 %v1102, %v1348
        %v1373 = vadd.f32 %v1105, %v1351
        %v1374 = vadd.f32 %v1107, %v1353
        %v1375 = vld [vmem:[%s3 + $0xc0] sm:$0xf]
        %v1376 = vld [vmem:[%s3 + $0xc4] sm:$0xf]
        %v1377 = vld [vmem:[%s3 + $0xc8] sm:$0xf]
        %v1378 = vld [vmem:[%s3 + $0xcc] sm:$0xf]
        %v1379 = vld [vmem:[%s3 + $0xd0] sm:$0xf]
        %v1380 = vld [vmem:[%s3 + $0xd4] sm:$0xf]
        %v1381 = vld [vmem:[%s3 + $0xd8] sm:$0xf]
        %v1382 = vld [vmem:[%s3 + $0xdc] sm:$0xf]
        %v1383 = vld [vmem:[%s3 + $0xe0] sm:$0xf]
        %v1384 = vld [vmem:[%s3 + $0xe4] sm:$0xf]
        %v1385 = vld [vmem:[%s3 + $0xe8] sm:$0xf]
        %v1386 = vld [vmem:[%s3 + $0xec] sm:$0xf]
        %v1387 = vld [vmem:[%s3 + $0xf0] sm:$0xf]
        %v1388 = vld [vmem:[%s3 + $0xf4] sm:$0xf]
        %v1389 = vld [vmem:[%s3 + $0xf8] sm:$0xf]
        %v1390 = vld [vmem:[%s3 + $0xfc] sm:$0xf]
        %v1393 = vunpack.c.l.b16 %v513
        %v1394 = vunpack.c.l.b16 %v514
        %v1395 = vpack.c.b16 %v1394, %v1393
        %v1413 = vunpack.c.l.b16 %v1375
        %v1414 = vunpack.c.l.b16 %v1376
        %v1415 = vunpack.c.l.b16 %v1377
        %v1416 = vunpack.c.l.b16 %v1378
        %v1417 = vunpack.c.l.b16 %v1379
        %v1418 = vunpack.c.l.b16 %v1380
        %v1419 = vunpack.c.l.b16 %v1381
        %v1420 = vunpack.c.l.b16 %v1382
        %v1421 = vunpack.c.l.b16 %v1383
        %v1422 = vunpack.c.l.b16 %v1384
        %v1423 = vunpack.c.l.b16 %v1385
        %v1424 = vunpack.c.l.b16 %v1386
        %v1425 = vunpack.c.l.b16 %v1387
        %v1426 = vunpack.c.l.b16 %v1388
        %v1427 = vunpack.c.l.b16 %v1389
        %v1428 = vunpack.c.l.b16 %v1390
        %v1429 = vpack.c.b16 %v1414, %v1413
        %v1430 = vpack.c.b16 %v1416, %v1415
        %v1431 = vpack.c.b16 %v1418, %v1417
        %v1432 = vpack.c.b16 %v1420, %v1419
        %v1433 = vpack.c.b16 %v1422, %v1421
        %v1434 = vpack.c.b16 %v1424, %v1423
        %v1435 = vpack.c.b16 %v1426, %v1425
        %v1436 = vpack.c.b16 %v1428, %v1427
        %1445 = vmatpush.bf16.msra.mxu0 %v1436
        %1446 = vmatpush.bf16.msra.mxu0 %v1435
        %1447 = vmatpush.bf16.msra.mxu0 %v1434
        %1448 = vmatpush.bf16.msra.mxu0 %v1433
        %1449 = vmatpush.bf16.msra.mxu0 %v1432
        %1450 = vmatpush.bf16.msra.mxu0 %v1431
        %1451 = vmatpush.bf16.msra.mxu0 %v1430
        %1452 = vmatpush.bf16.msra.mxu0 %v1429
        %1453 = vmatmul.bf16.gmra.mxu0 %v983
        %v1454 = vpop.f32.mrf.mxu0
        %v1455 = vadd.f32 0.0, %v1454
        %v1456 = vpop.f32.mrf.mxu0
        %v1457 = vadd.f32 0.0, %v1456
        %1458 = vmatmul.bf16.gmra.mxu0 %v984
        %v1459 = vpop.f32.mrf.mxu0
        %v1460 = vadd.f32 0.0, %v1459
        %v1461 = vpop.f32.mrf.mxu0
        %v1462 = vadd.f32 0.0, %v1461
        %1463 = vmatmul.bf16.gmra.mxu0 %v985
        %v1464 = vpop.f32.mrf.mxu0
        %v1465 = vadd.f32 0.0, %v1464
        %v1466 = vpop.f32.mrf.mxu0
        %v1467 = vadd.f32 0.0, %v1466
        %1468 = vmatmul.bf16.gmra.mxu0 %v986
        %v1469 = vpop.f32.mrf.mxu0
        %v1470 = vadd.f32 0.0, %v1469
        %v1471 = vpop.f32.mrf.mxu0
        %v1472 = vadd.f32 0.0, %v1471
        %1473 = vmatmul.bf16.gmra.mxu0 %v987
        %v1474 = vpop.f32.mrf.mxu0
        %v1475 = vadd.f32 0.0, %v1474
        %v1476 = vpop.f32.mrf.mxu0
        %v1477 = vadd.f32 0.0, %v1476
        %1478 = vmatmul.bf16.gmra.mxu0 %v988
        %v1479 = vpop.f32.mrf.mxu0
        %v1480 = vadd.f32 0.0, %v1479
        %v1481 = vpop.f32.mrf.mxu0
        %v1482 = vadd.f32 0.0, %v1481
        %1483 = vmatmul.bf16.gmra.mxu0 %v989
        %v1484 = vpop.f32.mrf.mxu0
        %v1485 = vadd.f32 0.0, %v1484
        %v1486 = vpop.f32.mrf.mxu0
        %v1487 = vadd.f32 0.0, %v1486
        %1488 = vmatmul.bf16.gmra.mxu0 %v990
        %v1489 = vpop.f32.mrf.mxu0
        %v1490 = vadd.f32 0.0, %v1489
        %v1491 = vpop.f32.mrf.mxu0
        %v1492 = vadd.f32 0.0, %v1491
        %1493 = vmatmul.bf16.gmra.mxu0 %v991
        %v1494 = vpop.f32.mrf.mxu0
        %v1495 = vadd.f32 0.0, %v1494
        %v1496 = vpop.f32.mrf.mxu0
        %v1497 = vadd.f32 0.0, %v1496
        %1498 = vmatmul.bf16.gmra.mxu0 %v1395
        %v1499 = vpop.f32.mrf.mxu0
        %v1500 = vadd.f32 0.0, %v1499
        %v1501 = vpop.f32.mrf.mxu0
        %v1502 = vadd.f32 0.0, %v1501
        %1503 = vdwg.mxu0
        %v1504 = vadd.f32 %v1355, %v1455
        %v1505 = vadd.f32 %v1356, %v1457
        %v1506 = vadd.f32 %v1357, %v1460
        %v1507 = vadd.f32 %v1358, %v1462
        %v1508 = vadd.f32 %v1359, %v1465
        %v1509 = vadd.f32 %v1360, %v1467
        %v1510 = vadd.f32 %v1361, %v1470
        %v1511 = vadd.f32 %v1362, %v1472
        %v1512 = vadd.f32 %v1363, %v1475
        %v1513 = vadd.f32 %v1364, %v1477
        %v1514 = vadd.f32 %v1365, %v1480
        %v1515 = vadd.f32 %v1366, %v1482
        %v1516 = vadd.f32 %v1367, %v1485
        %v1517 = vadd.f32 %v1368, %v1487
        %v1518 = vadd.f32 %v1369, %v1490
        %v1519 = vadd.f32 %v1370, %v1492
        %v1520 = vadd.f32 %v1371, %v1495
        %v1521 = vadd.f32 %v1372, %v1497
        %v1522 = vadd.f32 %v1373, %v1500
        %v1523 = vadd.f32 %v1374, %v1502
        %v1525 = vshrl.u32 %v513, 16
        %v1527 = vrot.slane %v1525, 4
        %v1528 = vshll.u32 %v513, 16
        %v1530 = vrot.slane %v1528, 5
        %v1531 = vor.u32 %v1527, %v1530
        %v1532 = vrot.slane %v1531, 4
        %v1534 = vshll.u32 %v514, 16
        %v1536 = vrot.slane %v1534, 5
        %v1537 = vsel %vm538, %v1532, %v1536
        %v1538 = vshrl.u32 %v514, 16
        %v1540 = vrot.slane %v1538, 4
        %v1541 = vor.u32 %v1540, %v1536
        %v1542 = vrot.slane %v1541, 4
        %v1544 = vshll.u32 %v515, 16
        %v1546 = vrot.slane %v1544, 5
        %v1547 = vsel %vm538, %v1542, %v1546
        %v1548 = vld [vmem:[%s3 + $0x100] sm:$0xf]
        %v1549 = vld [vmem:[%s3 + $0x104] sm:$0xf]
        %v1550 = vld [vmem:[%s3 + $0x108] sm:$0xf]
        %v1551 = vld [vmem:[%s3 + $0x10c] sm:$0xf]
        %v1552 = vld [vmem:[%s3 + $0x110] sm:$0xf]
        %v1553 = vld [vmem:[%s3 + $0x114] sm:$0xf]
        %v1554 = vld [vmem:[%s3 + $0x118] sm:$0xf]
        %v1555 = vld [vmem:[%s3 + $0x11c] sm:$0xf]
        %v1556 = vld [vmem:[%s3 + $0x120] sm:$0xf]
        %v1557 = vld [vmem:[%s3 + $0x124] sm:$0xf]
        %v1558 = vld [vmem:[%s3 + $0x128] sm:$0xf]
        %v1559 = vld [vmem:[%s3 + $0x12c] sm:$0xf]
        %v1560 = vld [vmem:[%s3 + $0x130] sm:$0xf]
        %v1561 = vld [vmem:[%s3 + $0x134] sm:$0xf]
        %v1562 = vld [vmem:[%s3 + $0x138] sm:$0xf]
        %v1563 = vld [vmem:[%s3 + $0x13c] sm:$0xf]
        %v1564 = vunpack.c.l.b16 %v1537
        %v1565 = vunpack.c.l.b16 %v1547
        %v1566 = vpack.c.b16 %v1565, %v1564
        %v1584 = vunpack.c.l.b16 %v1548
        %v1585 = vunpack.c.l.b16 %v1549
        %v1586 = vunpack.c.l.b16 %v1550
        %v1587 = vunpack.c.l.b16 %v1551
        %v1588 = vunpack.c.l.b16 %v1552
        %v1589 = vunpack.c.l.b16 %v1553
        %v1590 = vunpack.c.l.b16 %v1554
        %v1591 = vunpack.c.l.b16 %v1555
        %v1592 = vunpack.c.l.b16 %v1556
        %v1593 = vunpack.c.l.b16 %v1557
        %v1594 = vunpack.c.l.b16 %v1558
        %v1595 = vunpack.c.l.b16 %v1559
        %v1596 = vunpack.c.l.b16 %v1560
        %v1597 = vunpack.c.l.b16 %v1561
        %v1598 = vunpack.c.l.b16 %v1562
        %v1599 = vunpack.c.l.b16 %v1563
        %v1600 = vpack.c.b16 %v1585, %v1584
        %v1601 = vpack.c.b16 %v1587, %v1586
        %v1602 = vpack.c.b16 %v1589, %v1588
        %v1603 = vpack.c.b16 %v1591, %v1590
        %v1604 = vpack.c.b16 %v1593, %v1592
        %v1605 = vpack.c.b16 %v1595, %v1594
        %v1606 = vpack.c.b16 %v1597, %v1596
        %v1607 = vpack.c.b16 %v1599, %v1598
        %1616 = vmatpush.bf16.msra.mxu0 %v1607
        %1617 = vmatpush.bf16.msra.mxu0 %v1606
        %1618 = vmatpush.bf16.msra.mxu0 %v1605
        %1619 = vmatpush.bf16.msra.mxu0 %v1604
        %1620 = vmatpush.bf16.msra.mxu0 %v1603
        %1621 = vmatpush.bf16.msra.mxu0 %v1602
        %1622 = vmatpush.bf16.msra.mxu0 %v1601
        %1623 = vmatpush.bf16.msra.mxu0 %v1600
        %1624 = vmatmul.bf16.gmra.mxu0 %v816
        %v1625 = vpop.f32.mrf.mxu0
        %v1626 = vadd.f32 0.0, %v1625
        %v1627 = vpop.f32.mrf.mxu0
        %v1628 = vadd.f32 0.0, %v1627
        %1629 = vmatmul.bf16.gmra.mxu0 %v817
        %v1630 = vpop.f32.mrf.mxu0
        %v1631 = vadd.f32 0.0, %v1630
        %v1632 = vpop.f32.mrf.mxu0
        %v1633 = vadd.f32 0.0, %v1632
        %1634 = vmatmul.bf16.gmra.mxu0 %v818
        %v1635 = vpop.f32.mrf.mxu0
        %v1636 = vadd.f32 0.0, %v1635
        %v1637 = vpop.f32.mrf.mxu0
        %v1638 = vadd.f32 0.0, %v1637
        %1639 = vmatmul.bf16.gmra.mxu0 %v819
        %v1640 = vpop.f32.mrf.mxu0
        %v1641 = vadd.f32 0.0, %v1640
        %v1642 = vpop.f32.mrf.mxu0
        %v1643 = vadd.f32 0.0, %v1642
        %1644 = vmatmul.bf16.gmra.mxu0 %v820
        %v1645 = vpop.f32.mrf.mxu0
        %v1646 = vadd.f32 0.0, %v1645
        %v1647 = vpop.f32.mrf.mxu0
        %v1648 = vadd.f32 0.0, %v1647
        %1649 = vmatmul.bf16.gmra.mxu0 %v821
        %v1650 = vpop.f32.mrf.mxu0
        %v1651 = vadd.f32 0.0, %v1650
        %v1652 = vpop.f32.mrf.mxu0
        %v1653 = vadd.f32 0.0, %v1652
        %1654 = vmatmul.bf16.gmra.mxu0 %v822
        %v1655 = vpop.f32.mrf.mxu0
        %v1656 = vadd.f32 0.0, %v1655
        %v1657 = vpop.f32.mrf.mxu0
        %v1658 = vadd.f32 0.0, %v1657
        %1659 = vmatmul.bf16.gmra.mxu0 %v823
        %v1660 = vpop.f32.mrf.mxu0
        %v1661 = vadd.f32 0.0, %v1660
        %v1662 = vpop.f32.mrf.mxu0
        %v1663 = vadd.f32 0.0, %v1662
        %1664 = vmatmul.bf16.gmra.mxu0 %v824
        %v1665 = vpop.f32.mrf.mxu0
        %v1666 = vadd.f32 0.0, %v1665
        %v1667 = vpop.f32.mrf.mxu0
        %v1668 = vadd.f32 0.0, %v1667
        %1669 = vmatmul.bf16.gmra.mxu0 %v1566
        %v1670 = vpop.f32.mrf.mxu0
        %v1671 = vadd.f32 0.0, %v1670
        %v1672 = vpop.f32.mrf.mxu0
        %v1673 = vadd.f32 0.0, %v1672
        %1674 = vdwg.mxu0
        %v1675 = vadd.f32 %v1504, %v1626
        %v1676 = vadd.f32 %v1505, %v1628
        %v1677 = vadd.f32 %v1506, %v1631
        %v1678 = vadd.f32 %v1507, %v1633
        %v1679 = vadd.f32 %v1508, %v1636
        %v1680 = vadd.f32 %v1509, %v1638
        %v1681 = vadd.f32 %v1510, %v1641
        %v1682 = vadd.f32 %v1511, %v1643
        %v1683 = vadd.f32 %v1512, %v1646
        %v1684 = vadd.f32 %v1513, %v1648
        %v1685 = vadd.f32 %v1514, %v1651
        %v1686 = vadd.f32 %v1515, %v1653
        %v1687 = vadd.f32 %v1516, %v1656
        %v1688 = vadd.f32 %v1517, %v1658
        %v1689 = vadd.f32 %v1518, %v1661
        %v1690 = vadd.f32 %v1519, %v1663
        %v1691 = vadd.f32 %v1520, %v1666
        %v1692 = vadd.f32 %v1521, %v1668
        %v1693 = vadd.f32 %v1522, %v1671
        %v1694 = vadd.f32 %v1523, %v1673
        %v1696 = vrot.slane %v513, 5
        %v1697 = vrot.slane %v1696, 4
        %v1698 = vrot.slane %v514, 5
        %v1699 = vsel %vm1121, %v1697, %v1698
        %v1700 = vrot.slane %v1698, 4
        %v1701 = vrot.slane %v515, 5
        %v1702 = vsel %vm1121, %v1700, %v1701
        %v1703 = vld [vmem:[%s3 + $0x140] sm:$0xf]
        %v1704 = vld [vmem:[%s3 + $0x144] sm:$0xf]
        %v1705 = vld [vmem:[%s3 + $0x148] sm:$0xf]
        %v1706 = vld [vmem:[%s3 + $0x14c] sm:$0xf]
        %v1707 = vld [vmem:[%s3 + $0x150] sm:$0xf]
        %v1708 = vld [vmem:[%s3 + $0x154] sm:$0xf]
        %v1709 = vld [vmem:[%s3 + $0x158] sm:$0xf]
        %v1710 = vld [vmem:[%s3 + $0x15c] sm:$0xf]
        %v1711 = vld [vmem:[%s3 + $0x160] sm:$0xf]
        %v1712 = vld [vmem:[%s3 + $0x164] sm:$0xf]
        %v1713 = vld [vmem:[%s3 + $0x168] sm:$0xf]
        %v1714 = vld [vmem:[%s3 + $0x16c] sm:$0xf]
        %v1715 = vld [vmem:[%s3 + $0x170] sm:$0xf]
        %v1716 = vld [vmem:[%s3 + $0x174] sm:$0xf]
        %v1717 = vld [vmem:[%s3 + $0x178] sm:$0xf]
        %v1718 = vld [vmem:[%s3 + $0x17c] sm:$0xf]
        %v1719 = vunpack.c.l.b16 %v1699
        %v1720 = vunpack.c.l.b16 %v1702
        %v1721 = vpack.c.b16 %v1720, %v1719
        %v1739 = vunpack.c.l.b16 %v1703
        %v1740 = vunpack.c.l.b16 %v1704
        %v1741 = vunpack.c.l.b16 %v1705
        %v1742 = vunpack.c.l.b16 %v1706
        %v1743 = vunpack.c.l.b16 %v1707
        %v1744 = vunpack.c.l.b16 %v1708
        %v1745 = vunpack.c.l.b16 %v1709
        %v1746 = vunpack.c.l.b16 %v1710
        %v1747 = vunpack.c.l.b16 %v1711
        %v1748 = vunpack.c.l.b16 %v1712
        %v1749 = vunpack.c.l.b16 %v1713
        %v1750 = vunpack.c.l.b16 %v1714
        %v1751 = vunpack.c.l.b16 %v1715
        %v1752 = vunpack.c.l.b16 %v1716
        %v1753 = vunpack.c.l.b16 %v1717
        %v1754 = vunpack.c.l.b16 %v1718
        %v1755 = vpack.c.b16 %v1740, %v1739
        %v1756 = vpack.c.b16 %v1742, %v1741
        %v1757 = vpack.c.b16 %v1744, %v1743
        %v1758 = vpack.c.b16 %v1746, %v1745
        %v1759 = vpack.c.b16 %v1748, %v1747
        %v1760 = vpack.c.b16 %v1750, %v1749
        %v1761 = vpack.c.b16 %v1752, %v1751
        %v1762 = vpack.c.b16 %v1754, %v1753
        %1771 = vmatpush.bf16.msra.mxu0 %v1762
        %1772 = vmatpush.bf16.msra.mxu0 %v1761
        %1773 = vmatpush.bf16.msra.mxu0 %v1760
        %1774 = vmatpush.bf16.msra.mxu0 %v1759
        %1775 = vmatpush.bf16.msra.mxu0 %v1758
        %1776 = vmatpush.bf16.msra.mxu0 %v1757
        %1777 = vmatpush.bf16.msra.mxu0 %v1756
        %1778 = vmatpush.bf16.msra.mxu0 %v1755
        %1779 = vmatmul.bf16.gmra.mxu0 %v1229
        %v1780 = vpop.f32.mrf.mxu0
        %v1781 = vadd.f32 0.0, %v1780
        %v1782 = vpop.f32.mrf.mxu0
        %v1783 = vadd.f32 0.0, %v1782
        %1784 = vmatmul.bf16.gmra.mxu0 %v1230
        %v1785 = vpop.f32.mrf.mxu0
        %v1786 = vadd.f32 0.0, %v1785
        %v1787 = vpop.f32.mrf.mxu0
        %v1788 = vadd.f32 0.0, %v1787
        %1789 = vmatmul.bf16.gmra.mxu0 %v1231
        %v1790 = vpop.f32.mrf.mxu0
        %v1791 = vadd.f32 0.0, %v1790
        %v1792 = vpop.f32.mrf.mxu0
        %v1793 = vadd.f32 0.0, %v1792
        %1794 = vmatmul.bf16.gmra.mxu0 %v1232
        %v1795 = vpop.f32.mrf.mxu0
        %v1796 = vadd.f32 0.0, %v1795
        %v1797 = vpop.f32.mrf.mxu0
        %v1798 = vadd.f32 0.0, %v1797
        %1799 = vmatmul.bf16.gmra.mxu0 %v1233
        %v1800 = vpop.f32.mrf.mxu0
        %v1801 = vadd.f32 0.0, %v1800
        %v1802 = vpop.f32.mrf.mxu0
        %v1803 = vadd.f32 0.0, %v1802
        %1804 = vmatmul.bf16.gmra.mxu0 %v1234
        %v1805 = vpop.f32.mrf.mxu0
        %v1806 = vadd.f32 0.0, %v1805
        %v1807 = vpop.f32.mrf.mxu0
        %v1808 = vadd.f32 0.0, %v1807
        %1809 = vmatmul.bf16.gmra.mxu0 %v1235
        %v1810 = vpop.f32.mrf.mxu0
        %v1811 = vadd.f32 0.0, %v1810
        %v1812 = vpop.f32.mrf.mxu0
        %v1813 = vadd.f32 0.0, %v1812
        %1814 = vmatmul.bf16.gmra.mxu0 %v1236
        %v1815 = vpop.f32.mrf.mxu0
        %v1816 = vadd.f32 0.0, %v1815
        %v1817 = vpop.f32.mrf.mxu0
        %v1818 = vadd.f32 0.0, %v1817
        %1819 = vmatmul.bf16.gmra.mxu0 %v1237
        %v1820 = vpop.f32.mrf.mxu0
        %v1821 = vadd.f32 0.0, %v1820
        %v1822 = vpop.f32.mrf.mxu0
        %v1823 = vadd.f32 0.0, %v1822
        %1824 = vmatmul.bf16.gmra.mxu0 %v1721
        %v1825 = vpop.f32.mrf.mxu0
        %v1826 = vadd.f32 0.0, %v1825
        %v1827 = vpop.f32.mrf.mxu0
        %v1828 = vadd.f32 0.0, %v1827
        %1829 = vdwg.mxu0
        %v1830 = vadd.f32 %v1675, %v1781
        %v1831 = vadd.f32 %v1676, %v1783
        %v1832 = vadd.f32 %v1677, %v1786
        %v1833 = vadd.f32 %v1678, %v1788
        %v1834 = vadd.f32 %v1679, %v1791
        %v1835 = vadd.f32 %v1680, %v1793
        %v1836 = vadd.f32 %v1681, %v1796
        %v1837 = vadd.f32 %v1682, %v1798
        %v1838 = vadd.f32 %v1683, %v1801
        %v1839 = vadd.f32 %v1684, %v1803
        %v1840 = vadd.f32 %v1685, %v1806
        %v1841 = vadd.f32 %v1686, %v1808
        %v1842 = vadd.f32 %v1687, %v1811
        %v1843 = vadd.f32 %v1688, %v1813
        %v1844 = vadd.f32 %v1689, %v1816
        %v1845 = vadd.f32 %v1690, %v1818
        %v1846 = vadd.f32 %v1691, %v1821
        %v1847 = vadd.f32 %v1692, %v1823
        %v1848 = vadd.f32 %v1693, %v1826
        %v1849 = vadd.f32 %v1694, %v1828
        %v1850 = vld [vmem:[%s3 + $0x180] sm:$0xf]
        %v1851 = vld [vmem:[%s3 + $0x184] sm:$0xf]
        %v1852 = vld [vmem:[%s3 + $0x188] sm:$0xf]
        %v1853 = vld [vmem:[%s3 + $0x18c] sm:$0xf]
        %v1854 = vld [vmem:[%s3 + $0x190] sm:$0xf]
        %v1855 = vld [vmem:[%s3 + $0x194] sm:$0xf]
        %v1856 = vld [vmem:[%s3 + $0x198] sm:$0xf]
        %v1857 = vld [vmem:[%s3 + $0x19c] sm:$0xf]
        %v1858 = vld [vmem:[%s3 + $0x1a0] sm:$0xf]
        %v1859 = vld [vmem:[%s3 + $0x1a4] sm:$0xf]
        %v1860 = vld [vmem:[%s3 + $0x1a8] sm:$0xf]
        %v1861 = vld [vmem:[%s3 + $0x1ac] sm:$0xf]
        %v1862 = vld [vmem:[%s3 + $0x1b0] sm:$0xf]
        %v1863 = vld [vmem:[%s3 + $0x1b4] sm:$0xf]
        %v1864 = vld [vmem:[%s3 + $0x1b8] sm:$0xf]
        %v1865 = vld [vmem:[%s3 + $0x1bc] sm:$0xf]
        %v1868 = vunpack.c.l.b16 %v516
        %v1869 = vunpack.c.l.b16 %v517
        %v1870 = vpack.c.b16 %v1869, %v1868
        %v1888 = vunpack.c.l.b16 %v1850
        %v1889 = vunpack.c.l.b16 %v1851
        %v1890 = vunpack.c.l.b16 %v1852
        %v1891 = vunpack.c.l.b16 %v1853
        %v1892 = vunpack.c.l.b16 %v1854
        %v1893 = vunpack.c.l.b16 %v1855
        %v1894 = vunpack.c.l.b16 %v1856
        %v1895 = vunpack.c.l.b16 %v1857
        %v1896 = vunpack.c.l.b16 %v1858
        %v1897 = vunpack.c.l.b16 %v1859
        %v1898 = vunpack.c.l.b16 %v1860
        %v1899 = vunpack.c.l.b16 %v1861
        %v1900 = vunpack.c.l.b16 %v1862
        %v1901 = vunpack.c.l.b16 %v1863
        %v1902 = vunpack.c.l.b16 %v1864
        %v1903 = vunpack.c.l.b16 %v1865
        %v1904 = vpack.c.b16 %v1889, %v1888
        %v1905 = vpack.c.b16 %v1891, %v1890
        %v1906 = vpack.c.b16 %v1893, %v1892
        %v1907 = vpack.c.b16 %v1895, %v1894
        %v1908 = vpack.c.b16 %v1897, %v1896
        %v1909 = vpack.c.b16 %v1899, %v1898
        %v1910 = vpack.c.b16 %v1901, %v1900
        %v1911 = vpack.c.b16 %v1903, %v1902
        %1920 = vmatpush.bf16.msra.mxu0 %v1911
        %1921 = vmatpush.bf16.msra.mxu0 %v1910
        %1922 = vmatpush.bf16.msra.mxu0 %v1909
        %1923 = vmatpush.bf16.msra.mxu0 %v1908
        %1924 = vmatpush.bf16.msra.mxu0 %v1907
        %1925 = vmatpush.bf16.msra.mxu0 %v1906
        %1926 = vmatpush.bf16.msra.mxu0 %v1905
        %1927 = vmatpush.bf16.msra.mxu0 %v1904
        %1928 = vmatmul.bf16.gmra.mxu0 %v984
        %v1929 = vpop.f32.mrf.mxu0
        %v1930 = vadd.f32 0.0, %v1929
        %v1931 = vpop.f32.mrf.mxu0
        %v1932 = vadd.f32 0.0, %v1931
        %1933 = vmatmul.bf16.gmra.mxu0 %v985
        %v1934 = vpop.f32.mrf.mxu0
        %v1935 = vadd.f32 0.0, %v1934
        %v1936 = vpop.f32.mrf.mxu0
        %v1937 = vadd.f32 0.0, %v1936
        %1938 = vmatmul.bf16.gmra.mxu0 %v986
        %v1939 = vpop.f32.mrf.mxu0
        %v1940 = vadd.f32 0.0, %v1939
        %v1941 = vpop.f32.mrf.mxu0
        %v1942 = vadd.f32 0.0, %v1941
        %1943 = vmatmul.bf16.gmra.mxu0 %v987
        %v1944 = vpop.f32.mrf.mxu0
        %v1945 = vadd.f32 0.0, %v1944
        %v1946 = vpop.f32.mrf.mxu0
        %v1947 = vadd.f32 0.0, %v1946
        %1948 = vmatmul.bf16.gmra.mxu0 %v988
        %v1949 = vpop.f32.mrf.mxu0
        %v1950 = vadd.f32 0.0, %v1949
        %v1951 = vpop.f32.mrf.mxu0
        %v1952 = vadd.f32 0.0, %v1951
        %1953 = vmatmul.bf16.gmra.mxu0 %v989
        %v1954 = vpop.f32.mrf.mxu0
        %v1955 = vadd.f32 0.0, %v1954
        %v1956 = vpop.f32.mrf.mxu0
        %v1957 = vadd.f32 0.0, %v1956
        %1958 = vmatmul.bf16.gmra.mxu0 %v990
        %v1959 = vpop.f32.mrf.mxu0
        %v1960 = vadd.f32 0.0, %v1959
        %v1961 = vpop.f32.mrf.mxu0
        %v1962 = vadd.f32 0.0, %v1961
        %1963 = vmatmul.bf16.gmra.mxu0 %v991
        %v1964 = vpop.f32.mrf.mxu0
        %v1965 = vadd.f32 0.0, %v1964
        %v1966 = vpop.f32.mrf.mxu0
        %v1967 = vadd.f32 0.0, %v1966
        %1968 = vmatmul.bf16.gmra.mxu0 %v1395
        %v1969 = vpop.f32.mrf.mxu0
        %v1970 = vadd.f32 0.0, %v1969
        %v1971 = vpop.f32.mrf.mxu0
        %v1972 = vadd.f32 0.0, %v1971
        %1973 = vmatmul.bf16.gmra.mxu0 %v1870
        %v1974 = vpop.f32.mrf.mxu0
        %v1975 = vadd.f32 0.0, %v1974
        %v1976 = vpop.f32.mrf.mxu0
        %v1977 = vadd.f32 0.0, %v1976
        %1978 = vdwg.mxu0
        %v1979 = vadd.f32 %v1830, %v1930
        %v1980 = vadd.f32 %v1831, %v1932
        %v1981 = vadd.f32 %v1832, %v1935
        %v1982 = vadd.f32 %v1833, %v1937
        %v1983 = vadd.f32 %v1834, %v1940
        %v1984 = vadd.f32 %v1835, %v1942
        %v1985 = vadd.f32 %v1836, %v1945
        %v1986 = vadd.f32 %v1837, %v1947
        %v1987 = vadd.f32 %v1838, %v1950
        %v1988 = vadd.f32 %v1839, %v1952
        %v1989 = vadd.f32 %v1840, %v1955
        %v1990 = vadd.f32 %v1841, %v1957
        %v1991 = vadd.f32 %v1842, %v1960
        %v1992 = vadd.f32 %v1843, %v1962
        %v1993 = vadd.f32 %v1844, %v1965
        %v1994 = vadd.f32 %v1845, %v1967
        %v1995 = vadd.f32 %v1846, %v1970
        %v1996 = vadd.f32 %v1847, %v1972
        %v1997 = vadd.f32 %v1848, %v1975
        %v1998 = vadd.f32 %v1849, %v1977
        %v2000 = vshrl.u32 %v516, 16
        %v2002 = vrot.slane %v2000, 4
        %v2003 = vshll.u32 %v516, 16
        %v2005 = vrot.slane %v2003, 5
        %v2006 = vor.u32 %v2002, %v2005
        %v2007 = vrot.slane %v2006, 4
        %v2009 = vshll.u32 %v517, 16
        %v2011 = vrot.slane %v2009, 5
        %v2012 = vsel %vm538, %v2007, %v2011
        %v2013 = vshrl.u32 %v517, 16
        %v2015 = vrot.slane %v2013, 4
        %v2016 = vor.u32 %v2015, %v2011
        %v2017 = vrot.slane %v2016, 4
        %v2019 = vshll.u32 %v518, 16
        %v2021 = vrot.slane %v2019, 5
        %v2022 = vsel %vm538, %v2017, %v2021
        %v2023 = vld [vmem:[%s3 + $0x1c0] sm:$0xf]
        %v2024 = vld [vmem:[%s3 + $0x1c4] sm:$0xf]
        %v2025 = vld [vmem:[%s3 + $0x1c8] sm:$0xf]
        %v2026 = vld [vmem:[%s3 + $0x1cc] sm:$0xf]
        %v2027 = vld [vmem:[%s3 + $0x1d0] sm:$0xf]
        %v2028 = vld [vmem:[%s3 + $0x1d4] sm:$0xf]
        %v2029 = vld [vmem:[%s3 + $0x1d8] sm:$0xf]
        %v2030 = vld [vmem:[%s3 + $0x1dc] sm:$0xf]
        %v2031 = vld [vmem:[%s3 + $0x1e0] sm:$0xf]
        %v2032 = vld [vmem:[%s3 + $0x1e4] sm:$0xf]
        %v2033 = vld [vmem:[%s3 + $0x1e8] sm:$0xf]
        %v2034 = vld [vmem:[%s3 + $0x1ec] sm:$0xf]
        %v2035 = vld [vmem:[%s3 + $0x1f0] sm:$0xf]
        %v2036 = vld [vmem:[%s3 + $0x1f4] sm:$0xf]
        %v2037 = vld [vmem:[%s3 + $0x1f8] sm:$0xf]
        %v2038 = vld [vmem:[%s3 + $0x1fc] sm:$0xf]
        %v2039 = vunpack.c.l.b16 %v2012
        %v2040 = vunpack.c.l.b16 %v2022
        %v2041 = vpack.c.b16 %v2040, %v2039
        %v2059 = vunpack.c.l.b16 %v2023
        %v2060 = vunpack.c.l.b16 %v2024
        %v2061 = vunpack.c.l.b16 %v2025
        %v2062 = vunpack.c.l.b16 %v2026
        %v2063 = vunpack.c.l.b16 %v2027
        %v2064 = vunpack.c.l.b16 %v2028
        %v2065 = vunpack.c.l.b16 %v2029
        %v2066 = vunpack.c.l.b16 %v2030
        %v2067 = vunpack.c.l.b16 %v2031
        %v2068 = vunpack.c.l.b16 %v2032
        %v2069 = vunpack.c.l.b16 %v2033
        %v2070 = vunpack.c.l.b16 %v2034
        %v2071 = vunpack.c.l.b16 %v2035
        %v2072 = vunpack.c.l.b16 %v2036
        %v2073 = vunpack.c.l.b16 %v2037
        %v2074 = vunpack.c.l.b16 %v2038
        %v2075 = vpack.c.b16 %v2060, %v2059
        %v2076 = vpack.c.b16 %v2062, %v2061
        %v2077 = vpack.c.b16 %v2064, %v2063
        %v2078 = vpack.c.b16 %v2066, %v2065
        %v2079 = vpack.c.b16 %v2068, %v2067
        %v2080 = vpack.c.b16 %v2070, %v2069
        %v2081 = vpack.c.b16 %v2072, %v2071
        %v2082 = vpack.c.b16 %v2074, %v2073
        %2091 = vmatpush.bf16.msra.mxu0 %v2082
        %2092 = vmatpush.bf16.msra.mxu0 %v2081
        %2093 = vmatpush.bf16.msra.mxu0 %v2080
        %2094 = vmatpush.bf16.msra.mxu0 %v2079
        %2095 = vmatpush.bf16.msra.mxu0 %v2078
        %2096 = vmatpush.bf16.msra.mxu0 %v2077
        %2097 = vmatpush.bf16.msra.mxu0 %v2076
        %2098 = vmatpush.bf16.msra.mxu0 %v2075
        %2099 = vmatmul.bf16.gmra.mxu0 %v817
        %v2100 = vpop.f32.mrf.mxu0
        %v2101 = vadd.f32 0.0, %v2100
        %v2102 = vpop.f32.mrf.mxu0
        %v2103 = vadd.f32 0.0, %v2102
        %2104 = vmatmul.bf16.gmra.mxu0 %v818
        %v2105 = vpop.f32.mrf.mxu0
        %v2106 = vadd.f32 0.0, %v2105
        %v2107 = vpop.f32.mrf.mxu0
        %v2108 = vadd.f32 0.0, %v2107
        %2109 = vmatmul.bf16.gmra.mxu0 %v819
        %v2110 = vpop.f32.mrf.mxu0
        %v2111 = vadd.f32 0.0, %v2110
        %v2112 = vpop.f32.mrf.mxu0
        %v2113 = vadd.f32 0.0, %v2112
        %2114 = vmatmul.bf16.gmra.mxu0 %v820
        %v2115 = vpop.f32.mrf.mxu0
        %v2116 = vadd.f32 0.0, %v2115
        %v2117 = vpop.f32.mrf.mxu0
        %v2118 = vadd.f32 0.0, %v2117
        %2119 = vmatmul.bf16.gmra.mxu0 %v821
        %v2120 = vpop.f32.mrf.mxu0
        %v2121 = vadd.f32 0.0, %v2120
        %v2122 = vpop.f32.mrf.mxu0
        %v2123 = vadd.f32 0.0, %v2122
        %2124 = vmatmul.bf16.gmra.mxu0 %v822
        %v2125 = vpop.f32.mrf.mxu0
        %v2126 = vadd.f32 0.0, %v2125
        %v2127 = vpop.f32.mrf.mxu0
        %v2128 = vadd.f32 0.0, %v2127
        %2129 = vmatmul.bf16.gmra.mxu0 %v823
        %v2130 = vpop.f32.mrf.mxu0
        %v2131 = vadd.f32 0.0, %v2130
        %v2132 = vpop.f32.mrf.mxu0
        %v2133 = vadd.f32 0.0, %v2132
        %2134 = vmatmul.bf16.gmra.mxu0 %v824
        %v2135 = vpop.f32.mrf.mxu0
        %v2136 = vadd.f32 0.0, %v2135
        %v2137 = vpop.f32.mrf.mxu0
        %v2138 = vadd.f32 0.0, %v2137
        %2139 = vmatmul.bf16.gmra.mxu0 %v1566
        %v2140 = vpop.f32.mrf.mxu0
        %v2141 = vadd.f32 0.0, %v2140
        %v2142 = vpop.f32.mrf.mxu0
        %v2143 = vadd.f32 0.0, %v2142
        %2144 = vmatmul.bf16.gmra.mxu0 %v2041
        %v2145 = vpop.f32.mrf.mxu0
        %v2146 = vadd.f32 0.0, %v2145
        %v2147 = vpop.f32.mrf.mxu0
        %v2148 = vadd.f32 0.0, %v2147
        %2149 = vdwg.mxu0
        %v2150 = vadd.f32 %v1979, %v2101
        %v2151 = vadd.f32 %v1980, %v2103
        %v2152 = vadd.f32 %v1981, %v2106
        %v2153 = vadd.f32 %v1982, %v2108
        %v2154 = vadd.f32 %v1983, %v2111
        %v2155 = vadd.f32 %v1984, %v2113
        %v2156 = vadd.f32 %v1985, %v2116
        %v2157 = vadd.f32 %v1986, %v2118
        %v2158 = vadd.f32 %v1987, %v2121
        %v2159 = vadd.f32 %v1988, %v2123
        %v2160 = vadd.f32 %v1989, %v2126
        %v2161 = vadd.f32 %v1990, %v2128
        %v2162 = vadd.f32 %v1991, %v2131
        %v2163 = vadd.f32 %v1992, %v2133
        %v2164 = vadd.f32 %v1993, %v2136
        %v2165 = vadd.f32 %v1994, %v2138
        %v2166 = vadd.f32 %v1995, %v2141
        %v2167 = vadd.f32 %v1996, %v2143
        %v2168 = vadd.f32 %v1997, %v2146
        %v2169 = vadd.f32 %v1998, %v2148
        %v2171 = vrot.slane %v516, 5
        %v2172 = vrot.slane %v2171, 4
        %v2173 = vrot.slane %v517, 5
        %v2174 = vsel %vm1121, %v2172, %v2173
        %v2175 = vrot.slane %v2173, 4
        %v2176 = vrot.slane %v518, 5
        %v2177 = vsel %vm1121, %v2175, %v2176
        %v2178 = vld [vmem:[%s3 + $0x200] sm:$0xf]
        %v2179 = vld [vmem:[%s3 + $0x204] sm:$0xf]
        %v2180 = vld [vmem:[%s3 + $0x208] sm:$0xf]
        %v2181 = vld [vmem:[%s3 + $0x20c] sm:$0xf]
        %v2182 = vld [vmem:[%s3 + $0x210] sm:$0xf]
        %v2183 = vld [vmem:[%s3 + $0x214] sm:$0xf]
        %v2184 = vld [vmem:[%s3 + $0x218] sm:$0xf]
        %v2185 = vld [vmem:[%s3 + $0x21c] sm:$0xf]
        %v2186 = vld [vmem:[%s3 + $0x220] sm:$0xf]
        %v2187 = vld [vmem:[%s3 + $0x224] sm:$0xf]
        %v2188 = vld [vmem:[%s3 + $0x228] sm:$0xf]
        %v2189 = vld [vmem:[%s3 + $0x22c] sm:$0xf]
        %v2190 = vld [vmem:[%s3 + $0x230] sm:$0xf]
        %v2191 = vld [vmem:[%s3 + $0x234] sm:$0xf]
        %v2192 = vld [vmem:[%s3 + $0x238] sm:$0xf]
        %v2193 = vld [vmem:[%s3 + $0x23c] sm:$0xf]
        %v2194 = vunpack.c.l.b16 %v2174
        %v2195 = vunpack.c.l.b16 %v2177
        %v2196 = vpack.c.b16 %v2195, %v2194
        %v2214 = vunpack.c.l.b16 %v2178
        %v2215 = vunpack.c.l.b16 %v2179
        %v2216 = vunpack.c.l.b16 %v2180
        %v2217 = vunpack.c.l.b16 %v2181
        %v2218 = vunpack.c.l.b16 %v2182
        %v2219 = vunpack.c.l.b16 %v2183
        %v2220 = vunpack.c.l.b16 %v2184
        %v2221 = vunpack.c.l.b16 %v2185
        %v2222 = vunpack.c.l.b16 %v2186
        %v2223 = vunpack.c.l.b16 %v2187
        %v2224 = vunpack.c.l.b16 %v2188
        %v2225 = vunpack.c.l.b16 %v2189
        %v2226 = vunpack.c.l.b16 %v2190
        %v2227 = vunpack.c.l.b16 %v2191
        %v2228 = vunpack.c.l.b16 %v2192
        %v2229 = vunpack.c.l.b16 %v2193
        %v2230 = vpack.c.b16 %v2215, %v2214
        %v2231 = vpack.c.b16 %v2217, %v2216
        %v2232 = vpack.c.b16 %v2219, %v2218
        %v2233 = vpack.c.b16 %v2221, %v2220
        %v2234 = vpack.c.b16 %v2223, %v2222
        %v2235 = vpack.c.b16 %v2225, %v2224
        %v2236 = vpack.c.b16 %v2227, %v2226
        %v2237 = vpack.c.b16 %v2229, %v2228
        %2246 = vmatpush.bf16.msra.mxu0 %v2237
        %2247 = vmatpush.bf16.msra.mxu0 %v2236
        %2248 = vmatpush.bf16.msra.mxu0 %v2235
        %2249 = vmatpush.bf16.msra.mxu0 %v2234
        %2250 = vmatpush.bf16.msra.mxu0 %v2233
        %2251 = vmatpush.bf16.msra.mxu0 %v2232
        %2252 = vmatpush.bf16.msra.mxu0 %v2231
        %2253 = vmatpush.bf16.msra.mxu0 %v2230
        %2254 = vmatmul.bf16.gmra.mxu0 %v1230
        %v2255 = vpop.f32.mrf.mxu0
        %v2256 = vadd.f32 0.0, %v2255
        %v2257 = vpop.f32.mrf.mxu0
        %v2258 = vadd.f32 0.0, %v2257
        %2259 = vmatmul.bf16.gmra.mxu0 %v1231
        %v2260 = vpop.f32.mrf.mxu0
        %v2261 = vadd.f32 0.0, %v2260
        %v2262 = vpop.f32.mrf.mxu0
        %v2263 = vadd.f32 0.0, %v2262
        %2264 = vmatmul.bf16.gmra.mxu0 %v1232
        %v2265 = vpop.f32.mrf.mxu0
        %v2266 = vadd.f32 0.0, %v2265
        %v2267 = vpop.f32.mrf.mxu0
        %v2268 = vadd.f32 0.0, %v2267
        %2269 = vmatmul.bf16.gmra.mxu0 %v1233
        %v2270 = vpop.f32.mrf.mxu0
        %v2271 = vadd.f32 0.0, %v2270
        %v2272 = vpop.f32.mrf.mxu0
        %v2273 = vadd.f32 0.0, %v2272
        %2274 = vmatmul.bf16.gmra.mxu0 %v1234
        %v2275 = vpop.f32.mrf.mxu0
        %v2276 = vadd.f32 0.0, %v2275
        %v2277 = vpop.f32.mrf.mxu0
        %v2278 = vadd.f32 0.0, %v2277
        %2279 = vmatmul.bf16.gmra.mxu0 %v1235
        %v2280 = vpop.f32.mrf.mxu0
        %v2281 = vadd.f32 0.0, %v2280
        %v2282 = vpop.f32.mrf.mxu0
        %v2283 = vadd.f32 0.0, %v2282
        %2284 = vmatmul.bf16.gmra.mxu0 %v1236
        %v2285 = vpop.f32.mrf.mxu0
        %v2286 = vadd.f32 0.0, %v2285
        %v2287 = vpop.f32.mrf.mxu0
        %v2288 = vadd.f32 0.0, %v2287
        %2289 = vmatmul.bf16.gmra.mxu0 %v1237
        %v2290 = vpop.f32.mrf.mxu0
        %v2291 = vadd.f32 0.0, %v2290
        %v2292 = vpop.f32.mrf.mxu0
        %v2293 = vadd.f32 0.0, %v2292
        %2294 = vmatmul.bf16.gmra.mxu0 %v1721
        %v2295 = vpop.f32.mrf.mxu0
        %v2296 = vadd.f32 0.0, %v2295
        %v2297 = vpop.f32.mrf.mxu0
        %v2298 = vadd.f32 0.0, %v2297
        %2299 = vmatmul.bf16.gmra.mxu0 %v2196
        %v2300 = vpop.f32.mrf.mxu0
        %v2301 = vadd.f32 0.0, %v2300
        %v2302 = vpop.f32.mrf.mxu0
        %v2303 = vadd.f32 0.0, %v2302
        %2304 = vdwg.mxu0
        %v2305 = vadd.f32 %v2150, %v2256
        %v2306 = vadd.f32 %v2151, %v2258
        %v2307 = vadd.f32 %v2152, %v2261
        %v2308 = vadd.f32 %v2153, %v2263
        %v2309 = vadd.f32 %v2154, %v2266
        %v2310 = vadd.f32 %v2155, %v2268
        %v2311 = vadd.f32 %v2156, %v2271
        %v2312 = vadd.f32 %v2157, %v2273
        %v2313 = vadd.f32 %v2158, %v2276
        %v2314 = vadd.f32 %v2159, %v2278
        %v2315 = vadd.f32 %v2160, %v2281
        %v2316 = vadd.f32 %v2161, %v2283
        %v2317 = vadd.f32 %v2162, %v2286
        %v2318 = vadd.f32 %v2163, %v2288
        %v2319 = vadd.f32 %v2164, %v2291
        %v2320 = vadd.f32 %v2165, %v2293
        %v2321 = vadd.f32 %v2166, %v2296
        %v2322 = vadd.f32 %v2167, %v2298
        %v2323 = vadd.f32 %v2168, %v2301
        %v2324 = vadd.f32 %v2169, %v2303
        %v2325 = vld [vmem:[%s5] sm:$0x1]
        %v2327 = vperm.slane %v2325, 0
        %v2329 = vmul.f32 %v2305, %v2327
        %v2330 = vmul.f32 %v2306, %v2327
        %v2331 = vmul.f32 %v2307, %v2327
        %v2332 = vmul.f32 %v2308, %v2327
        %v2333 = vmul.f32 %v2309, %v2327
        %v2334 = vmul.f32 %v2310, %v2327
        %v2335 = vmul.f32 %v2311, %v2327
        %v2336 = vmul.f32 %v2312, %v2327
        %v2337 = vmul.f32 %v2313, %v2327
        %v2338 = vmul.f32 %v2314, %v2327
        %v2339 = vmul.f32 %v2315, %v2327
        %v2340 = vmul.f32 %v2316, %v2327
        %v2341 = vmul.f32 %v2317, %v2327
        %v2342 = vmul.f32 %v2318, %v2327
        %v2343 = vmul.f32 %v2319, %v2327
        %v2344 = vmul.f32 %v2320, %v2327
        %v2345 = vmul.f32 %v2321, %v2327
        %v2346 = vmul.f32 %v2322, %v2327
        %v2347 = vmul.f32 %v2323, %v2327
        %v2348 = vmul.f32 %v2324, %v2327
        %v2349 = vld [vmem:[%s6] sm:$0x1]
        %v2351 = vperm.slane %v2349, 0
        %v2353 = vadd.f32 %v2329, %v2351
        %v2354 = vadd.f32 %v2330, %v2351
        %v2355 = vadd.f32 %v2331, %v2351
        %v2356 = vadd.f32 %v2332, %v2351
        %v2357 = vadd.f32 %v2333, %v2351
        %v2358 = vadd.f32 %v2334, %v2351
        %v2359 = vadd.f32 %v2335, %v2351
        %v2360 = vadd.f32 %v2336, %v2351
        %v2361 = vadd.f32 %v2337, %v2351
        %v2362 = vadd.f32 %v2338, %v2351
        %v2363 = vadd.f32 %v2339, %v2351
        %v2364 = vadd.f32 %v2340, %v2351
        %v2365 = vadd.f32 %v2341, %v2351
        %v2366 = vadd.f32 %v2342, %v2351
        %v2367 = vadd.f32 %v2343, %v2351
        %v2368 = vadd.f32 %v2344, %v2351
        %v2369 = vadd.f32 %v2345, %v2351
        %v2370 = vadd.f32 %v2346, %v2351
        %v2371 = vadd.f32 %v2347, %v2351
        %v2372 = vadd.f32 %v2348, %v2351
        %v2373 = vmax.f32 %v2353, 0.0
        %v2374 = vmax.f32 %v2354, 0.0
        %v2375 = vmax.f32 %v2355, 0.0
        %v2376 = vmax.f32 %v2356, 0.0
        %v2377 = vmax.f32 %v2357, 0.0
        %v2378 = vmax.f32 %v2358, 0.0
        %v2379 = vmax.f32 %v2359, 0.0
        %v2380 = vmax.f32 %v2360, 0.0
        %v2381 = vmax.f32 %v2361, 0.0
        %v2382 = vmax.f32 %v2362, 0.0
        %v2383 = vmax.f32 %v2363, 0.0
        %v2384 = vmax.f32 %v2364, 0.0
        %v2385 = vmax.f32 %v2365, 0.0
        %v2386 = vmax.f32 %v2366, 0.0
        %v2387 = vmax.f32 %v2367, 0.0
        %v2388 = vmax.f32 %v2368, 0.0
        %v2389 = vmax.f32 %v2369, 0.0
        %v2390 = vmax.f32 %v2370, 0.0
        %v2391 = vmax.f32 %v2371, 0.0
        %v2392 = vmax.f32 %v2372, 0.0
        %p2393 = scmp.ge.s32.totalorder %s519, 1
        %s2394 = scalar_select %p2393, 1, 0
        %s2395 = scvt.s32.f32 %s2394
        %s2396 = sadd.s32 %s519, 8
        %p2397 = scmp.lt.s32.totalorder %s2396, 16
        %s2398 = scalar_select %p2397, 1, 0
        %s2399 = scvt.s32.f32 %s2398
        %v2400 = vstv %s2395
        %v2401 = vmul.f32 %v2373, %v2400
        %v2402 = vmul.f32 %v2374, %v2400
        %v2403 = vstv %s2399
        %v2404 = vmul.f32 %v2391, %v2403
        %v2405 = vmul.f32 %v2392, %v2403
        %v2406 = vpack.c.bf16 %v2401, %v2401
        %v2407 = vpack.c.bf16 %v2402, %v2402
        %v2408 = vpack.c.bf16 %v2375, %v2375
        %v2409 = vpack.c.bf16 %v2376, %v2376
        %v2410 = vpack.c.bf16 %v2377, %v2377
        %v2411 = vpack.c.bf16 %v2378, %v2378
        %v2412 = vpack.c.bf16 %v2379, %v2379
        %v2413 = vpack.c.bf16 %v2380, %v2380
        %v2414 = vpack.c.bf16 %v2381, %v2381
        %v2415 = vpack.c.bf16 %v2382, %v2382
        %v2416 = vpack.c.bf16 %v2383, %v2383
        %v2417 = vpack.c.bf16 %v2384, %v2384
        %v2418 = vpack.c.bf16 %v2385, %v2385
        %v2419 = vpack.c.bf16 %v2386, %v2386
        %v2420 = vpack.c.bf16 %v2387, %v2387
        %v2421 = vpack.c.bf16 %v2388, %v2388
        %v2422 = vpack.c.bf16 %v2389, %v2389
        %v2423 = vpack.c.bf16 %v2390, %v2390
        %v2424 = vpack.c.bf16 %v2404, %v2404
        %v2425 = vpack.c.bf16 %v2405, %v2405
        %v2446 = vunpack.c.l.b16 %v2406
        %v2447 = vunpack.c.l.b16 %v2407
        %v2448 = vunpack.c.l.b16 %v2408
        %v2449 = vunpack.c.l.b16 %v2409
        %v2450 = vunpack.c.l.b16 %v2410
        %v2451 = vunpack.c.l.b16 %v2411
        %v2452 = vunpack.c.l.b16 %v2412
        %v2453 = vunpack.c.l.b16 %v2413
        %v2454 = vunpack.c.l.b16 %v2414
        %v2455 = vunpack.c.l.b16 %v2415
        %v2456 = vunpack.c.l.b16 %v2416
        %v2457 = vunpack.c.l.b16 %v2417
        %v2458 = vunpack.c.l.b16 %v2418
        %v2459 = vunpack.c.l.b16 %v2419
        %v2460 = vunpack.c.l.b16 %v2420
        %v2461 = vunpack.c.l.b16 %v2421
        %v2462 = vunpack.c.l.b16 %v2422
        %v2463 = vunpack.c.l.b16 %v2423
        %v2464 = vunpack.c.l.b16 %v2424
        %v2465 = vunpack.c.l.b16 %v2425
        %v2466 = vpack.c.b16 %v2447, %v2446
        %v2467 = vpack.c.b16 %v2449, %v2448
        %v2468 = vpack.c.b16 %v2451, %v2450
        %v2469 = vpack.c.b16 %v2453, %v2452
        %v2470 = vpack.c.b16 %v2455, %v2454
        %v2471 = vpack.c.b16 %v2457, %v2456
        %v2472 = vpack.c.b16 %v2459, %v2458
        %v2473 = vpack.c.b16 %v2461, %v2460
        %v2474 = vpack.c.b16 %v2463, %v2462
        %v2475 = vpack.c.b16 %v2465, %v2464
        %v2477 = vshrl.u32 %v2466, 16
        %v2479 = vrot.slane %v2477, 7
        %v2480 = vshll.u32 %v2466, 16
        %v2482 = vor.u32 %v2479, %v2480
        %v2484 = vshrl.u32 %v2467, 16
        %v2486 = vrot.slane %v2484, 7
        %v2487 = vshll.u32 %v2467, 16
        %v2489 = vor.u32 %v2486, %v2487
        %v2491 = vshrl.u32 %v2468, 16
        %v2493 = vrot.slane %v2491, 7
        %v2494 = vshll.u32 %v2468, 16
        %v2496 = vor.u32 %v2493, %v2494
        %v2498 = vshrl.u32 %v2469, 16
        %v2500 = vrot.slane %v2498, 7
        %v2501 = vshll.u32 %v2469, 16
        %v2503 = vor.u32 %v2500, %v2501
        %v2505 = vshrl.u32 %v2470, 16
        %v2507 = vrot.slane %v2505, 7
        %v2508 = vshll.u32 %v2470, 16
        %v2510 = vor.u32 %v2507, %v2508
        %v2512 = vshrl.u32 %v2471, 16
        %v2514 = vrot.slane %v2512, 7
        %v2515 = vshll.u32 %v2471, 16
        %v2517 = vor.u32 %v2514, %v2515
        %v2519 = vshrl.u32 %v2472, 16
        %v2521 = vrot.slane %v2519, 7
        %v2522 = vshll.u32 %v2472, 16
        %v2524 = vor.u32 %v2521, %v2522
        %v2526 = vshrl.u32 %v2473, 16
        %v2528 = vrot.slane %v2526, 7
        %v2529 = vshll.u32 %v2473, 16
        %v2531 = vor.u32 %v2528, %v2529
        %v2533 = vshrl.u32 %v2474, 16
        %v2535 = vrot.slane %v2533, 7
        %v2536 = vshll.u32 %v2474, 16
        %v2538 = vor.u32 %v2535, %v2536
        %v2540 = vshrl.u32 %v2475, 16
        %v2542 = vrot.slane %v2540, 7
        %v2543 = vshll.u32 %v2475, 16
        %v2545 = vor.u32 %v2542, %v2543
        %vm2566 = vcmask 1040384
        %vm2567 = vsmask.f32 256
        %vm2568 = vmand %vm2566, %vm2567
        %v2569 = vsel %vm2568, 0, %v2482
        %v2570 = vsel %vm2568, 0, %v2489
        %v2571 = vsel %vm2568, 0, %v2496
        %v2572 = vsel %vm2568, 0, %v2503
        %v2573 = vsel %vm2568, 0, %v2510
        %v2574 = vsel %vm2568, 0, %v2517
        %v2575 = vsel %vm2568, 0, %v2524
        %v2576 = vsel %vm2568, 0, %v2531
        %v2577 = vsel %vm2568, 0, %v2538
        %v2578 = vsel %vm2568, 0, %v2545
        %v2579 = vsel %vm2568, %v2479, 0
        %v2580 = vsel %vm2568, %v2486, 0
        %v2581 = vsel %vm2568, %v2493, 0
        %v2582 = vsel %vm2568, %v2500, 0
        %v2583 = vsel %vm2568, %v2507, 0
        %v2584 = vsel %vm2568, %v2514, 0
        %v2585 = vsel %vm2568, %v2521, 0
        %v2586 = vsel %vm2568, %v2528, 0
        %v2587 = vsel %vm2568, %v2535, 0
        %v2588 = vsel %vm2568, %v2542, 0
        %v2589 = vld [vmem:[%s4] sm:$0xf]
        %v2590 = vld [vmem:[%s4 + $0x4] sm:$0xf]
        %v2591 = vld [vmem:[%s4 + $0x8] sm:$0xf]
        %v2592 = vld [vmem:[%s4 + $0xc] sm:$0xf]
        %v2593 = vld [vmem:[%s4 + $0x10] sm:$0xf]
        %v2594 = vld [vmem:[%s4 + $0x14] sm:$0xf]
        %v2595 = vld [vmem:[%s4 + $0x18] sm:$0xf]
        %v2596 = vld [vmem:[%s4 + $0x1c] sm:$0xf]
        %v2597 = vld [vmem:[%s4 + $0x20] sm:$0xf]
        %v2598 = vld [vmem:[%s4 + $0x24] sm:$0xf]
        %v2599 = vld [vmem:[%s4 + $0x28] sm:$0xf]
        %v2600 = vld [vmem:[%s4 + $0x2c] sm:$0xf]
        %v2601 = vld [vmem:[%s4 + $0x30] sm:$0xf]
        %v2602 = vld [vmem:[%s4 + $0x34] sm:$0xf]
        %v2603 = vld [vmem:[%s4 + $0x38] sm:$0xf]
        %v2604 = vld [vmem:[%s4 + $0x3c] sm:$0xf]
        %vm2605 = vsmask.f32 7424
        %v2607 = vshrl.u32 %v2569, 16
        %v2609 = vshll.u32 %v2569, 16
        %v2611 = vrot.slane %v2609, 1
        %v2612 = vor.u32 %v2607, %v2611
        %v2614 = vshll.u32 %v2579, 16
        %v2616 = vrot.slane %v2614, 1
        %v2617 = vsel %vm2605, %v2612, %v2616
        %v2619 = vshrl.u32 %v2570, 16
        %v2621 = vshll.u32 %v2570, 16
        %v2623 = vrot.slane %v2621, 1
        %v2624 = vor.u32 %v2619, %v2623
        %v2626 = vshll.u32 %v2580, 16
        %v2628 = vrot.slane %v2626, 1
        %v2629 = vsel %vm2605, %v2624, %v2628
        %v2631 = vshrl.u32 %v2571, 16
        %v2633 = vshll.u32 %v2571, 16
        %v2635 = vrot.slane %v2633, 1
        %v2636 = vor.u32 %v2631, %v2635
        %v2638 = vshll.u32 %v2581, 16
        %v2640 = vrot.slane %v2638, 1
        %v2641 = vsel %vm2605, %v2636, %v2640
        %v2643 = vshrl.u32 %v2572, 16
        %v2645 = vshll.u32 %v2572, 16
        %v2647 = vrot.slane %v2645, 1
        %v2648 = vor.u32 %v2643, %v2647
        %v2650 = vshll.u32 %v2582, 16
        %v2652 = vrot.slane %v2650, 1
        %v2653 = vsel %vm2605, %v2648, %v2652
        %v2655 = vshrl.u32 %v2573, 16
        %v2657 = vshll.u32 %v2573, 16
        %v2659 = vrot.slane %v2657, 1
        %v2660 = vor.u32 %v2655, %v2659
        %v2662 = vshll.u32 %v2583, 16
        %v2664 = vrot.slane %v2662, 1
        %v2665 = vsel %vm2605, %v2660, %v2664
        %v2667 = vshrl.u32 %v2574, 16
        %v2669 = vshll.u32 %v2574, 16
        %v2671 = vrot.slane %v2669, 1
        %v2672 = vor.u32 %v2667, %v2671
        %v2674 = vshll.u32 %v2584, 16
        %v2676 = vrot.slane %v2674, 1
        %v2677 = vsel %vm2605, %v2672, %v2676
        %v2679 = vshrl.u32 %v2575, 16
        %v2681 = vshll.u32 %v2575, 16
        %v2683 = vrot.slane %v2681, 1
        %v2684 = vor.u32 %v2679, %v2683
        %v2686 = vshll.u32 %v2585, 16
        %v2688 = vrot.slane %v2686, 1
        %v2689 = vsel %vm2605, %v2684, %v2688
        %v2691 = vshrl.u32 %v2576, 16
        %v2693 = vshll.u32 %v2576, 16
        %v2695 = vrot.slane %v2693, 1
        %v2696 = vor.u32 %v2691, %v2695
        %v2698 = vshll.u32 %v2586, 16
        %v2700 = vrot.slane %v2698, 1
        %v2701 = vsel %vm2605, %v2696, %v2700
        %v2710 = vld [vmem:[%s4 + $0x40] sm:$0xf]
        %v2711 = vld [vmem:[%s4 + $0x44] sm:$0xf]
        %v2712 = vld [vmem:[%s4 + $0x48] sm:$0xf]
        %v2713 = vld [vmem:[%s4 + $0x4c] sm:$0xf]
        %v2714 = vld [vmem:[%s4 + $0x50] sm:$0xf]
        %v2715 = vld [vmem:[%s4 + $0x54] sm:$0xf]
        %v2716 = vld [vmem:[%s4 + $0x58] sm:$0xf]
        %v2717 = vld [vmem:[%s4 + $0x5c] sm:$0xf]
        %v2718 = vld [vmem:[%s4 + $0x60] sm:$0xf]
        %v2719 = vld [vmem:[%s4 + $0x64] sm:$0xf]
        %v2720 = vld [vmem:[%s4 + $0x68] sm:$0xf]
        %v2721 = vld [vmem:[%s4 + $0x6c] sm:$0xf]
        %v2722 = vld [vmem:[%s4 + $0x70] sm:$0xf]
        %v2723 = vld [vmem:[%s4 + $0x74] sm:$0xf]
        %v2724 = vld [vmem:[%s4 + $0x78] sm:$0xf]
        %v2725 = vld [vmem:[%s4 + $0x7c] sm:$0xf]
        %v2742 = vunpack.c.l.b16 %v2710
        %v2743 = vunpack.c.l.b16 %v2711
        %v2744 = vunpack.c.l.b16 %v2712
        %v2745 = vunpack.c.l.b16 %v2713
        %v2746 = vunpack.c.l.b16 %v2714
        %v2747 = vunpack.c.l.b16 %v2715
        %v2748 = vunpack.c.l.b16 %v2716
        %v2749 = vunpack.c.l.b16 %v2717
        %v2750 = vunpack.c.l.b16 %v2718
        %v2751 = vunpack.c.l.b16 %v2719
        %v2752 = vunpack.c.l.b16 %v2720
        %v2753 = vunpack.c.l.b16 %v2721
        %v2754 = vunpack.c.l.b16 %v2722
        %v2755 = vunpack.c.l.b16 %v2723
        %v2756 = vunpack.c.l.b16 %v2724
        %v2757 = vunpack.c.l.b16 %v2725
        %v2758 = vpack.c.b16 %v2743, %v2742
        %v2759 = vpack.c.b16 %v2745, %v2744
        %v2760 = vpack.c.b16 %v2747, %v2746
        %v2761 = vpack.c.b16 %v2749, %v2748
        %v2762 = vpack.c.b16 %v2751, %v2750
        %v2763 = vpack.c.b16 %v2753, %v2752
        %v2764 = vpack.c.b16 %v2755, %v2754
        %v2765 = vpack.c.b16 %v2757, %v2756
        %2774 = vmatpush.bf16.msra.mxu0 %v2765
        %2775 = vmatpush.bf16.msra.mxu0 %v2764
        %2776 = vmatpush.bf16.msra.mxu0 %v2763
        %2777 = vmatpush.bf16.msra.mxu0 %v2762
        %2778 = vmatpush.bf16.msra.mxu0 %v2761
        %2779 = vmatpush.bf16.msra.mxu0 %v2760
        %2780 = vmatpush.bf16.msra.mxu0 %v2759
        %2781 = vmatpush.bf16.msra.mxu0 %v2758
        %2782 = vmatmul.bf16.gmra.mxu0 %v2617
        %v2783 = vpop.f32.mrf.mxu0
        %v2784 = vadd.f32 0.0, %v2783
        %v2785 = vpop.f32.mrf.mxu0
        %v2786 = vadd.f32 0.0, %v2785
        %2787 = vmatmul.bf16.gmra.mxu0 %v2629
        %v2788 = vpop.f32.mrf.mxu0
        %v2789 = vadd.f32 0.0, %v2788
        %v2790 = vpop.f32.mrf.mxu0
        %v2791 = vadd.f32 0.0, %v2790
        %2792 = vmatmul.bf16.gmra.mxu0 %v2641
        %v2793 = vpop.f32.mrf.mxu0
        %v2794 = vadd.f32 0.0, %v2793
        %v2795 = vpop.f32.mrf.mxu0
        %v2796 = vadd.f32 0.0, %v2795
        %2797 = vmatmul.bf16.gmra.mxu0 %v2653
        %v2798 = vpop.f32.mrf.mxu0
        %v2799 = vadd.f32 0.0, %v2798
        %v2800 = vpop.f32.mrf.mxu0
        %v2801 = vadd.f32 0.0, %v2800
        %2802 = vmatmul.bf16.gmra.mxu0 %v2665
        %v2803 = vpop.f32.mrf.mxu0
        %v2804 = vadd.f32 0.0, %v2803
        %v2805 = vpop.f32.mrf.mxu0
        %v2806 = vadd.f32 0.0, %v2805
        %2807 = vmatmul.bf16.gmra.mxu0 %v2677
        %v2808 = vpop.f32.mrf.mxu0
        %v2809 = vadd.f32 0.0, %v2808
        %v2810 = vpop.f32.mrf.mxu0
        %v2811 = vadd.f32 0.0, %v2810
        %2812 = vmatmul.bf16.gmra.mxu0 %v2689
        %v2813 = vpop.f32.mrf.mxu0
        %v2814 = vadd.f32 0.0, %v2813
        %v2815 = vpop.f32.mrf.mxu0
        %v2816 = vadd.f32 0.0, %v2815
        %2817 = vmatmul.bf16.gmra.mxu0 %v2701
        %v2818 = vpop.f32.mrf.mxu0
        %v2819 = vadd.f32 0.0, %v2818
        %v2820 = vpop.f32.mrf.mxu0
        %v2821 = vadd.f32 0.0, %v2820
        %2822 = vdwg.mxu0
        %v2839 = vunpack.c.l.b16 %v2589
        %v2840 = vunpack.c.l.b16 %v2590
        %v2841 = vunpack.c.l.b16 %v2591
        %v2842 = vunpack.c.l.b16 %v2592
        %v2843 = vunpack.c.l.b16 %v2593
        %v2844 = vunpack.c.l.b16 %v2594
        %v2845 = vunpack.c.l.b16 %v2595
        %v2846 = vunpack.c.l.b16 %v2596
        %v2847 = vunpack.c.l.b16 %v2597
        %v2848 = vunpack.c.l.b16 %v2598
        %v2849 = vunpack.c.l.b16 %v2599
        %v2850 = vunpack.c.l.b16 %v2600
        %v2851 = vunpack.c.l.b16 %v2601
        %v2852 = vunpack.c.l.b16 %v2602
        %v2853 = vunpack.c.l.b16 %v2603
        %v2854 = vunpack.c.l.b16 %v2604
        %v2855 = vpack.c.b16 %v2840, %v2839
        %v2856 = vpack.c.b16 %v2842, %v2841
        %v2857 = vpack.c.b16 %v2844, %v2843
        %v2858 = vpack.c.b16 %v2846, %v2845
        %v2859 = vpack.c.b16 %v2848, %v2847
        %v2860 = vpack.c.b16 %v2850, %v2849
        %v2861 = vpack.c.b16 %v2852, %v2851
        %v2862 = vpack.c.b16 %v2854, %v2853
        %2871 = vmatpush.bf16.msra.mxu0 %v2862
        %2872 = vmatpush.bf16.msra.mxu0 %v2861
        %2873 = vmatpush.bf16.msra.mxu0 %v2860
        %2874 = vmatpush.bf16.msra.mxu0 %v2859
        %2875 = vmatpush.bf16.msra.mxu0 %v2858
        %2876 = vmatpush.bf16.msra.mxu0 %v2857
        %2877 = vmatpush.bf16.msra.mxu0 %v2856
        %2878 = vmatpush.bf16.msra.mxu0 %v2855
        %2879 = vmatmul.bf16.gmra.mxu0 %v2569
        %v2880 = vpop.f32.mrf.mxu0
        %v2881 = vadd.f32 %v2784, %v2880
        %v2882 = vpop.f32.mrf.mxu0
        %v2883 = vadd.f32 %v2786, %v2882
        %2884 = vmatmul.bf16.gmra.mxu0 %v2570
        %v2885 = vpop.f32.mrf.mxu0
        %v2886 = vadd.f32 %v2789, %v2885
        %v2887 = vpop.f32.mrf.mxu0
        %v2888 = vadd.f32 %v2791, %v2887
        %2889 = vmatmul.bf16.gmra.mxu0 %v2571
        %v2890 = vpop.f32.mrf.mxu0
        %v2891 = vadd.f32 %v2794, %v2890
        %v2892 = vpop.f32.mrf.mxu0
        %v2893 = vadd.f32 %v2796, %v2892
        %2894 = vmatmul.bf16.gmra.mxu0 %v2572
        %v2895 = vpop.f32.mrf.mxu0
        %v2896 = vadd.f32 %v2799, %v2895
        %v2897 = vpop.f32.mrf.mxu0
        %v2898 = vadd.f32 %v2801, %v2897
        %2899 = vmatmul.bf16.gmra.mxu0 %v2573
        %v2900 = vpop.f32.mrf.mxu0
        %v2901 = vadd.f32 %v2804, %v2900
        %v2902 = vpop.f32.mrf.mxu0
        %v2903 = vadd.f32 %v2806, %v2902
        %2904 = vmatmul.bf16.gmra.mxu0 %v2574
        %v2905 = vpop.f32.mrf.mxu0
        %v2906 = vadd.f32 %v2809, %v2905
        %v2907 = vpop.f32.mrf.mxu0
        %v2908 = vadd.f32 %v2811, %v2907
        %2909 = vmatmul.bf16.gmra.mxu0 %v2575
        %v2910 = vpop.f32.mrf.mxu0
        %v2911 = vadd.f32 %v2814, %v2910
        %v2912 = vpop.f32.mrf.mxu0
        %v2913 = vadd.f32 %v2816, %v2912
        %2914 = vmatmul.bf16.gmra.mxu0 %v2576
        %v2915 = vpop.f32.mrf.mxu0
        %v2916 = vadd.f32 %v2819, %v2915
        %v2917 = vpop.f32.mrf.mxu0
        %v2918 = vadd.f32 %v2821, %v2917
        %2919 = vdwg.mxu0
        %vm2936 = vcmask 1046528
        %v2937 = vrot.slane %v2569, 1
        %v2938 = vrot.slane %v2579, 1
        %v2939 = vsel %vm2936, %v2937, %v2938
        %v2940 = vrot.slane %v2570, 1
        %v2941 = vrot.slane %v2580, 1
        %v2942 = vsel %vm2936, %v2940, %v2941
        %v2943 = vrot.slane %v2571, 1
        %v2944 = vrot.slane %v2581, 1
        %v2945 = vsel %vm2936, %v2943, %v2944
        %v2946 = vrot.slane %v2572, 1
        %v2947 = vrot.slane %v2582, 1
        %v2948 = vsel %vm2936, %v2946, %v2947
        %v2949 = vrot.slane %v2573, 1
        %v2950 = vrot.slane %v2583, 1
        %v2951 = vsel %vm2936, %v2949, %v2950
        %v2952 = vrot.slane %v2574, 1
        %v2953 = vrot.slane %v2584, 1
        %v2954 = vsel %vm2936, %v2952, %v2953
        %v2955 = vrot.slane %v2575, 1
        %v2956 = vrot.slane %v2585, 1
        %v2957 = vsel %vm2936, %v2955, %v2956
        %v2958 = vrot.slane %v2576, 1
        %v2959 = vrot.slane %v2586, 1
        %v2960 = vsel %vm2936, %v2958, %v2959
        %v2969 = vld [vmem:[%s4 + $0x80] sm:$0xf]
        %v2970 = vld [vmem:[%s4 + $0x84] sm:$0xf]
        %v2971 = vld [vmem:[%s4 + $0x88] sm:$0xf]
        %v2972 = vld [vmem:[%s4 + $0x8c] sm:$0xf]
        %v2973 = vld [vmem:[%s4 + $0x90] sm:$0xf]
        %v2974 = vld [vmem:[%s4 + $0x94] sm:$0xf]
        %v2975 = vld [vmem:[%s4 + $0x98] sm:$0xf]
        %v2976 = vld [vmem:[%s4 + $0x9c] sm:$0xf]
        %v2977 = vld [vmem:[%s4 + $0xa0] sm:$0xf]
        %v2978 = vld [vmem:[%s4 + $0xa4] sm:$0xf]
        %v2979 = vld [vmem:[%s4 + $0xa8] sm:$0xf]
        %v2980 = vld [vmem:[%s4 + $0xac] sm:$0xf]
        %v2981 = vld [vmem:[%s4 + $0xb0] sm:$0xf]
        %v2982 = vld [vmem:[%s4 + $0xb4] sm:$0xf]
        %v2983 = vld [vmem:[%s4 + $0xb8] sm:$0xf]
        %v2984 = vld [vmem:[%s4 + $0xbc] sm:$0xf]
        %v3001 = vunpack.c.l.b16 %v2969
        %v3002 = vunpack.c.l.b16 %v2970
        %v3003 = vunpack.c.l.b16 %v2971
        %v3004 = vunpack.c.l.b16 %v2972
        %v3005 = vunpack.c.l.b16 %v2973
        %v3006 = vunpack.c.l.b16 %v2974
        %v3007 = vunpack.c.l.b16 %v2975
        %v3008 = vunpack.c.l.b16 %v2976
        %v3009 = vunpack.c.l.b16 %v2977
        %v3010 = vunpack.c.l.b16 %v2978
        %v3011 = vunpack.c.l.b16 %v2979
        %v3012 = vunpack.c.l.b16 %v2980
        %v3013 = vunpack.c.l.b16 %v2981
        %v3014 = vunpack.c.l.b16 %v2982
        %v3015 = vunpack.c.l.b16 %v2983
        %v3016 = vunpack.c.l.b16 %v2984
        %v3017 = vpack.c.b16 %v3002, %v3001
        %v3018 = vpack.c.b16 %v3004, %v3003
        %v3019 = vpack.c.b16 %v3006, %v3005
        %v3020 = vpack.c.b16 %v3008, %v3007
        %v3021 = vpack.c.b16 %v3010, %v3009
        %v3022 = vpack.c.b16 %v3012, %v3011
        %v3023 = vpack.c.b16 %v3014, %v3013
        %v3024 = vpack.c.b16 %v3016, %v3015
        %3033 = vmatpush.bf16.msra.mxu0 %v3024
        %3034 = vmatpush.bf16.msra.mxu0 %v3023
        %3035 = vmatpush.bf16.msra.mxu0 %v3022
        %3036 = vmatpush.bf16.msra.mxu0 %v3021
        %3037 = vmatpush.bf16.msra.mxu0 %v3020
        %3038 = vmatpush.bf16.msra.mxu0 %v3019
        %3039 = vmatpush.bf16.msra.mxu0 %v3018
        %3040 = vmatpush.bf16.msra.mxu0 %v3017
        %3041 = vmatmul.bf16.gmra.mxu0 %v2939
        %v3042 = vpop.f32.mrf.mxu0
        %v3043 = vadd.f32 0.0, %v3042
        %v3044 = vpop.f32.mrf.mxu0
        %v3045 = vadd.f32 0.0, %v3044
        %3046 = vmatmul.bf16.gmra.mxu0 %v2942
        %v3047 = vpop.f32.mrf.mxu0
        %v3048 = vadd.f32 0.0, %v3047
        %v3049 = vpop.f32.mrf.mxu0
        %v3050 = vadd.f32 0.0, %v3049
        %3051 = vmatmul.bf16.gmra.mxu0 %v2945
        %v3052 = vpop.f32.mrf.mxu0
        %v3053 = vadd.f32 0.0, %v3052
        %v3054 = vpop.f32.mrf.mxu0
        %v3055 = vadd.f32 0.0, %v3054
        %3056 = vmatmul.bf16.gmra.mxu0 %v2948
        %v3057 = vpop.f32.mrf.mxu0
        %v3058 = vadd.f32 0.0, %v3057
        %v3059 = vpop.f32.mrf.mxu0
        %v3060 = vadd.f32 0.0, %v3059
        %3061 = vmatmul.bf16.gmra.mxu0 %v2951
        %v3062 = vpop.f32.mrf.mxu0
        %v3063 = vadd.f32 0.0, %v3062
        %v3064 = vpop.f32.mrf.mxu0
        %v3065 = vadd.f32 0.0, %v3064
        %3066 = vmatmul.bf16.gmra.mxu0 %v2954
        %v3067 = vpop.f32.mrf.mxu0
        %v3068 = vadd.f32 0.0, %v3067
        %v3069 = vpop.f32.mrf.mxu0
        %v3070 = vadd.f32 0.0, %v3069
        %3071 = vmatmul.bf16.gmra.mxu0 %v2957
        %v3072 = vpop.f32.mrf.mxu0
        %v3073 = vadd.f32 0.0, %v3072
        %v3074 = vpop.f32.mrf.mxu0
        %v3075 = vadd.f32 0.0, %v3074
        %3076 = vmatmul.bf16.gmra.mxu0 %v2960
        %v3077 = vpop.f32.mrf.mxu0
        %v3078 = vadd.f32 0.0, %v3077
        %v3079 = vpop.f32.mrf.mxu0
        %v3080 = vadd.f32 0.0, %v3079
        %3081 = vdwg.mxu0
        %v3082 = vadd.f32 %v2881, %v3043
        %v3083 = vadd.f32 %v2883, %v3045
        %v3084 = vadd.f32 %v2886, %v3048
        %v3085 = vadd.f32 %v2888, %v3050
        %v3086 = vadd.f32 %v2891, %v3053
        %v3087 = vadd.f32 %v2893, %v3055
        %v3088 = vadd.f32 %v2896, %v3058
        %v3089 = vadd.f32 %v2898, %v3060
        %v3090 = vadd.f32 %v2901, %v3063
        %v3091 = vadd.f32 %v2903, %v3065
        %v3092 = vadd.f32 %v2906, %v3068
        %v3093 = vadd.f32 %v2908, %v3070
        %v3094 = vadd.f32 %v2911, %v3073
        %v3095 = vadd.f32 %v2913, %v3075
        %v3096 = vadd.f32 %v2916, %v3078
        %v3097 = vadd.f32 %v2918, %v3080
        %v3098 = vld [vmem:[%s4 + $0xc0] sm:$0xf]
        %v3099 = vld [vmem:[%s4 + $0xc4] sm:$0xf]
        %v3100 = vld [vmem:[%s4 + $0xc8] sm:$0xf]
        %v3101 = vld [vmem:[%s4 + $0xcc] sm:$0xf]
        %v3102 = vld [vmem:[%s4 + $0xd0] sm:$0xf]
        %v3103 = vld [vmem:[%s4 + $0xd4] sm:$0xf]
        %v3104 = vld [vmem:[%s4 + $0xd8] sm:$0xf]
        %v3105 = vld [vmem:[%s4 + $0xdc] sm:$0xf]
        %v3106 = vld [vmem:[%s4 + $0xe0] sm:$0xf]
        %v3107 = vld [vmem:[%s4 + $0xe4] sm:$0xf]
        %v3108 = vld [vmem:[%s4 + $0xe8] sm:$0xf]
        %v3109 = vld [vmem:[%s4 + $0xec] sm:$0xf]
        %v3110 = vld [vmem:[%s4 + $0xf0] sm:$0xf]
        %v3111 = vld [vmem:[%s4 + $0xf4] sm:$0xf]
        %v3112 = vld [vmem:[%s4 + $0xf8] sm:$0xf]
        %v3113 = vld [vmem:[%s4 + $0xfc] sm:$0xf]
        %v3130 = vunpack.c.l.b16 %v3098
        %v3131 = vunpack.c.l.b16 %v3099
        %v3132 = vunpack.c.l.b16 %v3100
        %v3133 = vunpack.c.l.b16 %v3101
        %v3134 = vunpack.c.l.b16 %v3102
        %v3135 = vunpack.c.l.b16 %v3103
        %v3136 = vunpack.c.l.b16 %v3104
        %v3137 = vunpack.c.l.b16 %v3105
        %v3138 = vunpack.c.l.b16 %v3106
        %v3139 = vunpack.c.l.b16 %v3107
        %v3140 = vunpack.c.l.b16 %v3108
        %v3141 = vunpack.c.l.b16 %v3109
        %v3142 = vunpack.c.l.b16 %v3110
        %v3143 = vunpack.c.l.b16 %v3111
        %v3144 = vunpack.c.l.b16 %v3112
        %v3145 = vunpack.c.l.b16 %v3113
        %v3146 = vpack.c.b16 %v3131, %v3130
        %v3147 = vpack.c.b16 %v3133, %v3132
        %v3148 = vpack.c.b16 %v3135, %v3134
        %v3149 = vpack.c.b16 %v3137, %v3136
        %v3150 = vpack.c.b16 %v3139, %v3138
        %v3151 = vpack.c.b16 %v3141, %v3140
        %v3152 = vpack.c.b16 %v3143, %v3142
        %v3153 = vpack.c.b16 %v3145, %v3144
        %3162 = vmatpush.bf16.msra.mxu0 %v3153
        %3163 = vmatpush.bf16.msra.mxu0 %v3152
        %3164 = vmatpush.bf16.msra.mxu0 %v3151
        %3165 = vmatpush.bf16.msra.mxu0 %v3150
        %3166 = vmatpush.bf16.msra.mxu0 %v3149
        %3167 = vmatpush.bf16.msra.mxu0 %v3148
        %3168 = vmatpush.bf16.msra.mxu0 %v3147
        %3169 = vmatpush.bf16.msra.mxu0 %v3146
        %3170 = vmatmul.bf16.gmra.mxu0 %v2570
        %v3171 = vpop.f32.mrf.mxu0
        %v3172 = vadd.f32 0.0, %v3171
        %v3173 = vpop.f32.mrf.mxu0
        %v3174 = vadd.f32 0.0, %v3173
        %3175 = vmatmul.bf16.gmra.mxu0 %v2571
        %v3176 = vpop.f32.mrf.mxu0
        %v3177 = vadd.f32 0.0, %v3176
        %v3178 = vpop.f32.mrf.mxu0
        %v3179 = vadd.f32 0.0, %v3178
        %3180 = vmatmul.bf16.gmra.mxu0 %v2572
        %v3181 = vpop.f32.mrf.mxu0
        %v3182 = vadd.f32 0.0, %v3181
        %v3183 = vpop.f32.mrf.mxu0
        %v3184 = vadd.f32 0.0, %v3183
        %3185 = vmatmul.bf16.gmra.mxu0 %v2573
        %v3186 = vpop.f32.mrf.mxu0
        %v3187 = vadd.f32 0.0, %v3186
        %v3188 = vpop.f32.mrf.mxu0
        %v3189 = vadd.f32 0.0, %v3188
        %3190 = vmatmul.bf16.gmra.mxu0 %v2574
        %v3191 = vpop.f32.mrf.mxu0
        %v3192 = vadd.f32 0.0, %v3191
        %v3193 = vpop.f32.mrf.mxu0
        %v3194 = vadd.f32 0.0, %v3193
        %3195 = vmatmul.bf16.gmra.mxu0 %v2575
        %v3196 = vpop.f32.mrf.mxu0
        %v3197 = vadd.f32 0.0, %v3196
        %v3198 = vpop.f32.mrf.mxu0
        %v3199 = vadd.f32 0.0, %v3198
        %3200 = vmatmul.bf16.gmra.mxu0 %v2576
        %v3201 = vpop.f32.mrf.mxu0
        %v3202 = vadd.f32 0.0, %v3201
        %v3203 = vpop.f32.mrf.mxu0
        %v3204 = vadd.f32 0.0, %v3203
        %3205 = vmatmul.bf16.gmra.mxu0 %v2577
        %v3206 = vpop.f32.mrf.mxu0
        %v3207 = vadd.f32 0.0, %v3206
        %v3208 = vpop.f32.mrf.mxu0
        %v3209 = vadd.f32 0.0, %v3208
        %3210 = vdwg.mxu0
        %v3211 = vadd.f32 %v3082, %v3172
        %v3212 = vadd.f32 %v3083, %v3174
        %v3213 = vadd.f32 %v3084, %v3177
        %v3214 = vadd.f32 %v3085, %v3179
        %v3215 = vadd.f32 %v3086, %v3182
        %v3216 = vadd.f32 %v3087, %v3184
        %v3217 = vadd.f32 %v3088, %v3187
        %v3218 = vadd.f32 %v3089, %v3189
        %v3219 = vadd.f32 %v3090, %v3192
        %v3220 = vadd.f32 %v3091, %v3194
        %v3221 = vadd.f32 %v3092, %v3197
        %v3222 = vadd.f32 %v3093, %v3199
        %v3223 = vadd.f32 %v3094, %v3202
        %v3224 = vadd.f32 %v3095, %v3204
        %v3225 = vadd.f32 %v3096, %v3207
        %v3226 = vadd.f32 %v3097, %v3209
        %v3228 = vshrl.u32 %v2577, 16
        %v3230 = vshll.u32 %v2577, 16
        %v3232 = vrot.slane %v3230, 1
        %v3233 = vor.u32 %v3228, %v3232
        %v3235 = vshll.u32 %v2587, 16
        %v3237 = vrot.slane %v3235, 1
        %v3238 = vsel %vm2605, %v3233, %v3237
        %v3240 = vld [vmem:[%s4 + $0x100] sm:$0xf]
        %v3241 = vld [vmem:[%s4 + $0x104] sm:$0xf]
        %v3242 = vld [vmem:[%s4 + $0x108] sm:$0xf]
        %v3243 = vld [vmem:[%s4 + $0x10c] sm:$0xf]
        %v3244 = vld [vmem:[%s4 + $0x110] sm:$0xf]
        %v3245 = vld [vmem:[%s4 + $0x114] sm:$0xf]
        %v3246 = vld [vmem:[%s4 + $0x118] sm:$0xf]
        %v3247 = vld [vmem:[%s4 + $0x11c] sm:$0xf]
        %v3248 = vld [vmem:[%s4 + $0x120] sm:$0xf]
        %v3249 = vld [vmem:[%s4 + $0x124] sm:$0xf]
        %v3250 = vld [vmem:[%s4 + $0x128] sm:$0xf]
        %v3251 = vld [vmem:[%s4 + $0x12c] sm:$0xf]
        %v3252 = vld [vmem:[%s4 + $0x130] sm:$0xf]
        %v3253 = vld [vmem:[%s4 + $0x134] sm:$0xf]
        %v3254 = vld [vmem:[%s4 + $0x138] sm:$0xf]
        %v3255 = vld [vmem:[%s4 + $0x13c] sm:$0xf]
        %v3272 = vunpack.c.l.b16 %v3240
        %v3273 = vunpack.c.l.b16 %v3241
        %v3274 = vunpack.c.l.b16 %v3242
        %v3275 = vunpack.c.l.b16 %v3243
        %v3276 = vunpack.c.l.b16 %v3244
        %v3277 = vunpack.c.l.b16 %v3245
        %v3278 = vunpack.c.l.b16 %v3246
        %v3279 = vunpack.c.l.b16 %v3247
        %v3280 = vunpack.c.l.b16 %v3248
        %v3281 = vunpack.c.l.b16 %v3249
        %v3282 = vunpack.c.l.b16 %v3250
        %v3283 = vunpack.c.l.b16 %v3251
        %v3284 = vunpack.c.l.b16 %v3252
        %v3285 = vunpack.c.l.b16 %v3253
        %v3286 = vunpack.c.l.b16 %v3254
        %v3287 = vunpack.c.l.b16 %v3255
        %v3288 = vpack.c.b16 %v3273, %v3272
        %v3289 = vpack.c.b16 %v3275, %v3274
        %v3290 = vpack.c.b16 %v3277, %v3276
        %v3291 = vpack.c.b16 %v3279, %v3278
        %v3292 = vpack.c.b16 %v3281, %v3280
        %v3293 = vpack.c.b16 %v3283, %v3282
        %v3294 = vpack.c.b16 %v3285, %v3284
        %v3295 = vpack.c.b16 %v3287, %v3286
        %3304 = vmatpush.bf16.msra.mxu0 %v3295
        %3305 = vmatpush.bf16.msra.mxu0 %v3294
        %3306 = vmatpush.bf16.msra.mxu0 %v3293
        %3307 = vmatpush.bf16.msra.mxu0 %v3292
        %3308 = vmatpush.bf16.msra.mxu0 %v3291
        %3309 = vmatpush.bf16.msra.mxu0 %v3290
        %3310 = vmatpush.bf16.msra.mxu0 %v3289
        %3311 = vmatpush.bf16.msra.mxu0 %v3288
        %3312 = vmatmul.bf16.gmra.mxu0 %v2629
        %v3313 = vpop.f32.mrf.mxu0
        %v3314 = vadd.f32 0.0, %v3313
        %v3315 = vpop.f32.mrf.mxu0
        %v3316 = vadd.f32 0.0, %v3315
        %3317 = vmatmul.bf16.gmra.mxu0 %v2641
        %v3318 = vpop.f32.mrf.mxu0
        %v3319 = vadd.f32 0.0, %v3318
        %v3320 = vpop.f32.mrf.mxu0
        %v3321 = vadd.f32 0.0, %v3320
        %3322 = vmatmul.bf16.gmra.mxu0 %v2653
        %v3323 = vpop.f32.mrf.mxu0
        %v3324 = vadd.f32 0.0, %v3323
        %v3325 = vpop.f32.mrf.mxu0
        %v3326 = vadd.f32 0.0, %v3325
        %3327 = vmatmul.bf16.gmra.mxu0 %v2665
        %v3328 = vpop.f32.mrf.mxu0
        %v3329 = vadd.f32 0.0, %v3328
        %v3330 = vpop.f32.mrf.mxu0
        %v3331 = vadd.f32 0.0, %v3330
        %3332 = vmatmul.bf16.gmra.mxu0 %v2677
        %v3333 = vpop.f32.mrf.mxu0
        %v3334 = vadd.f32 0.0, %v3333
        %v3335 = vpop.f32.mrf.mxu0
        %v3336 = vadd.f32 0.0, %v3335
        %3337 = vmatmul.bf16.gmra.mxu0 %v2689
        %v3338 = vpop.f32.mrf.mxu0
        %v3339 = vadd.f32 0.0, %v3338
        %v3340 = vpop.f32.mrf.mxu0
        %v3341 = vadd.f32 0.0, %v3340
        %3342 = vmatmul.bf16.gmra.mxu0 %v2701
        %v3343 = vpop.f32.mrf.mxu0
        %v3344 = vadd.f32 0.0, %v3343
        %v3345 = vpop.f32.mrf.mxu0
        %v3346 = vadd.f32 0.0, %v3345
        %3347 = vmatmul.bf16.gmra.mxu0 %v3238
        %v3348 = vpop.f32.mrf.mxu0
        %v3349 = vadd.f32 0.0, %v3348
        %v3350 = vpop.f32.mrf.mxu0
        %v3351 = vadd.f32 0.0, %v3350
        %3352 = vdwg.mxu0
        %v3353 = vadd.f32 %v3211, %v3314
        %v3354 = vadd.f32 %v3212, %v3316
        %v3355 = vadd.f32 %v3213, %v3319
        %v3356 = vadd.f32 %v3214, %v3321
        %v3357 = vadd.f32 %v3215, %v3324
        %v3358 = vadd.f32 %v3216, %v3326
        %v3359 = vadd.f32 %v3217, %v3329
        %v3360 = vadd.f32 %v3218, %v3331
        %v3361 = vadd.f32 %v3219, %v3334
        %v3362 = vadd.f32 %v3220, %v3336
        %v3363 = vadd.f32 %v3221, %v3339
        %v3364 = vadd.f32 %v3222, %v3341
        %v3365 = vadd.f32 %v3223, %v3344
        %v3366 = vadd.f32 %v3224, %v3346
        %v3367 = vadd.f32 %v3225, %v3349
        %v3368 = vadd.f32 %v3226, %v3351
        %v3371 = vrot.slane %v2577, 1
        %v3372 = vrot.slane %v2587, 1
        %v3373 = vsel %vm2936, %v3371, %v3372
        %v3375 = vld [vmem:[%s4 + $0x140] sm:$0xf]
        %v3376 = vld [vmem:[%s4 + $0x144] sm:$0xf]
        %v3377 = vld [vmem:[%s4 + $0x148] sm:$0xf]
        %v3378 = vld [vmem:[%s4 + $0x14c] sm:$0xf]
        %v3379 = vld [vmem:[%s4 + $0x150] sm:$0xf]
        %v3380 = vld [vmem:[%s4 + $0x154] sm:$0xf]
        %v3381 = vld [vmem:[%s4 + $0x158] sm:$0xf]
        %v3382 = vld [vmem:[%s4 + $0x15c] sm:$0xf]
        %v3383 = vld [vmem:[%s4 + $0x160] sm:$0xf]
        %v3384 = vld [vmem:[%s4 + $0x164] sm:$0xf]
        %v3385 = vld [vmem:[%s4 + $0x168] sm:$0xf]
        %v3386 = vld [vmem:[%s4 + $0x16c] sm:$0xf]
        %v3387 = vld [vmem:[%s4 + $0x170] sm:$0xf]
        %v3388 = vld [vmem:[%s4 + $0x174] sm:$0xf]
        %v3389 = vld [vmem:[%s4 + $0x178] sm:$0xf]
        %v3390 = vld [vmem:[%s4 + $0x17c] sm:$0xf]
        %v3407 = vunpack.c.l.b16 %v3375
        %v3408 = vunpack.c.l.b16 %v3376
        %v3409 = vunpack.c.l.b16 %v3377
        %v3410 = vunpack.c.l.b16 %v3378
        %v3411 = vunpack.c.l.b16 %v3379
        %v3412 = vunpack.c.l.b16 %v3380
        %v3413 = vunpack.c.l.b16 %v3381
        %v3414 = vunpack.c.l.b16 %v3382
        %v3415 = vunpack.c.l.b16 %v3383
        %v3416 = vunpack.c.l.b16 %v3384
        %v3417 = vunpack.c.l.b16 %v3385
        %v3418 = vunpack.c.l.b16 %v3386
        %v3419 = vunpack.c.l.b16 %v3387
        %v3420 = vunpack.c.l.b16 %v3388
        %v3421 = vunpack.c.l.b16 %v3389
        %v3422 = vunpack.c.l.b16 %v3390
        %v3423 = vpack.c.b16 %v3408, %v3407
        %v3424 = vpack.c.b16 %v3410, %v3409
        %v3425 = vpack.c.b16 %v3412, %v3411
        %v3426 = vpack.c.b16 %v3414, %v3413
        %v3427 = vpack.c.b16 %v3416, %v3415
        %v3428 = vpack.c.b16 %v3418, %v3417
        %v3429 = vpack.c.b16 %v3420, %v3419
        %v3430 = vpack.c.b16 %v3422, %v3421
        %3439 = vmatpush.bf16.msra.mxu0 %v3430
        %3440 = vmatpush.bf16.msra.mxu0 %v3429
        %3441 = vmatpush.bf16.msra.mxu0 %v3428
        %3442 = vmatpush.bf16.msra.mxu0 %v3427
        %3443 = vmatpush.bf16.msra.mxu0 %v3426
        %3444 = vmatpush.bf16.msra.mxu0 %v3425
        %3445 = vmatpush.bf16.msra.mxu0 %v3424
        %3446 = vmatpush.bf16.msra.mxu0 %v3423
        %3447 = vmatmul.bf16.gmra.mxu0 %v2942
        %v3448 = vpop.f32.mrf.mxu0
        %v3449 = vadd.f32 0.0, %v3448
        %v3450 = vpop.f32.mrf.mxu0
        %v3451 = vadd.f32 0.0, %v3450
        %3452 = vmatmul.bf16.gmra.mxu0 %v2945
        %v3453 = vpop.f32.mrf.mxu0
        %v3454 = vadd.f32 0.0, %v3453
        %v3455 = vpop.f32.mrf.mxu0
        %v3456 = vadd.f32 0.0, %v3455
        %3457 = vmatmul.bf16.gmra.mxu0 %v2948
        %v3458 = vpop.f32.mrf.mxu0
        %v3459 = vadd.f32 0.0, %v3458
        %v3460 = vpop.f32.mrf.mxu0
        %v3461 = vadd.f32 0.0, %v3460
        %3462 = vmatmul.bf16.gmra.mxu0 %v2951
        %v3463 = vpop.f32.mrf.mxu0
        %v3464 = vadd.f32 0.0, %v3463
        %v3465 = vpop.f32.mrf.mxu0
        %v3466 = vadd.f32 0.0, %v3465
        %3467 = vmatmul.bf16.gmra.mxu0 %v2954
        %v3468 = vpop.f32.mrf.mxu0
        %v3469 = vadd.f32 0.0, %v3468
        %v3470 = vpop.f32.mrf.mxu0
        %v3471 = vadd.f32 0.0, %v3470
        %3472 = vmatmul.bf16.gmra.mxu0 %v2957
        %v3473 = vpop.f32.mrf.mxu0
        %v3474 = vadd.f32 0.0, %v3473
        %v3475 = vpop.f32.mrf.mxu0
        %v3476 = vadd.f32 0.0, %v3475
        %3477 = vmatmul.bf16.gmra.mxu0 %v2960
        %v3478 = vpop.f32.mrf.mxu0
        %v3479 = vadd.f32 0.0, %v3478
        %v3480 = vpop.f32.mrf.mxu0
        %v3481 = vadd.f32 0.0, %v3480
        %3482 = vmatmul.bf16.gmra.mxu0 %v3373
        %v3483 = vpop.f32.mrf.mxu0
        %v3484 = vadd.f32 0.0, %v3483
        %v3485 = vpop.f32.mrf.mxu0
        %v3486 = vadd.f32 0.0, %v3485
        %3487 = vdwg.mxu0
        %v3488 = vadd.f32 %v3353, %v3449
        %v3489 = vadd.f32 %v3354, %v3451
        %v3490 = vadd.f32 %v3355, %v3454
        %v3491 = vadd.f32 %v3356, %v3456
        %v3492 = vadd.f32 %v3357, %v3459
        %v3493 = vadd.f32 %v3358, %v3461
        %v3494 = vadd.f32 %v3359, %v3464
        %v3495 = vadd.f32 %v3360, %v3466
        %v3496 = vadd.f32 %v3361, %v3469
        %v3497 = vadd.f32 %v3362, %v3471
        %v3498 = vadd.f32 %v3363, %v3474
        %v3499 = vadd.f32 %v3364, %v3476
        %v3500 = vadd.f32 %v3365, %v3479
        %v3501 = vadd.f32 %v3366, %v3481
        %v3502 = vadd.f32 %v3367, %v3484
        %v3503 = vadd.f32 %v3368, %v3486
        %v3504 = vld [vmem:[%s4 + $0x180] sm:$0xf]
        %v3505 = vld [vmem:[%s4 + $0x184] sm:$0xf]
        %v3506 = vld [vmem:[%s4 + $0x188] sm:$0xf]
        %v3507 = vld [vmem:[%s4 + $0x18c] sm:$0xf]
        %v3508 = vld [vmem:[%s4 + $0x190] sm:$0xf]
        %v3509 = vld [vmem:[%s4 + $0x194] sm:$0xf]
        %v3510 = vld [vmem:[%s4 + $0x198] sm:$0xf]
        %v3511 = vld [vmem:[%s4 + $0x19c] sm:$0xf]
        %v3512 = vld [vmem:[%s4 + $0x1a0] sm:$0xf]
        %v3513 = vld [vmem:[%s4 + $0x1a4] sm:$0xf]
        %v3514 = vld [vmem:[%s4 + $0x1a8] sm:$0xf]
        %v3515 = vld [vmem:[%s4 + $0x1ac] sm:$0xf]
        %v3516 = vld [vmem:[%s4 + $0x1b0] sm:$0xf]
        %v3517 = vld [vmem:[%s4 + $0x1b4] sm:$0xf]
        %v3518 = vld [vmem:[%s4 + $0x1b8] sm:$0xf]
        %v3519 = vld [vmem:[%s4 + $0x1bc] sm:$0xf]
        %v3536 = vunpack.c.l.b16 %v3504
        %v3537 = vunpack.c.l.b16 %v3505
        %v3538 = vunpack.c.l.b16 %v3506
        %v3539 = vunpack.c.l.b16 %v3507
        %v3540 = vunpack.c.l.b16 %v3508
        %v3541 = vunpack.c.l.b16 %v3509
        %v3542 = vunpack.c.l.b16 %v3510
        %v3543 = vunpack.c.l.b16 %v3511
        %v3544 = vunpack.c.l.b16 %v3512
        %v3545 = vunpack.c.l.b16 %v3513
        %v3546 = vunpack.c.l.b16 %v3514
        %v3547 = vunpack.c.l.b16 %v3515
        %v3548 = vunpack.c.l.b16 %v3516
        %v3549 = vunpack.c.l.b16 %v3517
        %v3550 = vunpack.c.l.b16 %v3518
        %v3551 = vunpack.c.l.b16 %v3519
        %v3552 = vpack.c.b16 %v3537, %v3536
        %v3553 = vpack.c.b16 %v3539, %v3538
        %v3554 = vpack.c.b16 %v3541, %v3540
        %v3555 = vpack.c.b16 %v3543, %v3542
        %v3556 = vpack.c.b16 %v3545, %v3544
        %v3557 = vpack.c.b16 %v3547, %v3546
        %v3558 = vpack.c.b16 %v3549, %v3548
        %v3559 = vpack.c.b16 %v3551, %v3550
        %3568 = vmatpush.bf16.msra.mxu0 %v3559
        %3569 = vmatpush.bf16.msra.mxu0 %v3558
        %3570 = vmatpush.bf16.msra.mxu0 %v3557
        %3571 = vmatpush.bf16.msra.mxu0 %v3556
        %3572 = vmatpush.bf16.msra.mxu0 %v3555
        %3573 = vmatpush.bf16.msra.mxu0 %v3554
        %3574 = vmatpush.bf16.msra.mxu0 %v3553
        %3575 = vmatpush.bf16.msra.mxu0 %v3552
        %3576 = vmatmul.bf16.gmra.mxu0 %v2571
        %v3577 = vpop.f32.mrf.mxu0
        %v3578 = vadd.f32 0.0, %v3577
        %v3579 = vpop.f32.mrf.mxu0
        %v3580 = vadd.f32 0.0, %v3579
        %3581 = vmatmul.bf16.gmra.mxu0 %v2572
        %v3582 = vpop.f32.mrf.mxu0
        %v3583 = vadd.f32 0.0, %v3582
        %v3584 = vpop.f32.mrf.mxu0
        %v3585 = vadd.f32 0.0, %v3584
        %3586 = vmatmul.bf16.gmra.mxu0 %v2573
        %v3587 = vpop.f32.mrf.mxu0
        %v3588 = vadd.f32 0.0, %v3587
        %v3589 = vpop.f32.mrf.mxu0
        %v3590 = vadd.f32 0.0, %v3589
        %3591 = vmatmul.bf16.gmra.mxu0 %v2574
        %v3592 = vpop.f32.mrf.mxu0
        %v3593 = vadd.f32 0.0, %v3592
        %v3594 = vpop.f32.mrf.mxu0
        %v3595 = vadd.f32 0.0, %v3594
        %3596 = vmatmul.bf16.gmra.mxu0 %v2575
        %v3597 = vpop.f32.mrf.mxu0
        %v3598 = vadd.f32 0.0, %v3597
        %v3599 = vpop.f32.mrf.mxu0
        %v3600 = vadd.f32 0.0, %v3599
        %3601 = vmatmul.bf16.gmra.mxu0 %v2576
        %v3602 = vpop.f32.mrf.mxu0
        %v3603 = vadd.f32 0.0, %v3602
        %v3604 = vpop.f32.mrf.mxu0
        %v3605 = vadd.f32 0.0, %v3604
        %3606 = vmatmul.bf16.gmra.mxu0 %v2577
        %v3607 = vpop.f32.mrf.mxu0
        %v3608 = vadd.f32 0.0, %v3607
        %v3609 = vpop.f32.mrf.mxu0
        %v3610 = vadd.f32 0.0, %v3609
        %3611 = vmatmul.bf16.gmra.mxu0 %v2578
        %v3612 = vpop.f32.mrf.mxu0
        %v3613 = vadd.f32 0.0, %v3612
        %v3614 = vpop.f32.mrf.mxu0
        %v3615 = vadd.f32 0.0, %v3614
        %3616 = vdwg.mxu0
        %v3617 = vadd.f32 %v3488, %v3578
        %v3618 = vadd.f32 %v3489, %v3580
        %v3619 = vadd.f32 %v3490, %v3583
        %v3620 = vadd.f32 %v3491, %v3585
        %v3621 = vadd.f32 %v3492, %v3588
        %v3622 = vadd.f32 %v3493, %v3590
        %v3623 = vadd.f32 %v3494, %v3593
        %v3624 = vadd.f32 %v3495, %v3595
        %v3625 = vadd.f32 %v3496, %v3598
        %v3626 = vadd.f32 %v3497, %v3600
        %v3627 = vadd.f32 %v3498, %v3603
        %v3628 = vadd.f32 %v3499, %v3605
        %v3629 = vadd.f32 %v3500, %v3608
        %v3630 = vadd.f32 %v3501, %v3610
        %v3631 = vadd.f32 %v3502, %v3613
        %v3632 = vadd.f32 %v3503, %v3615
        %v3634 = vshrl.u32 %v2578, 16
        %v3636 = vshll.u32 %v2578, 16
        %v3638 = vrot.slane %v3636, 1
        %v3639 = vor.u32 %v3634, %v3638
        %v3641 = vshll.u32 %v2588, 16
        %v3643 = vrot.slane %v3641, 1
        %v3644 = vsel %vm2605, %v3639, %v3643
        %v3646 = vld [vmem:[%s4 + $0x1c0] sm:$0xf]
        %v3647 = vld [vmem:[%s4 + $0x1c4] sm:$0xf]
        %v3648 = vld [vmem:[%s4 + $0x1c8] sm:$0xf]
        %v3649 = vld [vmem:[%s4 + $0x1cc] sm:$0xf]
        %v3650 = vld [vmem:[%s4 + $0x1d0] sm:$0xf]
        %v3651 = vld [vmem:[%s4 + $0x1d4] sm:$0xf]
        %v3652 = vld [vmem:[%s4 + $0x1d8] sm:$0xf]
        %v3653 = vld [vmem:[%s4 + $0x1dc] sm:$0xf]
        %v3654 = vld [vmem:[%s4 + $0x1e0] sm:$0xf]
        %v3655 = vld [vmem:[%s4 + $0x1e4] sm:$0xf]
        %v3656 = vld [vmem:[%s4 + $0x1e8] sm:$0xf]
        %v3657 = vld [vmem:[%s4 + $0x1ec] sm:$0xf]
        %v3658 = vld [vmem:[%s4 + $0x1f0] sm:$0xf]
        %v3659 = vld [vmem:[%s4 + $0x1f4] sm:$0xf]
        %v3660 = vld [vmem:[%s4 + $0x1f8] sm:$0xf]
        %v3661 = vld [vmem:[%s4 + $0x1fc] sm:$0xf]
        %v3678 = vunpack.c.l.b16 %v3646
        %v3679 = vunpack.c.l.b16 %v3647
        %v3680 = vunpack.c.l.b16 %v3648
        %v3681 = vunpack.c.l.b16 %v3649
        %v3682 = vunpack.c.l.b16 %v3650
        %v3683 = vunpack.c.l.b16 %v3651
        %v3684 = vunpack.c.l.b16 %v3652
        %v3685 = vunpack.c.l.b16 %v3653
        %v3686 = vunpack.c.l.b16 %v3654
        %v3687 = vunpack.c.l.b16 %v3655
        %v3688 = vunpack.c.l.b16 %v3656
        %v3689 = vunpack.c.l.b16 %v3657
        %v3690 = vunpack.c.l.b16 %v3658
        %v3691 = vunpack.c.l.b16 %v3659
        %v3692 = vunpack.c.l.b16 %v3660
        %v3693 = vunpack.c.l.b16 %v3661
        %v3694 = vpack.c.b16 %v3679, %v3678
        %v3695 = vpack.c.b16 %v3681, %v3680
        %v3696 = vpack.c.b16 %v3683, %v3682
        %v3697 = vpack.c.b16 %v3685, %v3684
        %v3698 = vpack.c.b16 %v3687, %v3686
        %v3699 = vpack.c.b16 %v3689, %v3688
        %v3700 = vpack.c.b16 %v3691, %v3690
        %v3701 = vpack.c.b16 %v3693, %v3692
        %3710 = vmatpush.bf16.msra.mxu0 %v3701
        %3711 = vmatpush.bf16.msra.mxu0 %v3700
        %3712 = vmatpush.bf16.msra.mxu0 %v3699
        %3713 = vmatpush.bf16.msra.mxu0 %v3698
        %3714 = vmatpush.bf16.msra.mxu0 %v3697
        %3715 = vmatpush.bf16.msra.mxu0 %v3696
        %3716 = vmatpush.bf16.msra.mxu0 %v3695
        %3717 = vmatpush.bf16.msra.mxu0 %v3694
        %3718 = vmatmul.bf16.gmra.mxu0 %v2641
        %v3719 = vpop.f32.mrf.mxu0
        %v3720 = vadd.f32 0.0, %v3719
        %v3721 = vpop.f32.mrf.mxu0
        %v3722 = vadd.f32 0.0, %v3721
        %3723 = vmatmul.bf16.gmra.mxu0 %v2653
        %v3724 = vpop.f32.mrf.mxu0
        %v3725 = vadd.f32 0.0, %v3724
        %v3726 = vpop.f32.mrf.mxu0
        %v3727 = vadd.f32 0.0, %v3726
        %3728 = vmatmul.bf16.gmra.mxu0 %v2665
        %v3729 = vpop.f32.mrf.mxu0
        %v3730 = vadd.f32 0.0, %v3729
        %v3731 = vpop.f32.mrf.mxu0
        %v3732 = vadd.f32 0.0, %v3731
        %3733 = vmatmul.bf16.gmra.mxu0 %v2677
        %v3734 = vpop.f32.mrf.mxu0
        %v3735 = vadd.f32 0.0, %v3734
        %v3736 = vpop.f32.mrf.mxu0
        %v3737 = vadd.f32 0.0, %v3736
        %3738 = vmatmul.bf16.gmra.mxu0 %v2689
        %v3739 = vpop.f32.mrf.mxu0
        %v3740 = vadd.f32 0.0, %v3739
        %v3741 = vpop.f32.mrf.mxu0
        %v3742 = vadd.f32 0.0, %v3741
        %3743 = vmatmul.bf16.gmra.mxu0 %v2701
        %v3744 = vpop.f32.mrf.mxu0
        %v3745 = vadd.f32 0.0, %v3744
        %v3746 = vpop.f32.mrf.mxu0
        %v3747 = vadd.f32 0.0, %v3746
        %3748 = vmatmul.bf16.gmra.mxu0 %v3238
        %v3749 = vpop.f32.mrf.mxu0
        %v3750 = vadd.f32 0.0, %v3749
        %v3751 = vpop.f32.mrf.mxu0
        %v3752 = vadd.f32 0.0, %v3751
        %3753 = vmatmul.bf16.gmra.mxu0 %v3644
        %v3754 = vpop.f32.mrf.mxu0
        %v3755 = vadd.f32 0.0, %v3754
        %v3756 = vpop.f32.mrf.mxu0
        %v3757 = vadd.f32 0.0, %v3756
        %3758 = vdwg.mxu0
        %v3759 = vadd.f32 %v3617, %v3720
        %v3760 = vadd.f32 %v3618, %v3722
        %v3761 = vadd.f32 %v3619, %v3725
        %v3762 = vadd.f32 %v3620, %v3727
        %v3763 = vadd.f32 %v3621, %v3730
        %v3764 = vadd.f32 %v3622, %v3732
        %v3765 = vadd.f32 %v3623, %v3735
        %v3766 = vadd.f32 %v3624, %v3737
        %v3767 = vadd.f32 %v3625, %v3740
        %v3768 = vadd.f32 %v3626, %v3742
        %v3769 = vadd.f32 %v3627, %v3745
        %v3770 = vadd.f32 %v3628, %v3747
        %v3771 = vadd.f32 %v3629, %v3750
        %v3772 = vadd.f32 %v3630, %v3752
        %v3773 = vadd.f32 %v3631, %v3755
        %v3774 = vadd.f32 %v3632, %v3757
        %v3777 = vrot.slane %v2578, 1
        %v3778 = vrot.slane %v2588, 1
        %v3779 = vsel %vm2936, %v3777, %v3778
        %v3781 = vld [vmem:[%s4 + $0x200] sm:$0xf]
        %v3782 = vld [vmem:[%s4 + $0x204] sm:$0xf]
        %v3783 = vld [vmem:[%s4 + $0x208] sm:$0xf]
        %v3784 = vld [vmem:[%s4 + $0x20c] sm:$0xf]
        %v3785 = vld [vmem:[%s4 + $0x210] sm:$0xf]
        %v3786 = vld [vmem:[%s4 + $0x214] sm:$0xf]
        %v3787 = vld [vmem:[%s4 + $0x218] sm:$0xf]
        %v3788 = vld [vmem:[%s4 + $0x21c] sm:$0xf]
        %v3789 = vld [vmem:[%s4 + $0x220] sm:$0xf]
        %v3790 = vld [vmem:[%s4 + $0x224] sm:$0xf]
        %v3791 = vld [vmem:[%s4 + $0x228] sm:$0xf]
        %v3792 = vld [vmem:[%s4 + $0x22c] sm:$0xf]
        %v3793 = vld [vmem:[%s4 + $0x230] sm:$0xf]
        %v3794 = vld [vmem:[%s4 + $0x234] sm:$0xf]
        %v3795 = vld [vmem:[%s4 + $0x238] sm:$0xf]
        %v3796 = vld [vmem:[%s4 + $0x23c] sm:$0xf]
        %v3813 = vunpack.c.l.b16 %v3781
        %v3814 = vunpack.c.l.b16 %v3782
        %v3815 = vunpack.c.l.b16 %v3783
        %v3816 = vunpack.c.l.b16 %v3784
        %v3817 = vunpack.c.l.b16 %v3785
        %v3818 = vunpack.c.l.b16 %v3786
        %v3819 = vunpack.c.l.b16 %v3787
        %v3820 = vunpack.c.l.b16 %v3788
        %v3821 = vunpack.c.l.b16 %v3789
        %v3822 = vunpack.c.l.b16 %v3790
        %v3823 = vunpack.c.l.b16 %v3791
        %v3824 = vunpack.c.l.b16 %v3792
        %v3825 = vunpack.c.l.b16 %v3793
        %v3826 = vunpack.c.l.b16 %v3794
        %v3827 = vunpack.c.l.b16 %v3795
        %v3828 = vunpack.c.l.b16 %v3796
        %v3829 = vpack.c.b16 %v3814, %v3813
        %v3830 = vpack.c.b16 %v3816, %v3815
        %v3831 = vpack.c.b16 %v3818, %v3817
        %v3832 = vpack.c.b16 %v3820, %v3819
        %v3833 = vpack.c.b16 %v3822, %v3821
        %v3834 = vpack.c.b16 %v3824, %v3823
        %v3835 = vpack.c.b16 %v3826, %v3825
        %v3836 = vpack.c.b16 %v3828, %v3827
        %3845 = vmatpush.bf16.msra.mxu0 %v3836
        %3846 = vmatpush.bf16.msra.mxu0 %v3835
        %3847 = vmatpush.bf16.msra.mxu0 %v3834
        %3848 = vmatpush.bf16.msra.mxu0 %v3833
        %3849 = vmatpush.bf16.msra.mxu0 %v3832
        %3850 = vmatpush.bf16.msra.mxu0 %v3831
        %3851 = vmatpush.bf16.msra.mxu0 %v3830
        %3852 = vmatpush.bf16.msra.mxu0 %v3829
        %3853 = vmatmul.bf16.gmra.mxu0 %v2945
        %v3854 = vpop.f32.mrf.mxu0
        %v3855 = vadd.f32 0.0, %v3854
        %v3856 = vpop.f32.mrf.mxu0
        %v3857 = vadd.f32 0.0, %v3856
        %3858 = vmatmul.bf16.gmra.mxu0 %v2948
        %v3859 = vpop.f32.mrf.mxu0
        %v3860 = vadd.f32 0.0, %v3859
        %v3861 = vpop.f32.mrf.mxu0
        %v3862 = vadd.f32 0.0, %v3861
        %3863 = vmatmul.bf16.gmra.mxu0 %v2951
        %v3864 = vpop.f32.mrf.mxu0
        %v3865 = vadd.f32 0.0, %v3864
        %v3866 = vpop.f32.mrf.mxu0
        %v3867 = vadd.f32 0.0, %v3866
        %3868 = vmatmul.bf16.gmra.mxu0 %v2954
        %v3869 = vpop.f32.mrf.mxu0
        %v3870 = vadd.f32 0.0, %v3869
        %v3871 = vpop.f32.mrf.mxu0
        %v3872 = vadd.f32 0.0, %v3871
        %3873 = vmatmul.bf16.gmra.mxu0 %v2957
        %v3874 = vpop.f32.mrf.mxu0
        %v3875 = vadd.f32 0.0, %v3874
        %v3876 = vpop.f32.mrf.mxu0
        %v3877 = vadd.f32 0.0, %v3876
        %3878 = vmatmul.bf16.gmra.mxu0 %v2960
        %v3879 = vpop.f32.mrf.mxu0
        %v3880 = vadd.f32 0.0, %v3879
        %v3881 = vpop.f32.mrf.mxu0
        %v3882 = vadd.f32 0.0, %v3881
        %3883 = vmatmul.bf16.gmra.mxu0 %v3373
        %v3884 = vpop.f32.mrf.mxu0
        %v3885 = vadd.f32 0.0, %v3884
        %v3886 = vpop.f32.mrf.mxu0
        %v3887 = vadd.f32 0.0, %v3886
        %3888 = vmatmul.bf16.gmra.mxu0 %v3779
        %v3889 = vpop.f32.mrf.mxu0
        %v3890 = vadd.f32 0.0, %v3889
        %v3891 = vpop.f32.mrf.mxu0
        %v3892 = vadd.f32 0.0, %v3891
        %3893 = vdwg.mxu0
        %v3894 = vadd.f32 %v3759, %v3855
        %v3895 = vadd.f32 %v3760, %v3857
        %v3896 = vadd.f32 %v3761, %v3860
        %v3897 = vadd.f32 %v3762, %v3862
        %v3898 = vadd.f32 %v3763, %v3865
        %v3899 = vadd.f32 %v3764, %v3867
        %v3900 = vadd.f32 %v3765, %v3870
        %v3901 = vadd.f32 %v3766, %v3872
        %v3902 = vadd.f32 %v3767, %v3875
        %v3903 = vadd.f32 %v3768, %v3877
        %v3904 = vadd.f32 %v3769, %v3880
        %v3905 = vadd.f32 %v3770, %v3882
        %v3906 = vadd.f32 %v3771, %v3885
        %v3907 = vadd.f32 %v3772, %v3887
        %v3908 = vadd.f32 %v3773, %v3890
        %v3909 = vadd.f32 %v3774, %v3892
        %v3910 = vld [vmem:[%s7] sm:$0x1]
        %v3912 = vperm.slane %v3910, 0
        %v3914 = vmul.f32 %v3894, %v3912
        %v3915 = vmul.f32 %v3895, %v3912
        %v3916 = vmul.f32 %v3896, %v3912
        %v3917 = vmul.f32 %v3897, %v3912
        %v3918 = vmul.f32 %v3898, %v3912
        %v3919 = vmul.f32 %v3899, %v3912
        %v3920 = vmul.f32 %v3900, %v3912
        %v3921 = vmul.f32 %v3901, %v3912
        %v3922 = vmul.f32 %v3902, %v3912
        %v3923 = vmul.f32 %v3903, %v3912
        %v3924 = vmul.f32 %v3904, %v3912
        %v3925 = vmul.f32 %v3905, %v3912
        %v3926 = vmul.f32 %v3906, %v3912
        %v3927 = vmul.f32 %v3907, %v3912
        %v3928 = vmul.f32 %v3908, %v3912
        %v3929 = vmul.f32 %v3909, %v3912
        %v3930 = vld [vmem:[%s8] sm:$0x1]
        %v3932 = vperm.slane %v3930, 0
        %v3934 = vadd.f32 %v3914, %v3932
        %v3935 = vadd.f32 %v3915, %v3932
        %v3936 = vadd.f32 %v3916, %v3932
        %v3937 = vadd.f32 %v3917, %v3932
        %v3938 = vadd.f32 %v3918, %v3932
        %v3939 = vadd.f32 %v3919, %v3932
        %v3940 = vadd.f32 %v3920, %v3932
        %v3941 = vadd.f32 %v3921, %v3932
        %v3942 = vadd.f32 %v3922, %v3932
        %v3943 = vadd.f32 %v3923, %v3932
        %v3944 = vadd.f32 %v3924, %v3932
        %v3945 = vadd.f32 %v3925, %v3932
        %v3946 = vadd.f32 %v3926, %v3932
        %v3947 = vadd.f32 %v3927, %v3932
        %v3948 = vadd.f32 %v3928, %v3932
        %v3949 = vadd.f32 %v3929, %v3932
        %v3950 = vld [vmem:[%s479] sm:$0xff]
        %v3951 = vld [vmem:[%s479 + $0x8] sm:$0xff]
        %v3952 = vld [vmem:[%s479 + $0x10] sm:$0xff]
        %v3953 = vld [vmem:[%s479 + $0x18] sm:$0xff]
        %v3954 = vld [vmem:[%s479 + $0x20] sm:$0xff]
        %v3955 = vld [vmem:[%s479 + $0x28] sm:$0xff]
        %v3956 = vld [vmem:[%s479 + $0x30] sm:$0xff]
        %v3957 = vld [vmem:[%s479 + $0x38] sm:$0xff]
        %v3958 = vld [vmem:[%s479 + $0x40] sm:$0xff]
        %v3959 = vld [vmem:[%s479 + $0x48] sm:$0xff]
        %v3960 = vld [vmem:[%s479 + $0x50] sm:$0xff]
        %v3961 = vld [vmem:[%s479 + $0x58] sm:$0xff]
        %v3962 = vld [vmem:[%s479 + $0x60] sm:$0xff]
        %v3963 = vld [vmem:[%s479 + $0x68] sm:$0xff]
        %v3964 = vld [vmem:[%s479 + $0x70] sm:$0xff]
        %v3965 = vld [vmem:[%s479 + $0x78] sm:$0xff]
        %v3966 = vadd.f32 %v3934, %v3950
        %v3967 = vadd.f32 %v3935, %v3951
        %v3968 = vadd.f32 %v3936, %v3952
        %v3969 = vadd.f32 %v3937, %v3953
        %v3970 = vadd.f32 %v3938, %v3954
        %v3971 = vadd.f32 %v3939, %v3955
        %v3972 = vadd.f32 %v3940, %v3956
        %v3973 = vadd.f32 %v3941, %v3957
        %v3974 = vadd.f32 %v3942, %v3958
        %v3975 = vadd.f32 %v3943, %v3959
        %v3976 = vadd.f32 %v3944, %v3960
        %v3977 = vadd.f32 %v3945, %v3961
        %v3978 = vadd.f32 %v3946, %v3962
        %v3979 = vadd.f32 %v3947, %v3963
        %v3980 = vadd.f32 %v3948, %v3964
        %v3981 = vadd.f32 %v3949, %v3965
        %v3982 = vmax.f32 %v3966, 0.0
        %v3983 = vmax.f32 %v3967, 0.0
        %v3984 = vmax.f32 %v3968, 0.0
        %v3985 = vmax.f32 %v3969, 0.0
        %v3986 = vmax.f32 %v3970, 0.0
        %v3987 = vmax.f32 %v3971, 0.0
        %v3988 = vmax.f32 %v3972, 0.0
        %v3989 = vmax.f32 %v3973, 0.0
        %v3990 = vmax.f32 %v3974, 0.0
        %v3991 = vmax.f32 %v3975, 0.0
        %v3992 = vmax.f32 %v3976, 0.0
        %v3993 = vmax.f32 %v3977, 0.0
        %v3994 = vmax.f32 %v3978, 0.0
        %v3995 = vmax.f32 %v3979, 0.0
        %v3996 = vmax.f32 %v3980, 0.0
        %v3997 = vmax.f32 %v3981, 0.0
        %3998 = vst [vmem:[%s433] sm:$0xff] %v3982
        %3999 = vst [vmem:[%s433 + $0x8] sm:$0xff] %v3983
        %4000 = vst [vmem:[%s433 + $0x10] sm:$0xff] %v3984
        %4001 = vst [vmem:[%s433 + $0x18] sm:$0xff] %v3985
        %4002 = vst [vmem:[%s433 + $0x20] sm:$0xff] %v3986
        %4003 = vst [vmem:[%s433 + $0x28] sm:$0xff] %v3987
        %4004 = vst [vmem:[%s433 + $0x30] sm:$0xff] %v3988
        %4005 = vst [vmem:[%s433 + $0x38] sm:$0xff] %v3989
        %4006 = vst [vmem:[%s433 + $0x40] sm:$0xff] %v3990
        %4007 = vst [vmem:[%s433 + $0x48] sm:$0xff] %v3991
        %4008 = vst [vmem:[%s433 + $0x50] sm:$0xff] %v3992
        %4009 = vst [vmem:[%s433 + $0x58] sm:$0xff] %v3993
        %4010 = vst [vmem:[%s433 + $0x60] sm:$0xff] %v3994
        %4011 = vst [vmem:[%s433 + $0x68] sm:$0xff] %v3995
        %4012 = vst [vmem:[%s433 + $0x70] sm:$0xff] %v3996
        %4013 = vst [vmem:[%s433 + $0x78] sm:$0xff] %v3997
        %s4014 = sand.u32 %s259, 1
        %s4015 = scalar_lea.sflag [#allocation3], %s4014
        %s4016 = sand.u32 %s259, 1
        %s4017 = smul.addr %s4016, 128
        %s4018 = scalar_lea.vmem [#allocation2], %s4017
        // Predicated region
        $region57: #{tpu_custom_call.1} parent=55 // pred_check
          %p4019 = pneg %p269
        $region58: #{tpu_custom_call.1} parent=55 // pred_check_branch
          %4021 = sbr.rel (%p4019) target = $region60
        $region59: #{tpu_custom_call.1} parent=55 // pred_region
          %s4022 = smul.u32 8, %s28
          %4024 = vsyncadd %s4015, 0
          %s4025 = smul.addr %s4022, 2
          %s4026 = smul.addr %s27, 32
          %s4027 = sadd.s32 %s4025, %s4026
          %s4028 = smul.addr %s4027, 8
          %s4029 = scalar_lea.hbm %s9, %s4028
          %s4030 = sshll.u32 %s4018, 4
          %s4031 = int_to_ptr.vmem [resolvable:$true] %s4030
          %s4032 = sshll.u32 %s4029, 4
          %s4033 = int_to_ptr.hbm [resolvable:$true] %s4032
          %4038 = dma.vmem_to_hbm [thread:$0]  %s4031, 2048, %s4033, %s4015, 128, 128, 8
        $region60: #{tpu_custom_call.1} parent=55 // pred_fallthru
          _
      $region56: #{tpu_custom_call.1} parent=5 // pred_fallthru
        _
      %p4039 = scmp.le.s32.totalorder 2, %s18
      // Predicated region
      $region61: #{tpu_custom_call.1} parent=5 // pred_check
        %p4040 = pneg %p4039
      $region62: #{tpu_custom_call.1} parent=5 // pred_check_branch
        %4042 = sbr.rel (%p4040) target = $region64
      $region63: #{tpu_custom_call.1} parent=5 // pred_region
        %s4043 = ssub.s32 %s18, 2
        // Predicated region
        $region65: #{tpu_custom_call.1} parent=63 // pred_check
          %p4044 = pneg %p275
        $region66: #{tpu_custom_call.1} parent=63 // pred_check_branch
          %4046 = sbr.rel (%p4044) target = $region68
        $region67: #{tpu_custom_call.1} parent=63 // pred_region
          %s4047 = sand.u32 %s260, 1
          %s4048 = scalar_lea.sflag [#allocation3], %s4047
          %s4049 = sand.u32 %s260, 1
          %s4050 = smul.addr %s4049, 128
          %s4051 = scalar_lea.vmem [#allocation2], %s4050
          %4053 = dma.done %s4048, 2048
        $region68: #{tpu_custom_call.1} parent=63 // pred_fallthru
          _
      $region64: #{tpu_custom_call.1} parent=5 // pred_fallthru
        _
    $region6: #{tpu_custom_call.1} parent=1 // loop_footer
      %s22 = sadd.s32 1, %s18
    $region7: #{tpu_custom_call.1} parent=1 // loop_footer_branch
      %17 = sbr.rel target = $region3
    $region8: #{tpu_custom_call.1} parent=1 // loop_exit
      _
    %4054 = vsyncpa [#allocation3], 1
    %s4055 = scalar_lea.sflag [#allocation3], 1
    %4056 = vsyncpa %s4055, 1

</llo_original>
